<compile_context>
chip_gen: v5e
topology: v5e:2x2
jax: 0.10.0
libtpu: 0.0.40
codegen_flags: <defaults>
</compile_context>

<pallas_src>
import jax
import jax.numpy as jnp
from jax.experimental import pallas as pl
from jax.experimental.pallas import tpu as pltpu

EPS = 1e-5  # PyTorch GroupNorm default eps


# ---------------------------------------------------------------------------
# In-kernel helpers
# ---------------------------------------------------------------------------
def _bf16_dot(a, w):
    """MXU matmul: bf16 operands, f32 accumulator."""
    return jnp.dot(a.astype(jnp.bfloat16), w.astype(jnp.bfloat16),
                   preferred_element_type=jnp.float32)


def _inorm_affine(y, gamma, beta, relu):
    """Per-channel instance norm over axis 0 (spatial), one-pass stats,
    folded affine:  out = y*a + b,  a = gamma*rsqrt(var+eps), b = beta - mean*a.
    y: (M, C) f32; gamma/beta: (1, C) f32."""
    inv_m = 1.0 / float(y.shape[0])
    mean = jnp.sum(y, axis=0, keepdims=True) * inv_m
    ex2 = jnp.sum(y * y, axis=0, keepdims=True) * inv_m
    var = jnp.maximum(ex2 - mean * mean, 0.0)
    a = gamma * jax.lax.rsqrt(var + EPS)
    b = beta - mean * a
    out = y * a + b
    if relu:
        out = jnp.maximum(out, 0.0)
    return out


# ---------------------------------------------------------------------------
# Fused bottleneck kernel (one grid step == one batch sample)
# ---------------------------------------------------------------------------
def _make_kernel(H, W, Cin, P, C4, stride, downsample):
    Ho = (H + 2 - 3) // stride + 1
    Wo = (W + 2 - 3) // stride + 1
    Hp, Wp = H + 2, W + 2

    def kernel(*refs):
        x_ref = refs[0]
        (w1_ref, g1_ref, b1_ref, w2_ref, g2_ref, b2_ref,
         w3_ref, g3_ref, b3_ref) = refs[1:10]
        pos = 10
        if downsample:
            ws_ref, gs_ref, bs_ref = refs[pos:pos + 3]
            pos += 3
        o_ref = refs[pos]; pos += 1
        pad_ref = refs[pos]; pos += 1
        if stride > 1:
            row_ref = refs[pos]; pos += 1
            if downsample:
                xrow_ref = refs[pos]; pos += 1

        f32 = jnp.float32
        x = x_ref[0].astype(f32)                                # (H, W, Cin)

        # ---- conv1 (1x1) + IN + ReLU ----------------------------------
        h1 = _bf16_dot(x.reshape(H * W, Cin), w1_ref[...])      # (H*W, P)
        h1 = _inorm_affine(h1, g1_ref[...], b1_ref[...], relu=True)

        # stage conv1 output into a zero-padded (pad=1) VMEM scratch
        pad_ref[...] = jnp.zeros((Hp, Wp, P), f32)
        pad_ref[1:H + 1, 1:W + 1, :] = h1.reshape(H, W, P)

        # ---- conv2 (3x3, stride, pad=1): 9 accumulated matmuls ----------
        w2 = w2_ref[...]                                        # (9P, P)
        acc = jnp.zeros((Ho * Wo, P), f32)
        for kh in range(3):
            if stride > 1:
                # Gather rows kh, kh+stride, ... so the column stride below is
                # a plain sublane-strided load.
                # TODO(synk): at production spatial sizes replace this unrolled
                # row gather with a single strided ref read / strided DMA.
                for i in range(Ho):
                    row_ref[i, :, :] = pad_ref[kh + stride * i, :, :]
            for kw in range(3):
                if stride == 1:
                    patch = pad_ref[kh:kh + Ho, kw:kw + Wo, :]
                else:
                    patch = row_ref[:, pl.ds(kw, Wo, stride), :]
                t = kh * 3 + kw
                acc = acc + _bf16_dot(patch.reshape(Ho * Wo, P),
                                      w2[t * P:(t + 1) * P, :])
        h2 = _inorm_affine(acc, g2_ref[...], b2_ref[...], relu=True)

        # ---- shortcut ----------------------------------------------------
        if downsample:
            if stride == 1:
                xs = x.reshape(H * W, Cin)
            else:
                for i in range(Ho):
                    xrow_ref[i, :, :] = x_ref[0, stride * i, :, :]
                xs = xrow_ref[:, pl.ds(0, Wo, stride), :].reshape(Ho * Wo, Cin)
            sc = _inorm_affine(_bf16_dot(xs, ws_ref[...]),
                               gs_ref[...], bs_ref[...], relu=False)
        else:
            sc = x.reshape(H * W, Cin)                          # identity

        # ---- conv3 (1x1) + IN + residual add + ReLU ----------------------
        h3 = _inorm_affine(_bf16_dot(h2, w3_ref[...]),
                           g3_ref[...], b3_ref[...], relu=False)
        out = jnp.maximum(h3 + sc, 0.0)
        o_ref[0] = out.reshape(Ho, Wo, C4).astype(o_ref.dtype)

    return kernel, Ho, Wo


# ---------------------------------------------------------------------------
# Wrapper
# ---------------------------------------------------------------------------
def bottleneck_forward(x_nchw, params, stride):
    """Bottleneck forward; input/output NCHW, internals NHWC, one fused kernel."""
    # TODO(synk): the NCHW<->NHWC transposes remain XLA ops (one HBM pass each);
    # absorbing them into the kernel DMA is possible but not done here.
    x = jnp.transpose(x_nchw, (0, 2, 3, 1))                     # (N, H, W, Cin)
    n, h, w, cin = x.shape
    p = params["w1"].shape[1]
    c4 = params["w3"].shape[1]
    downsample = "ws" in params
    if stride > 1:
        assert h % stride == 0 and w % stride == 0

    kernel, ho, wo = _make_kernel(h, w, cin, p, c4, stride, downsample)

    def full_spec(arr):
        nd = arr.ndim
        return pl.BlockSpec(arr.shape, lambda i: (0,) * nd)

    args = [x]
    in_specs = [pl.BlockSpec((1, h, w, cin), lambda i: (i, 0, 0, 0))]
    names = ["w1", "g1", "b1", "w2", "g2", "b2", "w3", "g3", "b3"]
    if downsample:
        names += ["ws", "gs", "bs"]
    for nm in names:
        args.append(params[nm])
        in_specs.append(full_spec(params[nm]))

    # TODO(synk): for production spatial sizes on v7x (64 MiB VMEM), tile HW and
    # stream the instance-norm stats (two-pass) instead of full-spatial blocks.
    scratch = [pltpu.VMEM((h + 2, w + 2, p), jnp.float32)]
    if stride > 1:
        scratch.append(pltpu.VMEM((ho, w + 2, p), jnp.float32))
        if downsample:
            scratch.append(pltpu.VMEM((ho, w, cin), jnp.float32))

    out = pl.pallas_call(
        kernel,
        out_shape=jax.ShapeDtypeStruct((n, ho, wo, c4), x.dtype),
        grid=(n,),
        in_specs=in_specs,
        out_specs=pl.BlockSpec((1, ho, wo, c4), lambda i: (i, 0, 0, 0)),
        scratch_shapes=scratch,
        compiler_params=pltpu.CompilerParams(
            dimension_semantics=("parallel",),
            vmem_limit_bytes=48 * 1024 * 1024),
    )(*args)                                                    # (N, Ho, Wo, 4P)
    return jnp.transpose(out, (0, 3, 1, 2))                     # NCHW


# ---------------------------------------------------------------------------
# Parameters (deterministic, shapes match nn.Module.__init__) and reference
# ---------------------------------------------------------------------------
def init_params(key, in_planes, planes, stride):
    exp = 4
    ks = jax.random.split(key, 10)
    f32 = jnp.float32

    def gn(i, shape, scale):
        return scale * jax.random.normal(ks[i], shape, f32)

    params = {
        "w1": gn(0, (in_planes, planes), 0.3),          # conv1 1x1  (Cin, P)
        "g1": 1.0 + gn(1, (1, planes), 0.1),
        "b1": gn(2, (1, planes), 0.1),
        "w2": gn(3, (9 * planes, planes), 0.1),         # conv2 3x3  (9*P, P), (kh,kw,c)
        "g2": 1.0 + gn(4, (1, planes), 0.1),
        "b2": gn(5, (1, planes), 0.1),
        "w3": gn(6, (planes, exp * planes), 0.3),       # conv3 1x1  (P, 4P)
        "g3": 1.0 + gn(7, (1, exp * planes), 0.1),
        "b3": gn(8, (1, exp * planes), 0.1),
    }
    if stride != 1 or in_planes != exp * planes:
        ks2 = jax.random.split(ks[9], 3)
        params["ws"] = 0.3 * jax.random.normal(ks2[0], (in_planes, exp * planes), f32)
        params["gs"] = 1.0 + 0.1 * jax.random.normal(ks2[1], (1, exp * planes), f32)
        params["bs"] = 0.1 * jax.random.normal(ks2[2], (1, exp * planes), f32)
    return params


def reference_forward(x_nchw, params, stride):
    """Pure-JAX reference using the same bf16-operand / f32-accumulate arithmetic."""
    bf16, f32 = jnp.bfloat16, jnp.float32
    x = jnp.transpose(x_nchw, (0, 2, 3, 1)).astype(f32)

    def mm(a, w):
        return jnp.einsum("nhwc,cd->nhwd", a.astype(bf16), w.astype(bf16),
                          preferred_element_type=f32)

    def inorm(y, g, b):
        mean = jnp.mean(y, axis=(1, 2), keepdims=True)
        var = jnp.mean(jnp.square(y - mean), axis=(1, 2), keepdims=True)
        return ((y - mean) * jax.lax.rsqrt(var + EPS)
                * g.reshape(1, 1, 1, -1) + b.reshape(1, 1, 1, -1))

    o = jax.nn.relu(inorm(mm(x, params["w1"]), params["g1"], params["b1"]))
    w2 = params["w2"].reshape(3, 3, -1, params["w2"].shape[1])          # HWIO
    o = jax.lax.conv_general_dilated(
        o.astype(bf16), w2.astype(bf16), (stride, stride), ((1, 1), (1, 1)),
        dimension_numbers=("NHWC", "HWIO", "NHWC"), preferred_element_type=f32)
    o = jax.nn.relu(inorm(o, params["g2"], params["b2"]))
    o = inorm(mm(o, params["w3"]), params["g3"], params["b3"])

    cin, c4 = x.shape[-1], params["w3"].shape[1]
    if stride != 1 or cin != c4:
        xs = x[:, ::stride, ::stride, :]
        sc = inorm(mm(xs, params["ws"]), params["gs"], params["bs"])
    else:
        sc = x
    return jnp.transpose(jax.nn.relu(o + sc), (0, 3, 1, 2))


# ---------------------------------------------------------------------------
if __name__ == "__main__":
    key = jax.random.PRNGKey(0)
    kx1, kp1, kx2, kp2 = jax.random.split(key, 4)
    fwd = jax.jit(bottleneck_forward, static_argnums=(2,))

    # Case 1: downsampling block (stride=2, projection shortcut).
    in_planes, planes, stride = 4, 8, 2
    N, H, W = 2, 16, 16
    x = jax.random.normal(kx1, (N, in_planes, H, W), jnp.float32)       # NCHW
    params = init_params(kp1, in_planes, planes, stride)
    out = jax.block_until_ready(fwd(x, params, stride))
    assert out.shape == (N, 4 * planes, H // stride, W // stride), out.shape
    assert out.dtype == jnp.float32
    ref = jax.block_until_ready(reference_forward(x, params, stride))
    if not bool(jnp.allclose(out, ref, atol=2e-2, rtol=2e-2)):
        err = float(jnp.max(jnp.abs(out - ref)))
        raise AssertionError(f"stride-2 Bottleneck mismatch vs reference (max err {err})")

    # Case 2: identity-shortcut block (stride=1, in_planes == expansion*planes).
    in_planes2, planes2, stride2 = 32, 8, 1
    N2, H2, W2 = 2, 8, 8
    x2 = jax.random.normal(kx2, (N2, in_planes2, H2, W2), jnp.float32)
    params2 = init_params(kp2, in_planes2, planes2, stride2)
    out2 = jax.block_until_ready(fwd(x2, params2, stride2))
    assert out2.shape == (N2, 4 * planes2, H2, W2), out2.shape
    ref2 = jax.block_until_ready(reference_forward(x2, params2, stride2))
    if not bool(jnp.allclose(out2, ref2, atol=2e-2, rtol=2e-2)):
        err = float(jnp.max(jnp.abs(out2 - ref2)))
        raise AssertionError(f"stride-1 Bottleneck mismatch vs reference (max err {err})")

    print("KERNEL_OK")
</pallas_src>

<mosaic_0001>
module attributes {stable_mosaic.version = 11 : i64} {
  func.func @kernel(%arg0: i32, %arg1: memref<1x16x16x4xf32, #tpu.memory_space<vmem>>, %arg2: memref<4x8xf32, #tpu.memory_space<vmem>>, %arg3: memref<1x8xf32, #tpu.memory_space<vmem>>, %arg4: memref<1x8xf32, #tpu.memory_space<vmem>>, %arg5: memref<72x8xf32, #tpu.memory_space<vmem>>, %arg6: memref<1x8xf32, #tpu.memory_space<vmem>>, %arg7: memref<1x8xf32, #tpu.memory_space<vmem>>, %arg8: memref<8x32xf32, #tpu.memory_space<vmem>>, %arg9: memref<1x32xf32, #tpu.memory_space<vmem>>, %arg10: memref<1x32xf32, #tpu.memory_space<vmem>>, %arg11: memref<4x32xf32, #tpu.memory_space<vmem>>, %arg12: memref<1x32xf32, #tpu.memory_space<vmem>>, %arg13: memref<1x32xf32, #tpu.memory_space<vmem>>, %arg14: memref<1x8x8x32xf32, #tpu.memory_space<vmem>>, %arg15: memref<18x18x8xf32, #tpu.memory_space<vmem>>, %arg16: memref<8x18x8xf32, #tpu.memory_space<vmem>>, %arg17: memref<8x16x4xf32, #tpu.memory_space<vmem>>) attributes {dimension_semantics = [#tpu.dimension_semantics<parallel>], iteration_bounds = array<i64: 2>, scalar_prefetch = 0 : i64, scratch_operands = 3 : i64, tpu.core_type = #tpu.core_type<tc>, window_params = [{transform_indices = @transform_0, window_bounds = array<i64: 1, 16, 16, 4>}, {pipeline_mode = #tpu.pipeline_mode<synchronous>, transform_indices = @transform_1, window_bounds = array<i64: 4, 8>}, {pipeline_mode = #tpu.pipeline_mode<synchronous>, transform_indices = @transform_2, window_bounds = array<i64: 1, 8>}, {pipeline_mode = #tpu.pipeline_mode<synchronous>, transform_indices = @transform_3, window_bounds = array<i64: 1, 8>}, {pipeline_mode = #tpu.pipeline_mode<synchronous>, transform_indices = @transform_4, window_bounds = array<i64: 72, 8>}, {pipeline_mode = #tpu.pipeline_mode<synchronous>, transform_indices = @transform_5, window_bounds = array<i64: 1, 8>}, {pipeline_mode = #tpu.pipeline_mode<synchronous>, transform_indices = @transform_6, window_bounds = array<i64: 1, 8>}, {pipeline_mode = #tpu.pipeline_mode<synchronous>, transform_indices = @transform_7, window_bounds = array<i64: 8, 32>}, {pipeline_mode = #tpu.pipeline_mode<synchronous>, transform_indices = @transform_8, window_bounds = array<i64: 1, 32>}, {pipeline_mode = #tpu.pipeline_mode<synchronous>, transform_indices = @transform_9, window_bounds = array<i64: 1, 32>}, {pipeline_mode = #tpu.pipeline_mode<synchronous>, transform_indices = @transform_10, window_bounds = array<i64: 4, 32>}, {pipeline_mode = #tpu.pipeline_mode<synchronous>, transform_indices = @transform_11, window_bounds = array<i64: 1, 32>}, {pipeline_mode = #tpu.pipeline_mode<synchronous>, transform_indices = @transform_12, window_bounds = array<i64: 1, 32>}, {transform_indices = @transform_13, window_bounds = array<i64: 1, 8, 8, 32>}]} {
    %c0 = arith.constant 0 : index
    %c0_0 = arith.constant 0 : index
    %c0_1 = arith.constant 0 : index
    %c0_2 = arith.constant 0 : index
    %0 = vector.load %arg1[%c0, %c0_0, %c0_1, %c0_2] : memref<1x16x16x4xf32, #tpu.memory_space<vmem>>, vector<1x16x16x4xf32>
    %1 = vector.shape_cast %0 : vector<1x16x16x4xf32> to vector<16x16x4xf32>
    %2 = vector.shape_cast %1 : vector<16x16x4xf32> to vector<256x4xf32>
    %c0_3 = arith.constant 0 : index
    %c0_4 = arith.constant 0 : index
    %3 = vector.load %arg2[%c0_3, %c0_4] : memref<4x8xf32, #tpu.memory_space<vmem>>, vector<4x8xf32>
    %4 = arith.truncf %2 : vector<256x4xf32> to vector<256x4xbf16>
    %5 = arith.truncf %3 : vector<4x8xf32> to vector<4x8xbf16>
    %cst = arith.constant dense<0.000000e+00> : vector<256x8xf32>
    %6 = tpu.matmul %4, %5, %cst {dimension_numbers = #tpu.dot_dimension_numbers<[1], [0], [0], [1], [0, 0, 1, 1], [], []>} : vector<256x4xbf16>, vector<4x8xbf16>, vector<256x8xf32> -> vector<256x8xf32>
    %c0_5 = arith.constant 0 : index
    %c0_6 = arith.constant 0 : index
    %7 = vector.load %arg3[%c0_5, %c0_6] : memref<1x8xf32, #tpu.memory_space<vmem>>, vector<1x8xf32>
    %c0_7 = arith.constant 0 : index
    %c0_8 = arith.constant 0 : index
    %8 = vector.load %arg4[%c0_7, %c0_8] : memref<1x8xf32, #tpu.memory_space<vmem>>, vector<1x8xf32>
    %cst_9 = arith.constant dense<0.000000e+00> : vector<8xf32>
    %9 = vector.multi_reduction <add>, %6, %cst_9 [0] : vector<256x8xf32> to vector<8xf32>
    %10 = vector.shape_cast %9 : vector<8xf32> to vector<1x8xf32>
    %cst_10 = arith.constant 3.906250e-03 : f32
    %11 = vector.broadcast %cst_10 : f32 to vector<1x8xf32>
    %12 = arith.mulf %10, %11 : vector<1x8xf32>
    %13 = arith.mulf %6, %6 : vector<256x8xf32>
    %cst_11 = arith.constant dense<0.000000e+00> : vector<8xf32>
    %14 = vector.multi_reduction <add>, %13, %cst_11 [0] : vector<256x8xf32> to vector<8xf32>
    %15 = vector.shape_cast %14 : vector<8xf32> to vector<1x8xf32>
    %cst_12 = arith.constant 3.906250e-03 : f32
    %16 = vector.broadcast %cst_12 : f32 to vector<1x8xf32>
    %17 = arith.mulf %15, %16 : vector<1x8xf32>
    %18 = arith.mulf %12, %12 : vector<1x8xf32>
    %19 = arith.subf %17, %18 : vector<1x8xf32>
    %cst_13 = arith.constant 0.000000e+00 : f32
    %20 = vector.broadcast %cst_13 : f32 to vector<1x8xf32>
    %21 = arith.maximumf %19, %20 : vector<1x8xf32>
    %cst_14 = arith.constant 9.99999974E-6 : f32
    %22 = vector.broadcast %cst_14 : f32 to vector<1x8xf32>
    %23 = arith.addf %21, %22 : vector<1x8xf32>
    %24 = math.rsqrt %23 : vector<1x8xf32>
    %25 = arith.mulf %7, %24 : vector<1x8xf32>
    %26 = arith.mulf %12, %25 : vector<1x8xf32>
    %27 = arith.subf %8, %26 : vector<1x8xf32>
    %28 = vector.broadcast %25 : vector<1x8xf32> to vector<256x8xf32>
    %29 = arith.mulf %6, %28 : vector<256x8xf32>
    %30 = vector.broadcast %27 : vector<1x8xf32> to vector<256x8xf32>
    %31 = arith.addf %29, %30 : vector<256x8xf32>
    %cst_15 = arith.constant 0.000000e+00 : f32
    %32 = vector.broadcast %cst_15 : f32 to vector<256x8xf32>
    %33 = arith.maximumf %31, %32 : vector<256x8xf32>
    %cst_16 = arith.constant 0.000000e+00 : f32
    %34 = vector.broadcast %cst_16 : f32 to vector<18x18x8xf32>
    %c0_17 = arith.constant 0 : index
    %c0_18 = arith.constant 0 : index
    %c0_19 = arith.constant 0 : index
    %35 = vector.load %arg15[%c0_17, %c0_18, %c0_19] : memref<18x18x8xf32, #tpu.memory_space<vmem>>, vector<18x18x8xf32>
    tpu.vector_store %arg15[%c0_17, %c0_18, %c0_19], %34 {strides = array<i32>} : memref<18x18x8xf32, #tpu.memory_space<vmem>>, vector<18x18x8xf32>,
    %36 = vector.shape_cast %33 : vector<256x8xf32> to vector<16x16x8xf32>
    %c1 = arith.constant 1 : index
    %c1_20 = arith.constant 1 : index
    %c0_21 = arith.constant 0 : index
    %37 = vector.load %arg15[%c1, %c1_20, %c0_21] : memref<18x18x8xf32, #tpu.memory_space<vmem>>, vector<16x16x8xf32>
    tpu.vector_store %arg15[%c1, %c1_20, %c0_21], %36 {strides = array<i32>} : memref<18x18x8xf32, #tpu.memory_space<vmem>>, vector<16x16x8xf32>,
    %c0_22 = arith.constant 0 : index
    %c0_23 = arith.constant 0 : index
    %38 = vector.load %arg5[%c0_22, %c0_23] : memref<72x8xf32, #tpu.memory_space<vmem>>, vector<72x8xf32>
    %cst_24 = arith.constant 0.000000e+00 : f32
    %39 = vector.broadcast %cst_24 : f32 to vector<64x8xf32>
    %c0_25 = arith.constant 0 : index
    %c0_26 = arith.constant 0 : index
    %c0_27 = arith.constant 0 : index
    %40 = vector.load %arg15[%c0_25, %c0_26, %c0_27] : memref<18x18x8xf32, #tpu.memory_space<vmem>>, vector<1x18x8xf32>
    %41 = vector.shape_cast %40 : vector<1x18x8xf32> to vector<18x8xf32>
    %c0_28 = arith.constant 0 : index
    %c0_29 = arith.constant 0 : index
    %c0_30 = arith.constant 0 : index
    %42 = vector.load %arg16[%c0_28, %c0_29, %c0_30] : memref<8x18x8xf32, #tpu.memory_space<vmem>>, vector<1x18x8xf32>
    %43 = vector.shape_cast %42 : vector<1x18x8xf32> to vector<18x8xf32>
    %44 = vector.shape_cast %41 : vector<18x8xf32> to vector<1x18x8xf32>
    tpu.vector_store %arg16[%c0_28, %c0_29, %c0_30], %44 {strides = array<i32>} : memref<8x18x8xf32, #tpu.memory_space<vmem>>, vector<1x18x8xf32>,
    %c2 = arith.constant 2 : index
    %c0_31 = arith.constant 0 : index
    %c0_32 = arith.constant 0 : index
    %45 = vector.load %arg15[%c2, %c0_31, %c0_32] : memref<18x18x8xf32, #tpu.memory_space<vmem>>, vector<1x18x8xf32>
    %46 = vector.shape_cast %45 : vector<1x18x8xf32> to vector<18x8xf32>
    %c1_33 = arith.constant 1 : index
    %c0_34 = arith.constant 0 : index
    %c0_35 = arith.constant 0 : index
    %47 = vector.load %arg16[%c1_33, %c0_34, %c0_35] : memref<8x18x8xf32, #tpu.memory_space<vmem>>, vector<1x18x8xf32>
    %48 = vector.shape_cast %47 : vector<1x18x8xf32> to vector<18x8xf32>
    %49 = vector.shape_cast %46 : vector<18x8xf32> to vector<1x18x8xf32>
    tpu.vector_store %arg16[%c1_33, %c0_34, %c0_35], %49 {strides = array<i32>} : memref<8x18x8xf32, #tpu.memory_space<vmem>>, vector<1x18x8xf32>,
    %c4 = arith.constant 4 : index
    %c0_36 = arith.constant 0 : index
    %c0_37 = arith.constant 0 : index
    %50 = vector.load %arg15[%c4, %c0_36, %c0_37] : memref<18x18x8xf32, #tpu.memory_space<vmem>>, vector<1x18x8xf32>
    %51 = vector.shape_cast %50 : vector<1x18x8xf32> to vector<18x8xf32>
    %c2_38 = arith.constant 2 : index
    %c0_39 = arith.constant 0 : index
    %c0_40 = arith.constant 0 : index
    %52 = vector.load %arg16[%c2_38, %c0_39, %c0_40] : memref<8x18x8xf32, #tpu.memory_space<vmem>>, vector<1x18x8xf32>
    %53 = vector.shape_cast %52 : vector<1x18x8xf32> to vector<18x8xf32>
    %54 = vector.shape_cast %51 : vector<18x8xf32> to vector<1x18x8xf32>
    tpu.vector_store %arg16[%c2_38, %c0_39, %c0_40], %54 {strides = array<i32>} : memref<8x18x8xf32, #tpu.memory_space<vmem>>, vector<1x18x8xf32>,
    %c6 = arith.constant 6 : index
    %c0_41 = arith.constant 0 : index
    %c0_42 = arith.constant 0 : index
    %55 = vector.load %arg15[%c6, %c0_41, %c0_42] : memref<18x18x8xf32, #tpu.memory_space<vmem>>, vector<1x18x8xf32>
    %56 = vector.shape_cast %55 : vector<1x18x8xf32> to vector<18x8xf32>
    %c3 = arith.constant 3 : index
    %c0_43 = arith.constant 0 : index
    %c0_44 = arith.constant 0 : index
    %57 = vector.load %arg16[%c3, %c0_43, %c0_44] : memref<8x18x8xf32, #tpu.memory_space<vmem>>, vector<1x18x8xf32>
    %58 = vector.shape_cast %57 : vector<1x18x8xf32> to vector<18x8xf32>
    %59 = vector.shape_cast %56 : vector<18x8xf32> to vector<1x18x8xf32>
    tpu.vector_store %arg16[%c3, %c0_43, %c0_44], %59 {strides = array<i32>} : memref<8x18x8xf32, #tpu.memory_space<vmem>>, vector<1x18x8xf32>,
    %c8 = arith.constant 8 : index
    %c0_45 = arith.constant 0 : index
    %c0_46 = arith.constant 0 : index
    %60 = vector.load %arg15[%c8, %c0_45, %c0_46] : memref<18x18x8xf32, #tpu.memory_space<vmem>>, vector<1x18x8xf32>
    %61 = vector.shape_cast %60 : vector<1x18x8xf32> to vector<18x8xf32>
    %c4_47 = arith.constant 4 : index
    %c0_48 = arith.constant 0 : index
    %c0_49 = arith.constant 0 : index
    %62 = vector.load %arg16[%c4_47, %c0_48, %c0_49] : memref<8x18x8xf32, #tpu.memory_space<vmem>>, vector<1x18x8xf32>
    %63 = vector.shape_cast %62 : vector<1x18x8xf32> to vector<18x8xf32>
    %64 = vector.shape_cast %61 : vector<18x8xf32> to vector<1x18x8xf32>
    tpu.vector_store %arg16[%c4_47, %c0_48, %c0_49], %64 {strides = array<i32>} : memref<8x18x8xf32, #tpu.memory_space<vmem>>, vector<1x18x8xf32>,
    %c10 = arith.constant 10 : index
    %c0_50 = arith.constant 0 : index
    %c0_51 = arith.constant 0 : index
    %65 = vector.load %arg15[%c10, %c0_50, %c0_51] : memref<18x18x8xf32, #tpu.memory_space<vmem>>, vector<1x18x8xf32>
    %66 = vector.shape_cast %65 : vector<1x18x8xf32> to vector<18x8xf32>
    %c5 = arith.constant 5 : index
    %c0_52 = arith.constant 0 : index
    %c0_53 = arith.constant 0 : index
    %67 = vector.load %arg16[%c5, %c0_52, %c0_53] : memref<8x18x8xf32, #tpu.memory_space<vmem>>, vector<1x18x8xf32>
    %68 = vector.shape_cast %67 : vector<1x18x8xf32> to vector<18x8xf32>
    %69 = vector.shape_cast %66 : vector<18x8xf32> to vector<1x18x8xf32>
    tpu.vector_store %arg16[%c5, %c0_52, %c0_53], %69 {strides = array<i32>} : memref<8x18x8xf32, #tpu.memory_space<vmem>>, vector<1x18x8xf32>,
    %c12 = arith.constant 12 : index
    %c0_54 = arith.constant 0 : index
    %c0_55 = arith.constant 0 : index
    %70 = vector.load %arg15[%c12, %c0_54, %c0_55] : memref<18x18x8xf32, #tpu.memory_space<vmem>>, vector<1x18x8xf32>
    %71 = vector.shape_cast %70 : vector<1x18x8xf32> to vector<18x8xf32>
    %c6_56 = arith.constant 6 : index
    %c0_57 = arith.constant 0 : index
    %c0_58 = arith.constant 0 : index
    %72 = vector.load %arg16[%c6_56, %c0_57, %c0_58] : memref<8x18x8xf32, #tpu.memory_space<vmem>>, vector<1x18x8xf32>
    %73 = vector.shape_cast %72 : vector<1x18x8xf32> to vector<18x8xf32>
    %74 = vector.shape_cast %71 : vector<18x8xf32> to vector<1x18x8xf32>
    tpu.vector_store %arg16[%c6_56, %c0_57, %c0_58], %74 {strides = array<i32>} : memref<8x18x8xf32, #tpu.memory_space<vmem>>, vector<1x18x8xf32>,
    %c14 = arith.constant 14 : index
    %c0_59 = arith.constant 0 : index
    %c0_60 = arith.constant 0 : index
    %75 = vector.load %arg15[%c14, %c0_59, %c0_60] : memref<18x18x8xf32, #tpu.memory_space<vmem>>, vector<1x18x8xf32>
    %76 = vector.shape_cast %75 : vector<1x18x8xf32> to vector<18x8xf32>
    %c7 = arith.constant 7 : index
    %c0_61 = arith.constant 0 : index
    %c0_62 = arith.constant 0 : index
    %77 = vector.load %arg16[%c7, %c0_61, %c0_62] : memref<8x18x8xf32, #tpu.memory_space<vmem>>, vector<1x18x8xf32>
    %78 = vector.shape_cast %77 : vector<1x18x8xf32> to vector<18x8xf32>
    %79 = vector.shape_cast %76 : vector<18x8xf32> to vector<1x18x8xf32>
    tpu.vector_store %arg16[%c7, %c0_61, %c0_62], %79 {strides = array<i32>} : memref<8x18x8xf32, #tpu.memory_space<vmem>>, vector<1x18x8xf32>,
    %c0_63 = arith.constant 0 : index
    %c0_64 = arith.constant 0 : index
    %c0_65 = arith.constant 0 : index
    %80 = tpu.strided_load %arg16[%c0_63, %c0_64, %c0_65] {strides = array<i32: 1, 2, 1>} : memref<8x18x8xf32, #tpu.memory_space<vmem>>, vector<8x8x8xf32>
    %81 = vector.shape_cast %80 : vector<8x8x8xf32> to vector<64x8xf32>
    %82 = vector.extract_strided_slice %38 {offsets = [0, 0], sizes = [8, 8], strides = [1, 1]} : vector<72x8xf32> to vector<8x8xf32>
    %83 = arith.truncf %81 : vector<64x8xf32> to vector<64x8xbf16>
    %84 = arith.truncf %82 : vector<8x8xf32> to vector<8x8xbf16>
    %cst_66 = arith.constant dense<0.000000e+00> : vector<64x8xf32>
    %85 = tpu.matmul %83, %84, %cst_66 {dimension_numbers = #tpu.dot_dimension_numbers<[1], [0], [0], [1], [0, 0, 1, 1], [], []>} : vector<64x8xbf16>, vector<8x8xbf16>, vector<64x8xf32> -> vector<64x8xf32>
    %86 = arith.addf %39, %85 : vector<64x8xf32>
    %c0_67 = arith.constant 0 : index
    %c1_68 = arith.constant 1 : index
    %c0_69 = arith.constant 0 : index
    %87 = tpu.strided_load %arg16[%c0_67, %c1_68, %c0_69] {strides = array<i32: 1, 2, 1>} : memref<8x18x8xf32, #tpu.memory_space<vmem>>, vector<8x8x8xf32>
    %88 = vector.shape_cast %87 : vector<8x8x8xf32> to vector<64x8xf32>
    %89 = vector.extract_strided_slice %38 {offsets = [8, 0], sizes = [8, 8], strides = [1, 1]} : vector<72x8xf32> to vector<8x8xf32>
    %90 = arith.truncf %88 : vector<64x8xf32> to vector<64x8xbf16>
    %91 = arith.truncf %89 : vector<8x8xf32> to vector<8x8xbf16>
    %cst_70 = arith.constant dense<0.000000e+00> : vector<64x8xf32>
    %92 = tpu.matmul %90, %91, %cst_70 {dimension_numbers = #tpu.dot_dimension_numbers<[1], [0], [0], [1], [0, 0, 1, 1], [], []>} : vector<64x8xbf16>, vector<8x8xbf16>, vector<64x8xf32> -> vector<64x8xf32>
    %93 = arith.addf %86, %92 : vector<64x8xf32>
    %c0_71 = arith.constant 0 : index
    %c2_72 = arith.constant 2 : index
    %c0_73 = arith.constant 0 : index
    %94 = tpu.strided_load %arg16[%c0_71, %c2_72, %c0_73] {strides = array<i32: 1, 2, 1>} : memref<8x18x8xf32, #tpu.memory_space<vmem>>, vector<8x8x8xf32>
    %95 = vector.shape_cast %94 : vector<8x8x8xf32> to vector<64x8xf32>
    %96 = vector.extract_strided_slice %38 {offsets = [16, 0], sizes = [8, 8], strides = [1, 1]} : vector<72x8xf32> to vector<8x8xf32>
    %97 = arith.truncf %95 : vector<64x8xf32> to vector<64x8xbf16>
    %98 = arith.truncf %96 : vector<8x8xf32> to vector<8x8xbf16>
    %cst_74 = arith.constant dense<0.000000e+00> : vector<64x8xf32>
    %99 = tpu.matmul %97, %98, %cst_74 {dimension_numbers = #tpu.dot_dimension_numbers<[1], [0], [0], [1], [0, 0, 1, 1], [], []>} : vector<64x8xbf16>, vector<8x8xbf16>, vector<64x8xf32> -> vector<64x8xf32>
    %100 = arith.addf %93, %99 : vector<64x8xf32>
    %c1_75 = arith.constant 1 : index
    %c0_76 = arith.constant 0 : index
    %c0_77 = arith.constant 0 : index
    %101 = vector.load %arg15[%c1_75, %c0_76, %c0_77] : memref<18x18x8xf32, #tpu.memory_space<vmem>>, vector<1x18x8xf32>
    %102 = vector.shape_cast %101 : vector<1x18x8xf32> to vector<18x8xf32>
    %c0_78 = arith.constant 0 : index
    %c0_79 = arith.constant 0 : index
    %c0_80 = arith.constant 0 : index
    %103 = vector.load %arg16[%c0_78, %c0_79, %c0_80] : memref<8x18x8xf32, #tpu.memory_space<vmem>>, vector<1x18x8xf32>
    %104 = vector.shape_cast %103 : vector<1x18x8xf32> to vector<18x8xf32>
    %105 = vector.shape_cast %102 : vector<18x8xf32> to vector<1x18x8xf32>
    tpu.vector_store %arg16[%c0_78, %c0_79, %c0_80], %105 {strides = array<i32>} : memref<8x18x8xf32, #tpu.memory_space<vmem>>, vector<1x18x8xf32>,
    %c3_81 = arith.constant 3 : index
    %c0_82 = arith.constant 0 : index
    %c0_83 = arith.constant 0 : index
    %106 = vector.load %arg15[%c3_81, %c0_82, %c0_83] : memref<18x18x8xf32, #tpu.memory_space<vmem>>, vector<1x18x8xf32>
    %107 = vector.shape_cast %106 : vector<1x18x8xf32> to vector<18x8xf32>
    %c1_84 = arith.constant 1 : index
    %c0_85 = arith.constant 0 : index
    %c0_86 = arith.constant 0 : index
    %108 = vector.load %arg16[%c1_84, %c0_85, %c0_86] : memref<8x18x8xf32, #tpu.memory_space<vmem>>, vector<1x18x8xf32>
    %109 = vector.shape_cast %108 : vector<1x18x8xf32> to vector<18x8xf32>
    %110 = vector.shape_cast %107 : vector<18x8xf32> to vector<1x18x8xf32>
    tpu.vector_store %arg16[%c1_84, %c0_85, %c0_86], %110 {strides = array<i32>} : memref<8x18x8xf32, #tpu.memory_space<vmem>>, vector<1x18x8xf32>,
    %c5_87 = arith.constant 5 : index
    %c0_88 = arith.constant 0 : index
    %c0_89 = arith.constant 0 : index
    %111 = vector.load %arg15[%c5_87, %c0_88, %c0_89] : memref<18x18x8xf32, #tpu.memory_space<vmem>>, vector<1x18x8xf32>
    %112 = vector.shape_cast %111 : vector<1x18x8xf32> to vector<18x8xf32>
    %c2_90 = arith.constant 2 : index
    %c0_91 = arith.constant 0 : index
    %c0_92 = arith.constant 0 : index
    %113 = vector.load %arg16[%c2_90, %c0_91, %c0_92] : memref<8x18x8xf32, #tpu.memory_space<vmem>>, vector<1x18x8xf32>
    %114 = vector.shape_cast %113 : vector<1x18x8xf32> to vector<18x8xf32>
    %115 = vector.shape_cast %112 : vector<18x8xf32> to vector<1x18x8xf32>
    tpu.vector_store %arg16[%c2_90, %c0_91, %c0_92], %115 {strides = array<i32>} : memref<8x18x8xf32, #tpu.memory_space<vmem>>, vector<1x18x8xf32>,
    %c7_93 = arith.constant 7 : index
    %c0_94 = arith.constant 0 : index
    %c0_95 = arith.constant 0 : index
    %116 = vector.load %arg15[%c7_93, %c0_94, %c0_95] : memref<18x18x8xf32, #tpu.memory_space<vmem>>, vector<1x18x8xf32>
    %117 = vector.shape_cast %116 : vector<1x18x8xf32> to vector<18x8xf32>
    %c3_96 = arith.constant 3 : index
    %c0_97 = arith.constant 0 : index
    %c0_98 = arith.constant 0 : index
    %118 = vector.load %arg16[%c3_96, %c0_97, %c0_98] : memref<8x18x8xf32, #tpu.memory_space<vmem>>, vector<1x18x8xf32>
    %119 = vector.shape_cast %118 : vector<1x18x8xf32> to vector<18x8xf32>
    %120 = vector.shape_cast %117 : vector<18x8xf32> to vector<1x18x8xf32>
    tpu.vector_store %arg16[%c3_96, %c0_97, %c0_98], %120 {strides = array<i32>} : memref<8x18x8xf32, #tpu.memory_space<vmem>>, vector<1x18x8xf32>,
    %c9 = arith.constant 9 : index
    %c0_99 = arith.constant 0 : index
    %c0_100 = arith.constant 0 : index
    %121 = vector.load %arg15[%c9, %c0_99, %c0_100] : memref<18x18x8xf32, #tpu.memory_space<vmem>>, vector<1x18x8xf32>
    %122 = vector.shape_cast %121 : vector<1x18x8xf32> to vector<18x8xf32>
    %c4_101 = arith.constant 4 : index
    %c0_102 = arith.constant 0 : index
    %c0_103 = arith.constant 0 : index
    %123 = vector.load %arg16[%c4_101, %c0_102, %c0_103] : memref<8x18x8xf32, #tpu.memory_space<vmem>>, vector<1x18x8xf32>
    %124 = vector.shape_cast %123 : vector<1x18x8xf32> to vector<18x8xf32>
    %125 = vector.shape_cast %122 : vector<18x8xf32> to vector<1x18x8xf32>
    tpu.vector_store %arg16[%c4_101, %c0_102, %c0_103], %125 {strides = array<i32>} : memref<8x18x8xf32, #tpu.memory_space<vmem>>, vector<1x18x8xf32>,
    %c11 = arith.constant 11 : index
    %c0_104 = arith.constant 0 : index
    %c0_105 = arith.constant 0 : index
    %126 = vector.load %arg15[%c11, %c0_104, %c0_105] : memref<18x18x8xf32, #tpu.memory_space<vmem>>, vector<1x18x8xf32>
    %127 = vector.shape_cast %126 : vector<1x18x8xf32> to vector<18x8xf32>
    %c5_106 = arith.constant 5 : index
    %c0_107 = arith.constant 0 : index
    %c0_108 = arith.constant 0 : index
    %128 = vector.load %arg16[%c5_106, %c0_107, %c0_108] : memref<8x18x8xf32, #tpu.memory_space<vmem>>, vector<1x18x8xf32>
    %129 = vector.shape_cast %128 : vector<1x18x8xf32> to vector<18x8xf32>
    %130 = vector.shape_cast %127 : vector<18x8xf32> to vector<1x18x8xf32>
    tpu.vector_store %arg16[%c5_106, %c0_107, %c0_108], %130 {strides = array<i32>} : memref<8x18x8xf32, #tpu.memory_space<vmem>>, vector<1x18x8xf32>,
    %c13 = arith.constant 13 : index
    %c0_109 = arith.constant 0 : index
    %c0_110 = arith.constant 0 : index
    %131 = vector.load %arg15[%c13, %c0_109, %c0_110] : memref<18x18x8xf32, #tpu.memory_space<vmem>>, vector<1x18x8xf32>
    %132 = vector.shape_cast %131 : vector<1x18x8xf32> to vector<18x8xf32>
    %c6_111 = arith.constant 6 : index
    %c0_112 = arith.constant 0 : index
    %c0_113 = arith.constant 0 : index
    %133 = vector.load %arg16[%c6_111, %c0_112, %c0_113] : memref<8x18x8xf32, #tpu.memory_space<vmem>>, vector<1x18x8xf32>
    %134 = vector.shape_cast %133 : vector<1x18x8xf32> to vector<18x8xf32>
    %135 = vector.shape_cast %132 : vector<18x8xf32> to vector<1x18x8xf32>
    tpu.vector_store %arg16[%c6_111, %c0_112, %c0_113], %135 {strides = array<i32>} : memref<8x18x8xf32, #tpu.memory_space<vmem>>, vector<1x18x8xf32>,
    %c15 = arith.constant 15 : index
    %c0_114 = arith.constant 0 : index
    %c0_115 = arith.constant 0 : index
    %136 = vector.load %arg15[%c15, %c0_114, %c0_115] : memref<18x18x8xf32, #tpu.memory_space<vmem>>, vector<1x18x8xf32>
    %137 = vector.shape_cast %136 : vector<1x18x8xf32> to vector<18x8xf32>
    %c7_116 = arith.constant 7 : index
    %c0_117 = arith.constant 0 : index
    %c0_118 = arith.constant 0 : index
    %138 = vector.load %arg16[%c7_116, %c0_117, %c0_118] : memref<8x18x8xf32, #tpu.memory_space<vmem>>, vector<1x18x8xf32>
    %139 = vector.shape_cast %138 : vector<1x18x8xf32> to vector<18x8xf32>
    %140 = vector.shape_cast %137 : vector<18x8xf32> to vector<1x18x8xf32>
    tpu.vector_store %arg16[%c7_116, %c0_117, %c0_118], %140 {strides = array<i32>} : memref<8x18x8xf32, #tpu.memory_space<vmem>>, vector<1x18x8xf32>,
    %c0_119 = arith.constant 0 : index
    %c0_120 = arith.constant 0 : index
    %c0_121 = arith.constant 0 : index
    %141 = tpu.strided_load %arg16[%c0_119, %c0_120, %c0_121] {strides = array<i32: 1, 2, 1>} : memref<8x18x8xf32, #tpu.memory_space<vmem>>, vector<8x8x8xf32>
    %142 = vector.shape_cast %141 : vector<8x8x8xf32> to vector<64x8xf32>
    %143 = vector.extract_strided_slice %38 {offsets = [24, 0], sizes = [8, 8], strides = [1, 1]} : vector<72x8xf32> to vector<8x8xf32>
    %144 = arith.truncf %142 : vector<64x8xf32> to vector<64x8xbf16>
    %145 = arith.truncf %143 : vector<8x8xf32> to vector<8x8xbf16>
    %cst_122 = arith.constant dense<0.000000e+00> : vector<64x8xf32>
    %146 = tpu.matmul %144, %145, %cst_122 {dimension_numbers = #tpu.dot_dimension_numbers<[1], [0], [0], [1], [0, 0, 1, 1], [], []>} : vector<64x8xbf16>, vector<8x8xbf16>, vector<64x8xf32> -> vector<64x8xf32>
    %147 = arith.addf %100, %146 : vector<64x8xf32>
    %c0_123 = arith.constant 0 : index
    %c1_124 = arith.constant 1 : index
    %c0_125 = arith.constant 0 : index
    %148 = tpu.strided_load %arg16[%c0_123, %c1_124, %c0_125] {strides = array<i32: 1, 2, 1>} : memref<8x18x8xf32, #tpu.memory_space<vmem>>, vector<8x8x8xf32>
    %149 = vector.shape_cast %148 : vector<8x8x8xf32> to vector<64x8xf32>
    %150 = vector.extract_strided_slice %38 {offsets = [32, 0], sizes = [8, 8], strides = [1, 1]} : vector<72x8xf32> to vector<8x8xf32>
    %151 = arith.truncf %149 : vector<64x8xf32> to vector<64x8xbf16>
    %152 = arith.truncf %150 : vector<8x8xf32> to vector<8x8xbf16>
    %cst_126 = arith.constant dense<0.000000e+00> : vector<64x8xf32>
    %153 = tpu.matmul %151, %152, %cst_126 {dimension_numbers = #tpu.dot_dimension_numbers<[1], [0], [0], [1], [0, 0, 1, 1], [], []>} : vector<64x8xbf16>, vector<8x8xbf16>, vector<64x8xf32> -> vector<64x8xf32>
    %154 = arith.addf %147, %153 : vector<64x8xf32>
    %c0_127 = arith.constant 0 : index
    %c2_128 = arith.constant 2 : index
    %c0_129 = arith.constant 0 : index
    %155 = tpu.strided_load %arg16[%c0_127, %c2_128, %c0_129] {strides = array<i32: 1, 2, 1>} : memref<8x18x8xf32, #tpu.memory_space<vmem>>, vector<8x8x8xf32>
    %156 = vector.shape_cast %155 : vector<8x8x8xf32> to vector<64x8xf32>
    %157 = vector.extract_strided_slice %38 {offsets = [40, 0], sizes = [8, 8], strides = [1, 1]} : vector<72x8xf32> to vector<8x8xf32>
    %158 = arith.truncf %156 : vector<64x8xf32> to vector<64x8xbf16>
    %159 = arith.truncf %157 : vector<8x8xf32> to vector<8x8xbf16>
    %cst_130 = arith.constant dense<0.000000e+00> : vector<64x8xf32>
    %160 = tpu.matmul %158, %159, %cst_130 {dimension_numbers = #tpu.dot_dimension_numbers<[1], [0], [0], [1], [0, 0, 1, 1], [], []>} : vector<64x8xbf16>, vector<8x8xbf16>, vector<64x8xf32> -> vector<64x8xf32>
    %161 = arith.addf %154, %160 : vector<64x8xf32>
    %c2_131 = arith.constant 2 : index
    %c0_132 = arith.constant 0 : index
    %c0_133 = arith.constant 0 : index
    %162 = vector.load %arg15[%c2_131, %c0_132, %c0_133] : memref<18x18x8xf32, #tpu.memory_space<vmem>>, vector<1x18x8xf32>
    %163 = vector.shape_cast %162 : vector<1x18x8xf32> to vector<18x8xf32>
    %c0_134 = arith.constant 0 : index
    %c0_135 = arith.constant 0 : index
    %c0_136 = arith.constant 0 : index
    %164 = vector.load %arg16[%c0_134, %c0_135, %c0_136] : memref<8x18x8xf32, #tpu.memory_space<vmem>>, vector<1x18x8xf32>
    %165 = vector.shape_cast %164 : vector<1x18x8xf32> to vector<18x8xf32>
    %166 = vector.shape_cast %163 : vector<18x8xf32> to vector<1x18x8xf32>
    tpu.vector_store %arg16[%c0_134, %c0_135, %c0_136], %166 {strides = array<i32>} : memref<8x18x8xf32, #tpu.memory_space<vmem>>, vector<1x18x8xf32>,
    %c4_137 = arith.constant 4 : index
    %c0_138 = arith.constant 0 : index
    %c0_139 = arith.constant 0 : index
    %167 = vector.load %arg15[%c4_137, %c0_138, %c0_139] : memref<18x18x8xf32, #tpu.memory_space<vmem>>, vector<1x18x8xf32>
    %168 = vector.shape_cast %167 : vector<1x18x8xf32> to vector<18x8xf32>
    %c1_140 = arith.constant 1 : index
    %c0_141 = arith.constant 0 : index
    %c0_142 = arith.constant 0 : index
    %169 = vector.load %arg16[%c1_140, %c0_141, %c0_142] : memref<8x18x8xf32, #tpu.memory_space<vmem>>, vector<1x18x8xf32>
    %170 = vector.shape_cast %169 : vector<1x18x8xf32> to vector<18x8xf32>
    %171 = vector.shape_cast %168 : vector<18x8xf32> to vector<1x18x8xf32>
    tpu.vector_store %arg16[%c1_140, %c0_141, %c0_142], %171 {strides = array<i32>} : memref<8x18x8xf32, #tpu.memory_space<vmem>>, vector<1x18x8xf32>,
    %c6_143 = arith.constant 6 : index
    %c0_144 = arith.constant 0 : index
    %c0_145 = arith.constant 0 : index
    %172 = vector.load %arg15[%c6_143, %c0_144, %c0_145] : memref<18x18x8xf32, #tpu.memory_space<vmem>>, vector<1x18x8xf32>
    %173 = vector.shape_cast %172 : vector<1x18x8xf32> to vector<18x8xf32>
    %c2_146 = arith.constant 2 : index
    %c0_147 = arith.constant 0 : index
    %c0_148 = arith.constant 0 : index
    %174 = vector.load %arg16[%c2_146, %c0_147, %c0_148] : memref<8x18x8xf32, #tpu.memory_space<vmem>>, vector<1x18x8xf32>
    %175 = vector.shape_cast %174 : vector<1x18x8xf32> to vector<18x8xf32>
    %176 = vector.shape_cast %173 : vector<18x8xf32> to vector<1x18x8xf32>
    tpu.vector_store %arg16[%c2_146, %c0_147, %c0_148], %176 {strides = array<i32>} : memref<8x18x8xf32, #tpu.memory_space<vmem>>, vector<1x18x8xf32>,
    %c8_149 = arith.constant 8 : index
    %c0_150 = arith.constant 0 : index
    %c0_151 = arith.constant 0 : index
    %177 = vector.load %arg15[%c8_149, %c0_150, %c0_151] : memref<18x18x8xf32, #tpu.memory_space<vmem>>, vector<1x18x8xf32>
    %178 = vector.shape_cast %177 : vector<1x18x8xf32> to vector<18x8xf32>
    %c3_152 = arith.constant 3 : index
    %c0_153 = arith.constant 0 : index
    %c0_154 = arith.constant 0 : index
    %179 = vector.load %arg16[%c3_152, %c0_153, %c0_154] : memref<8x18x8xf32, #tpu.memory_space<vmem>>, vector<1x18x8xf32>
    %180 = vector.shape_cast %179 : vector<1x18x8xf32> to vector<18x8xf32>
    %181 = vector.shape_cast %178 : vector<18x8xf32> to vector<1x18x8xf32>
    tpu.vector_store %arg16[%c3_152, %c0_153, %c0_154], %181 {strides = array<i32>} : memref<8x18x8xf32, #tpu.memory_space<vmem>>, vector<1x18x8xf32>,
    %c10_155 = arith.constant 10 : index
    %c0_156 = arith.constant 0 : index
    %c0_157 = arith.constant 0 : index
    %182 = vector.load %arg15[%c10_155, %c0_156, %c0_157] : memref<18x18x8xf32, #tpu.memory_space<vmem>>, vector<1x18x8xf32>
    %183 = vector.shape_cast %182 : vector<1x18x8xf32> to vector<18x8xf32>
    %c4_158 = arith.constant 4 : index
    %c0_159 = arith.constant 0 : index
    %c0_160 = arith.constant 0 : index
    %184 = vector.load %arg16[%c4_158, %c0_159, %c0_160] : memref<8x18x8xf32, #tpu.memory_space<vmem>>, vector<1x18x8xf32>
    %185 = vector.shape_cast %184 : vector<1x18x8xf32> to vector<18x8xf32>
    %186 = vector.shape_cast %183 : vector<18x8xf32> to vector<1x18x8xf32>
    tpu.vector_store %arg16[%c4_158, %c0_159, %c0_160], %186 {strides = array<i32>} : memref<8x18x8xf32, #tpu.memory_space<vmem>>, vector<1x18x8xf32>,
    %c12_161 = arith.constant 12 : index
    %c0_162 = arith.constant 0 : index
    %c0_163 = arith.constant 0 : index
    %187 = vector.load %arg15[%c12_161, %c0_162, %c0_163] : memref<18x18x8xf32, #tpu.memory_space<vmem>>, vector<1x18x8xf32>
    %188 = vector.shape_cast %187 : vector<1x18x8xf32> to vector<18x8xf32>
    %c5_164 = arith.constant 5 : index
    %c0_165 = arith.constant 0 : index
    %c0_166 = arith.constant 0 : index
    %189 = vector.load %arg16[%c5_164, %c0_165, %c0_166] : memref<8x18x8xf32, #tpu.memory_space<vmem>>, vector<1x18x8xf32>
    %190 = vector.shape_cast %189 : vector<1x18x8xf32> to vector<18x8xf32>
    %191 = vector.shape_cast %188 : vector<18x8xf32> to vector<1x18x8xf32>
    tpu.vector_store %arg16[%c5_164, %c0_165, %c0_166], %191 {strides = array<i32>} : memref<8x18x8xf32, #tpu.memory_space<vmem>>, vector<1x18x8xf32>,
    %c14_167 = arith.constant 14 : index
    %c0_168 = arith.constant 0 : index
    %c0_169 = arith.constant 0 : index
    %192 = vector.load %arg15[%c14_167, %c0_168, %c0_169] : memref<18x18x8xf32, #tpu.memory_space<vmem>>, vector<1x18x8xf32>
    %193 = vector.shape_cast %192 : vector<1x18x8xf32> to vector<18x8xf32>
    %c6_170 = arith.constant 6 : index
    %c0_171 = arith.constant 0 : index
    %c0_172 = arith.constant 0 : index
    %194 = vector.load %arg16[%c6_170, %c0_171, %c0_172] : memref<8x18x8xf32, #tpu.memory_space<vmem>>, vector<1x18x8xf32>
    %195 = vector.shape_cast %194 : vector<1x18x8xf32> to vector<18x8xf32>
    %196 = vector.shape_cast %193 : vector<18x8xf32> to vector<1x18x8xf32>
    tpu.vector_store %arg16[%c6_170, %c0_171, %c0_172], %196 {strides = array<i32>} : memref<8x18x8xf32, #tpu.memory_space<vmem>>, vector<1x18x8xf32>,
    %c16 = arith.constant 16 : index
    %c0_173 = arith.constant 0 : index
    %c0_174 = arith.constant 0 : index
    %197 = vector.load %arg15[%c16, %c0_173, %c0_174] : memref<18x18x8xf32, #tpu.memory_space<vmem>>, vector<1x18x8xf32>
    %198 = vector.shape_cast %197 : vector<1x18x8xf32> to vector<18x8xf32>
    %c7_175 = arith.constant 7 : index
    %c0_176 = arith.constant 0 : index
    %c0_177 = arith.constant 0 : index
    %199 = vector.load %arg16[%c7_175, %c0_176, %c0_177] : memref<8x18x8xf32, #tpu.memory_space<vmem>>, vector<1x18x8xf32>
    %200 = vector.shape_cast %199 : vector<1x18x8xf32> to vector<18x8xf32>
    %201 = vector.shape_cast %198 : vector<18x8xf32> to vector<1x18x8xf32>
    tpu.vector_store %arg16[%c7_175, %c0_176, %c0_177], %201 {strides = array<i32>} : memref<8x18x8xf32, #tpu.memory_space<vmem>>, vector<1x18x8xf32>,
    %c0_178 = arith.constant 0 : index
    %c0_179 = arith.constant 0 : index
    %c0_180 = arith.constant 0 : index
    %202 = tpu.strided_load %arg16[%c0_178, %c0_179, %c0_180] {strides = array<i32: 1, 2, 1>} : memref<8x18x8xf32, #tpu.memory_space<vmem>>, vector<8x8x8xf32>
    %203 = vector.shape_cast %202 : vector<8x8x8xf32> to vector<64x8xf32>
    %204 = vector.extract_strided_slice %38 {offsets = [48, 0], sizes = [8, 8], strides = [1, 1]} : vector<72x8xf32> to vector<8x8xf32>
    %205 = arith.truncf %203 : vector<64x8xf32> to vector<64x8xbf16>
    %206 = arith.truncf %204 : vector<8x8xf32> to vector<8x8xbf16>
    %cst_181 = arith.constant dense<0.000000e+00> : vector<64x8xf32>
    %207 = tpu.matmul %205, %206, %cst_181 {dimension_numbers = #tpu.dot_dimension_numbers<[1], [0], [0], [1], [0, 0, 1, 1], [], []>} : vector<64x8xbf16>, vector<8x8xbf16>, vector<64x8xf32> -> vector<64x8xf32>
    %208 = arith.addf %161, %207 : vector<64x8xf32>
    %c0_182 = arith.constant 0 : index
    %c1_183 = arith.constant 1 : index
    %c0_184 = arith.constant 0 : index
    %209 = tpu.strided_load %arg16[%c0_182, %c1_183, %c0_184] {strides = array<i32: 1, 2, 1>} : memref<8x18x8xf32, #tpu.memory_space<vmem>>, vector<8x8x8xf32>
    %210 = vector.shape_cast %209 : vector<8x8x8xf32> to vector<64x8xf32>
    %211 = vector.extract_strided_slice %38 {offsets = [56, 0], sizes = [8, 8], strides = [1, 1]} : vector<72x8xf32> to vector<8x8xf32>
    %212 = arith.truncf %210 : vector<64x8xf32> to vector<64x8xbf16>
    %213 = arith.truncf %211 : vector<8x8xf32> to vector<8x8xbf16>
    %cst_185 = arith.constant dense<0.000000e+00> : vector<64x8xf32>
    %214 = tpu.matmul %212, %213, %cst_185 {dimension_numbers = #tpu.dot_dimension_numbers<[1], [0], [0], [1], [0, 0, 1, 1], [], []>} : vector<64x8xbf16>, vector<8x8xbf16>, vector<64x8xf32> -> vector<64x8xf32>
    %215 = arith.addf %208, %214 : vector<64x8xf32>
    %c0_186 = arith.constant 0 : index
    %c2_187 = arith.constant 2 : index
    %c0_188 = arith.constant 0 : index
    %216 = tpu.strided_load %arg16[%c0_186, %c2_187, %c0_188] {strides = array<i32: 1, 2, 1>} : memref<8x18x8xf32, #tpu.memory_space<vmem>>, vector<8x8x8xf32>
    %217 = vector.shape_cast %216 : vector<8x8x8xf32> to vector<64x8xf32>
    %218 = vector.extract_strided_slice %38 {offsets = [64, 0], sizes = [8, 8], strides = [1, 1]} : vector<72x8xf32> to vector<8x8xf32>
    %219 = arith.truncf %217 : vector<64x8xf32> to vector<64x8xbf16>
    %220 = arith.truncf %218 : vector<8x8xf32> to vector<8x8xbf16>
    %cst_189 = arith.constant dense<0.000000e+00> : vector<64x8xf32>
    %221 = tpu.matmul %219, %220, %cst_189 {dimension_numbers = #tpu.dot_dimension_numbers<[1], [0], [0], [1], [0, 0, 1, 1], [], []>} : vector<64x8xbf16>, vector<8x8xbf16>, vector<64x8xf32> -> vector<64x8xf32>
    %222 = arith.addf %215, %221 : vector<64x8xf32>
    %c0_190 = arith.constant 0 : index
    %c0_191 = arith.constant 0 : index
    %223 = vector.load %arg6[%c0_190, %c0_191] : memref<1x8xf32, #tpu.memory_space<vmem>>, vector<1x8xf32>
    %c0_192 = arith.constant 0 : index
    %c0_193 = arith.constant 0 : index
    %224 = vector.load %arg7[%c0_192, %c0_193] : memref<1x8xf32, #tpu.memory_space<vmem>>, vector<1x8xf32>
    %cst_194 = arith.constant dense<0.000000e+00> : vector<8xf32>
    %225 = vector.multi_reduction <add>, %222, %cst_194 [0] : vector<64x8xf32> to vector<8xf32>
    %226 = vector.shape_cast %225 : vector<8xf32> to vector<1x8xf32>
    %cst_195 = arith.constant 1.562500e-02 : f32
    %227 = vector.broadcast %cst_195 : f32 to vector<1x8xf32>
    %228 = arith.mulf %226, %227 : vector<1x8xf32>
    %229 = arith.mulf %222, %222 : vector<64x8xf32>
    %cst_196 = arith.constant dense<0.000000e+00> : vector<8xf32>
    %230 = vector.multi_reduction <add>, %229, %cst_196 [0] : vector<64x8xf32> to vector<8xf32>
    %231 = vector.shape_cast %230 : vector<8xf32> to vector<1x8xf32>
    %cst_197 = arith.constant 1.562500e-02 : f32
    %232 = vector.broadcast %cst_197 : f32 to vector<1x8xf32>
    %233 = arith.mulf %231, %232 : vector<1x8xf32>
    %234 = arith.mulf %228, %228 : vector<1x8xf32>
    %235 = arith.subf %233, %234 : vector<1x8xf32>
    %cst_198 = arith.constant 0.000000e+00 : f32
    %236 = vector.broadcast %cst_198 : f32 to vector<1x8xf32>
    %237 = arith.maximumf %235, %236 : vector<1x8xf32>
    %cst_199 = arith.constant 9.99999974E-6 : f32
    %238 = vector.broadcast %cst_199 : f32 to vector<1x8xf32>
    %239 = arith.addf %237, %238 : vector<1x8xf32>
    %240 = math.rsqrt %239 : vector<1x8xf32>
    %241 = arith.mulf %223, %240 : vector<1x8xf32>
    %242 = arith.mulf %228, %241 : vector<1x8xf32>
    %243 = arith.subf %224, %242 : vector<1x8xf32>
    %244 = vector.broadcast %241 : vector<1x8xf32> to vector<64x8xf32>
    %245 = arith.mulf %222, %244 : vector<64x8xf32>
    %246 = vector.broadcast %243 : vector<1x8xf32> to vector<64x8xf32>
    %247 = arith.addf %245, %246 : vector<64x8xf32>
    %cst_200 = arith.constant 0.000000e+00 : f32
    %248 = vector.broadcast %cst_200 : f32 to vector<64x8xf32>
    %249 = arith.maximumf %247, %248 : vector<64x8xf32>
    %c0_201 = arith.constant 0 : index
    %c0_202 = arith.constant 0 : index
    %c0_203 = arith.constant 0 : index
    %c0_204 = arith.constant 0 : index
    %250 = vector.load %arg1[%c0_201, %c0_202, %c0_203, %c0_204] : memref<1x16x16x4xf32, #tpu.memory_space<vmem>>, vector<1x1x16x4xf32>
    %251 = vector.shape_cast %250 : vector<1x1x16x4xf32> to vector<16x4xf32>
    %c0_205 = arith.constant 0 : index
    %c0_206 = arith.constant 0 : index
    %c0_207 = arith.constant 0 : index
    %252 = vector.load %arg17[%c0_205, %c0_206, %c0_207] : memref<8x16x4xf32, #tpu.memory_space<vmem>>, vector<1x16x4xf32>
    %253 = vector.shape_cast %252 : vector<1x16x4xf32> to vector<16x4xf32>
    %254 = vector.shape_cast %251 : vector<16x4xf32> to vector<1x16x4xf32>
    tpu.vector_store %arg17[%c0_205, %c0_206, %c0_207], %254 {strides = array<i32>} : memref<8x16x4xf32, #tpu.memory_space<vmem>>, vector<1x16x4xf32>,
    %c0_208 = arith.constant 0 : index
    %c2_209 = arith.constant 2 : index
    %c0_210 = arith.constant 0 : index
    %c0_211 = arith.constant 0 : index
    %255 = vector.load %arg1[%c0_208, %c2_209, %c0_210, %c0_211] : memref<1x16x16x4xf32, #tpu.memory_space<vmem>>, vector<1x1x16x4xf32>
    %256 = vector.shape_cast %255 : vector<1x1x16x4xf32> to vector<16x4xf32>
    %c1_212 = arith.constant 1 : index
    %c0_213 = arith.constant 0 : index
    %c0_214 = arith.constant 0 : index
    %257 = vector.load %arg17[%c1_212, %c0_213, %c0_214] : memref<8x16x4xf32, #tpu.memory_space<vmem>>, vector<1x16x4xf32>
    %258 = vector.shape_cast %257 : vector<1x16x4xf32> to vector<16x4xf32>
    %259 = vector.shape_cast %256 : vector<16x4xf32> to vector<1x16x4xf32>
    tpu.vector_store %arg17[%c1_212, %c0_213, %c0_214], %259 {strides = array<i32>} : memref<8x16x4xf32, #tpu.memory_space<vmem>>, vector<1x16x4xf32>,
    %c0_215 = arith.constant 0 : index
    %c4_216 = arith.constant 4 : index
    %c0_217 = arith.constant 0 : index
    %c0_218 = arith.constant 0 : index
    %260 = vector.load %arg1[%c0_215, %c4_216, %c0_217, %c0_218] : memref<1x16x16x4xf32, #tpu.memory_space<vmem>>, vector<1x1x16x4xf32>
    %261 = vector.shape_cast %260 : vector<1x1x16x4xf32> to vector<16x4xf32>
    %c2_219 = arith.constant 2 : index
    %c0_220 = arith.constant 0 : index
    %c0_221 = arith.constant 0 : index
    %262 = vector.load %arg17[%c2_219, %c0_220, %c0_221] : memref<8x16x4xf32, #tpu.memory_space<vmem>>, vector<1x16x4xf32>
    %263 = vector.shape_cast %262 : vector<1x16x4xf32> to vector<16x4xf32>
    %264 = vector.shape_cast %261 : vector<16x4xf32> to vector<1x16x4xf32>
    tpu.vector_store %arg17[%c2_219, %c0_220, %c0_221], %264 {strides = array<i32>} : memref<8x16x4xf32, #tpu.memory_space<vmem>>, vector<1x16x4xf32>,
    %c0_222 = arith.constant 0 : index
    %c6_223 = arith.constant 6 : index
    %c0_224 = arith.constant 0 : index
    %c0_225 = arith.constant 0 : index
    %265 = vector.load %arg1[%c0_222, %c6_223, %c0_224, %c0_225] : memref<1x16x16x4xf32, #tpu.memory_space<vmem>>, vector<1x1x16x4xf32>
    %266 = vector.shape_cast %265 : vector<1x1x16x4xf32> to vector<16x4xf32>
    %c3_226 = arith.constant 3 : index
    %c0_227 = arith.constant 0 : index
    %c0_228 = arith.constant 0 : index
    %267 = vector.load %arg17[%c3_226, %c0_227, %c0_228] : memref<8x16x4xf32, #tpu.memory_space<vmem>>, vector<1x16x4xf32>
    %268 = vector.shape_cast %267 : vector<1x16x4xf32> to vector<16x4xf32>
    %269 = vector.shape_cast %266 : vector<16x4xf32> to vector<1x16x4xf32>
    tpu.vector_store %arg17[%c3_226, %c0_227, %c0_228], %269 {strides = array<i32>} : memref<8x16x4xf32, #tpu.memory_space<vmem>>, vector<1x16x4xf32>,
    %c0_229 = arith.constant 0 : index
    %c8_230 = arith.constant 8 : index
    %c0_231 = arith.constant 0 : index
    %c0_232 = arith.constant 0 : index
    %270 = vector.load %arg1[%c0_229, %c8_230, %c0_231, %c0_232] : memref<1x16x16x4xf32, #tpu.memory_space<vmem>>, vector<1x1x16x4xf32>
    %271 = vector.shape_cast %270 : vector<1x1x16x4xf32> to vector<16x4xf32>
    %c4_233 = arith.constant 4 : index
    %c0_234 = arith.constant 0 : index
    %c0_235 = arith.constant 0 : index
    %272 = vector.load %arg17[%c4_233, %c0_234, %c0_235] : memref<8x16x4xf32, #tpu.memory_space<vmem>>, vector<1x16x4xf32>
    %273 = vector.shape_cast %272 : vector<1x16x4xf32> to vector<16x4xf32>
    %274 = vector.shape_cast %271 : vector<16x4xf32> to vector<1x16x4xf32>
    tpu.vector_store %arg17[%c4_233, %c0_234, %c0_235], %274 {strides = array<i32>} : memref<8x16x4xf32, #tpu.memory_space<vmem>>, vector<1x16x4xf32>,
    %c0_236 = arith.constant 0 : index
    %c10_237 = arith.constant 10 : index
    %c0_238 = arith.constant 0 : index
    %c0_239 = arith.constant 0 : index
    %275 = vector.load %arg1[%c0_236, %c10_237, %c0_238, %c0_239] : memref<1x16x16x4xf32, #tpu.memory_space<vmem>>, vector<1x1x16x4xf32>
    %276 = vector.shape_cast %275 : vector<1x1x16x4xf32> to vector<16x4xf32>
    %c5_240 = arith.constant 5 : index
    %c0_241 = arith.constant 0 : index
    %c0_242 = arith.constant 0 : index
    %277 = vector.load %arg17[%c5_240, %c0_241, %c0_242] : memref<8x16x4xf32, #tpu.memory_space<vmem>>, vector<1x16x4xf32>
    %278 = vector.shape_cast %277 : vector<1x16x4xf32> to vector<16x4xf32>
    %279 = vector.shape_cast %276 : vector<16x4xf32> to vector<1x16x4xf32>
    tpu.vector_store %arg17[%c5_240, %c0_241, %c0_242], %279 {strides = array<i32>} : memref<8x16x4xf32, #tpu.memory_space<vmem>>, vector<1x16x4xf32>,
    %c0_243 = arith.constant 0 : index
    %c12_244 = arith.constant 12 : index
    %c0_245 = arith.constant 0 : index
    %c0_246 = arith.constant 0 : index
    %280 = vector.load %arg1[%c0_243, %c12_244, %c0_245, %c0_246] : memref<1x16x16x4xf32, #tpu.memory_space<vmem>>, vector<1x1x16x4xf32>
    %281 = vector.shape_cast %280 : vector<1x1x16x4xf32> to vector<16x4xf32>
    %c6_247 = arith.constant 6 : index
    %c0_248 = arith.constant 0 : index
    %c0_249 = arith.constant 0 : index
    %282 = vector.load %arg17[%c6_247, %c0_248, %c0_249] : memref<8x16x4xf32, #tpu.memory_space<vmem>>, vector<1x16x4xf32>
    %283 = vector.shape_cast %282 : vector<1x16x4xf32> to vector<16x4xf32>
    %284 = vector.shape_cast %281 : vector<16x4xf32> to vector<1x16x4xf32>
    tpu.vector_store %arg17[%c6_247, %c0_248, %c0_249], %284 {strides = array<i32>} : memref<8x16x4xf32, #tpu.memory_space<vmem>>, vector<1x16x4xf32>,
    %c0_250 = arith.constant 0 : index
    %c14_251 = arith.constant 14 : index
    %c0_252 = arith.constant 0 : index
    %c0_253 = arith.constant 0 : index
    %285 = vector.load %arg1[%c0_250, %c14_251, %c0_252, %c0_253] : memref<1x16x16x4xf32, #tpu.memory_space<vmem>>, vector<1x1x16x4xf32>
    %286 = vector.shape_cast %285 : vector<1x1x16x4xf32> to vector<16x4xf32>
    %c7_254 = arith.constant 7 : index
    %c0_255 = arith.constant 0 : index
    %c0_256 = arith.constant 0 : index
    %287 = vector.load %arg17[%c7_254, %c0_255, %c0_256] : memref<8x16x4xf32, #tpu.memory_space<vmem>>, vector<1x16x4xf32>
    %288 = vector.shape_cast %287 : vector<1x16x4xf32> to vector<16x4xf32>
    %289 = vector.shape_cast %286 : vector<16x4xf32> to vector<1x16x4xf32>
    tpu.vector_store %arg17[%c7_254, %c0_255, %c0_256], %289 {strides = array<i32>} : memref<8x16x4xf32, #tpu.memory_space<vmem>>, vector<1x16x4xf32>,
    %c0_257 = arith.constant 0 : index
    %c0_258 = arith.constant 0 : index
    %c0_259 = arith.constant 0 : index
    %290 = tpu.strided_load %arg17[%c0_257, %c0_258, %c0_259] {strides = array<i32: 1, 2, 1>} : memref<8x16x4xf32, #tpu.memory_space<vmem>>, vector<8x8x4xf32>
    %291 = vector.shape_cast %290 : vector<8x8x4xf32> to vector<64x4xf32>
    %c0_260 = arith.constant 0 : index
    %c0_261 = arith.constant 0 : index
    %292 = vector.load %arg11[%c0_260, %c0_261] : memref<4x32xf32, #tpu.memory_space<vmem>>, vector<4x32xf32>
    %293 = arith.truncf %291 : vector<64x4xf32> to vector<64x4xbf16>
    %294 = arith.truncf %292 : vector<4x32xf32> to vector<4x32xbf16>
    %cst_262 = arith.constant dense<0.000000e+00> : vector<64x32xf32>
    %295 = tpu.matmul %293, %294, %cst_262 {dimension_numbers = #tpu.dot_dimension_numbers<[1], [0], [0], [1], [0, 0, 1, 1], [], []>} : vector<64x4xbf16>, vector<4x32xbf16>, vector<64x32xf32> -> vector<64x32xf32>
    %c0_263 = arith.constant 0 : index
    %c0_264 = arith.constant 0 : index
    %296 = vector.load %arg12[%c0_263, %c0_264] : memref<1x32xf32, #tpu.memory_space<vmem>>, vector<1x32xf32>
    %c0_265 = arith.constant 0 : index
    %c0_266 = arith.constant 0 : index
    %297 = vector.load %arg13[%c0_265, %c0_266] : memref<1x32xf32, #tpu.memory_space<vmem>>, vector<1x32xf32>
    %cst_267 = arith.constant dense<0.000000e+00> : vector<32xf32>
    %298 = vector.multi_reduction <add>, %295, %cst_267 [0] : vector<64x32xf32> to vector<32xf32>
    %299 = vector.shape_cast %298 : vector<32xf32> to vector<1x32xf32>
    %cst_268 = arith.constant 1.562500e-02 : f32
    %300 = vector.broadcast %cst_268 : f32 to vector<1x32xf32>
    %301 = arith.mulf %299, %300 : vector<1x32xf32>
    %302 = arith.mulf %295, %295 : vector<64x32xf32>
    %cst_269 = arith.constant dense<0.000000e+00> : vector<32xf32>
    %303 = vector.multi_reduction <add>, %302, %cst_269 [0] : vector<64x32xf32> to vector<32xf32>
    %304 = vector.shape_cast %303 : vector<32xf32> to vector<1x32xf32>
    %cst_270 = arith.constant 1.562500e-02 : f32
    %305 = vector.broadcast %cst_270 : f32 to vector<1x32xf32>
    %306 = arith.mulf %304, %305 : vector<1x32xf32>
    %307 = arith.mulf %301, %301 : vector<1x32xf32>
    %308 = arith.subf %306, %307 : vector<1x32xf32>
    %cst_271 = arith.constant 0.000000e+00 : f32
    %309 = vector.broadcast %cst_271 : f32 to vector<1x32xf32>
    %310 = arith.maximumf %308, %309 : vector<1x32xf32>
    %cst_272 = arith.constant 9.99999974E-6 : f32
    %311 = vector.broadcast %cst_272 : f32 to vector<1x32xf32>
    %312 = arith.addf %310, %311 : vector<1x32xf32>
    %313 = math.rsqrt %312 : vector<1x32xf32>
    %314 = arith.mulf %296, %313 : vector<1x32xf32>
    %315 = arith.mulf %301, %314 : vector<1x32xf32>
    %316 = arith.subf %297, %315 : vector<1x32xf32>
    %317 = vector.broadcast %314 : vector<1x32xf32> to vector<64x32xf32>
    %318 = arith.mulf %295, %317 : vector<64x32xf32>
    %319 = vector.broadcast %316 : vector<1x32xf32> to vector<64x32xf32>
    %320 = arith.addf %318, %319 : vector<64x32xf32>
    %c0_273 = arith.constant 0 : index
    %c0_274 = arith.constant 0 : index
    %321 = vector.load %arg8[%c0_273, %c0_274] : memref<8x32xf32, #tpu.memory_space<vmem>>, vector<8x32xf32>
    %322 = arith.truncf %249 : vector<64x8xf32> to vector<64x8xbf16>
    %323 = arith.truncf %321 : vector<8x32xf32> to vector<8x32xbf16>
    %cst_275 = arith.constant dense<0.000000e+00> : vector<64x32xf32>
    %324 = tpu.matmul %322, %323, %cst_275 {dimension_numbers = #tpu.dot_dimension_numbers<[1], [0], [0], [1], [0, 0, 1, 1], [], []>} : vector<64x8xbf16>, vector<8x32xbf16>, vector<64x32xf32> -> vector<64x32xf32>
    %c0_276 = arith.constant 0 : index
    %c0_277 = arith.constant 0 : index
    %325 = vector.load %arg9[%c0_276, %c0_277] : memref<1x32xf32, #tpu.memory_space<vmem>>, vector<1x32xf32>
    %c0_278 = arith.constant 0 : index
    %c0_279 = arith.constant 0 : index
    %326 = vector.load %arg10[%c0_278, %c0_279] : memref<1x32xf32, #tpu.memory_space<vmem>>, vector<1x32xf32>
    %cst_280 = arith.constant dense<0.000000e+00> : vector<32xf32>
    %327 = vector.multi_reduction <add>, %324, %cst_280 [0] : vector<64x32xf32> to vector<32xf32>
    %328 = vector.shape_cast %327 : vector<32xf32> to vector<1x32xf32>
    %cst_281 = arith.constant 1.562500e-02 : f32
    %329 = vector.broadcast %cst_281 : f32 to vector<1x32xf32>
    %330 = arith.mulf %328, %329 : vector<1x32xf32>
    %331 = arith.mulf %324, %324 : vector<64x32xf32>
    %cst_282 = arith.constant dense<0.000000e+00> : vector<32xf32>
    %332 = vector.multi_reduction <add>, %331, %cst_282 [0] : vector<64x32xf32> to vector<32xf32>
    %333 = vector.shape_cast %332 : vector<32xf32> to vector<1x32xf32>
    %cst_283 = arith.constant 1.562500e-02 : f32
    %334 = vector.broadcast %cst_283 : f32 to vector<1x32xf32>
    %335 = arith.mulf %333, %334 : vector<1x32xf32>
    %336 = arith.mulf %330, %330 : vector<1x32xf32>
    %337 = arith.subf %335, %336 : vector<1x32xf32>
    %cst_284 = arith.constant 0.000000e+00 : f32
    %338 = vector.broadcast %cst_284 : f32 to vector<1x32xf32>
    %339 = arith.maximumf %337, %338 : vector<1x32xf32>
    %cst_285 = arith.constant 9.99999974E-6 : f32
    %340 = vector.broadcast %cst_285 : f32 to vector<1x32xf32>
    %341 = arith.addf %339, %340 : vector<1x32xf32>
    %342 = math.rsqrt %341 : vector<1x32xf32>
    %343 = arith.mulf %325, %342 : vector<1x32xf32>
    %344 = arith.mulf %330, %343 : vector<1x32xf32>
    %345 = arith.subf %326, %344 : vector<1x32xf32>
    %346 = vector.broadcast %343 : vector<1x32xf32> to vector<64x32xf32>
    %347 = arith.mulf %324, %346 : vector<64x32xf32>
    %348 = vector.broadcast %345 : vector<1x32xf32> to vector<64x32xf32>
    %349 = arith.addf %347, %348 : vector<64x32xf32>
    %350 = arith.addf %349, %320 : vector<64x32xf32>
    %cst_286 = arith.constant 0.000000e+00 : f32
    %351 = vector.broadcast %cst_286 : f32 to vector<64x32xf32>
    %352 = arith.maximumf %350, %351 : vector<64x32xf32>
    %353 = vector.shape_cast %352 : vector<64x32xf32> to vector<8x8x32xf32>
    %c0_287 = arith.constant 0 : index
    %c0_288 = arith.constant 0 : index
    %c0_289 = arith.constant 0 : index
    %c0_290 = arith.constant 0 : index
    %354 = vector.load %arg14[%c0_287, %c0_288, %c0_289, %c0_290] : memref<1x8x8x32xf32, #tpu.memory_space<vmem>>, vector<1x8x8x32xf32>
    %355 = vector.shape_cast %354 : vector<1x8x8x32xf32> to vector<8x8x32xf32>
    %356 = vector.shape_cast %353 : vector<8x8x32xf32> to vector<1x8x8x32xf32>
    tpu.vector_store %arg14[%c0_287, %c0_288, %c0_289, %c0_290], %356 {strides = array<i32>} : memref<1x8x8x32xf32, #tpu.memory_space<vmem>>, vector<1x8x8x32xf32>,
    return
  }
  func.func @transform_0(%arg0: i32) -> (i32, i32, i32, i32) {
    %c0_i32 = arith.constant 0 : i32
    %c0_i32_0 = arith.constant 0 : i32
    %c0_i32_1 = arith.constant 0 : i32
    %c0_i32_2 = arith.constant 0 : i32
    return %arg0, %c0_i32, %c0_i32_0, %c0_i32_1 : i32, i32, i32, i32
  }
  func.func @transform_1(%arg0: i32) -> (i32, i32) {
    %c0_i32 = arith.constant 0 : i32
    %c0_i32_0 = arith.constant 0 : i32
    %c0_i32_1 = arith.constant 0 : i32
    return %c0_i32, %c0_i32_0 : i32, i32
  }
  func.func @transform_2(%arg0: i32) -> (i32, i32) {
    %c0_i32 = arith.constant 0 : i32
    %c0_i32_0 = arith.constant 0 : i32
    %c0_i32_1 = arith.constant 0 : i32
    return %c0_i32, %c0_i32_0 : i32, i32
  }
  func.func @transform_3(%arg0: i32) -> (i32, i32) {
    %c0_i32 = arith.constant 0 : i32
    %c0_i32_0 = arith.constant 0 : i32
    %c0_i32_1 = arith.constant 0 : i32
    return %c0_i32, %c0_i32_0 : i32, i32
  }
  func.func @transform_4(%arg0: i32) -> (i32, i32) {
    %c0_i32 = arith.constant 0 : i32
    %c0_i32_0 = arith.constant 0 : i32
    %c0_i32_1 = arith.constant 0 : i32
    return %c0_i32, %c0_i32_0 : i32, i32
  }
  func.func @transform_5(%arg0: i32) -> (i32, i32) {
    %c0_i32 = arith.constant 0 : i32
    %c0_i32_0 = arith.constant 0 : i32
    %c0_i32_1 = arith.constant 0 : i32
    return %c0_i32, %c0_i32_0 : i32, i32
  }
  func.func @transform_6(%arg0: i32) -> (i32, i32) {
    %c0_i32 = arith.constant 0 : i32
    %c0_i32_0 = arith.constant 0 : i32
    %c0_i32_1 = arith.constant 0 : i32
    return %c0_i32, %c0_i32_0 : i32, i32
  }
  func.func @transform_7(%arg0: i32) -> (i32, i32) {
    %c0_i32 = arith.constant 0 : i32
    %c0_i32_0 = arith.constant 0 : i32
    %c0_i32_1 = arith.constant 0 : i32
    return %c0_i32, %c0_i32_0 : i32, i32
  }
  func.func @transform_8(%arg0: i32) -> (i32, i32) {
    %c0_i32 = arith.constant 0 : i32
    %c0_i32_0 = arith.constant 0 : i32
    %c0_i32_1 = arith.constant 0 : i32
    return %c0_i32, %c0_i32_0 : i32, i32
  }
  func.func @transform_9(%arg0: i32) -> (i32, i32) {
    %c0_i32 = arith.constant 0 : i32
    %c0_i32_0 = arith.constant 0 : i32
    %c0_i32_1 = arith.constant 0 : i32
    return %c0_i32, %c0_i32_0 : i32, i32
  }
  func.func @transform_10(%arg0: i32) -> (i32, i32) {
    %c0_i32 = arith.constant 0 : i32
    %c0_i32_0 = arith.constant 0 : i32
    %c0_i32_1 = arith.constant 0 : i32
    return %c0_i32, %c0_i32_0 : i32, i32
  }
  func.func @transform_11(%arg0: i32) -> (i32, i32) {
    %c0_i32 = arith.constant 0 : i32
    %c0_i32_0 = arith.constant 0 : i32
    %c0_i32_1 = arith.constant 0 : i32
    return %c0_i32, %c0_i32_0 : i32, i32
  }
  func.func @transform_12(%arg0: i32) -> (i32, i32) {
    %c0_i32 = arith.constant 0 : i32
    %c0_i32_0 = arith.constant 0 : i32
    %c0_i32_1 = arith.constant 0 : i32
    return %c0_i32, %c0_i32_0 : i32, i32
  }
  func.func @transform_13(%arg0: i32) -> (i32, i32, i32, i32) {
    %c0_i32 = arith.constant 0 : i32
    %c0_i32_0 = arith.constant 0 : i32
    %c0_i32_1 = arith.constant 0 : i32
    %c0_i32_2 = arith.constant 0 : i32
    return %arg0, %c0_i32, %c0_i32_0, %c0_i32_1 : i32, i32, i32, i32
  }
}

</mosaic_0001>

<llo_original>
// kernel: bottleneck_forward.1
$region0: #{bottleneck_forward.1}
  #allocation0 [shape = 'u32[]', space=smem, size = 0x4, offset = 0x4, fixed_abs, tag = 'smem constant byte address 0x4 - core index']
  #allocation1 [shape = 'u32[72,128]{1,0:T(1,128)}', space=vmem, size = 0x9000, scoped, tag = 'internal scratch']
  #allocation2 [shape = 'f32[18,18,8]{2,1,0:T(8,128)}', space=vmem, size = 0x36000, scoped, tag = 'scratch operand']
  #allocation3 [shape = 'f32[8,18,8]{2,1,0:T(8,128)}', space=vmem, size = 0x18000, scoped, tag = 'scratch operand']
  #allocation4 [shape = 'f32[8,16,4]{2,1,0:T(8,128)}', space=vmem, size = 0x10000, scoped, tag = 'scratch operand']
  %s0 = inlined_call_operand.vmem [shape: f32[2,16,16,4], index: 0, kind: input, shape index: {}]
  %s1 = inlined_call_operand.vmem [shape: f32[4,8], index: 1, kind: input, shape index: {}]
  %s2 = inlined_call_operand.vmem [shape: f32[1,8], index: 2, kind: input, shape index: {}]
  %s3 = inlined_call_operand.vmem [shape: f32[1,8], index: 3, kind: input, shape index: {}]
  %s4 = inlined_call_operand.vmem [shape: f32[72,8], index: 4, kind: input, shape index: {}]
  %s5 = inlined_call_operand.vmem [shape: f32[1,8], index: 5, kind: input, shape index: {}]
  %s6 = inlined_call_operand.vmem [shape: f32[1,8], index: 6, kind: input, shape index: {}]
  %s7 = inlined_call_operand.vmem [shape: f32[8,32], index: 7, kind: input, shape index: {}]
  %s8 = inlined_call_operand.vmem [shape: f32[1,32], index: 8, kind: input, shape index: {}]
  %s9 = inlined_call_operand.vmem [shape: f32[1,32], index: 9, kind: input, shape index: {}]
  %s10 = inlined_call_operand.vmem [shape: f32[4,32], index: 10, kind: input, shape index: {}]
  %s11 = inlined_call_operand.vmem [shape: f32[1,32], index: 11, kind: input, shape index: {}]
  %s12 = inlined_call_operand.vmem [shape: f32[1,32], index: 12, kind: input, shape index: {}]
  %s13 = inlined_call_operand.hbm [shape: f32[2,8,8,32], index: 13, kind: output, shape index: {}]
  %s14 = sld [smem:[#allocation0]]
  $region85: #{bottleneck_forward.1} parent=0
    _
  %s16 = ssub.s32 1, %s14
  %s17 = scalar_select 0, %s16, %s14
  $region1: #{bottleneck_forward.1} parent=0
    #allocation5 [shape = 'u8[65536]{0}', space=vmem, size = 0x10000, scoped, tag = 'output window, operand 0']
    #allocation6 [shape = 's32[2]{0}', space=sflag, size = 0x8, scoped, tag = 'scoped memory for bottleneck_forward.1']
    %18 = vsyncpa [#allocation6], 0
    %s19 = scalar_lea.sflag [#allocation6], 1
    %20 = vsyncpa %s19, 0
    loop: start=0, step=1, limit=4
    $region2: #{bottleneck_forward.1} parent=1 // loop_pre_header
      _
    $region3: #{bottleneck_forward.1} parent=1 // loop_header
      %s22 = sphi 0, %s26
      %p23 = scmp.ge.s32.totalorder %s22, 4
      %s32 = sphi 0, %s34
      %s35 = sphi 0, %s32
      %s36 = sphi 0, %s35
      %s52 = sphi 0, %s36
      %s56 = sphi 0, %s56
      %s58 = sphi 0, %s56
      %s59 = sphi 0, %s58
      %s73 = sphi 0, %s59
      %s77 = sphi 0, %s77
      %s79 = sphi 0, %s77
      %s80 = sphi 0, %s79
      %s94 = sphi 0, %s80
      %s98 = sphi 0, %s98
      %s100 = sphi 0, %s98
      %s101 = sphi 0, %s100
      %s115 = sphi 0, %s101
      %s119 = sphi 0, %s119
      %s121 = sphi 0, %s119
      %s122 = sphi 0, %s121
      %s136 = sphi 0, %s122
      %s140 = sphi 0, %s140
      %s142 = sphi 0, %s140
      %s143 = sphi 0, %s142
      %s157 = sphi 0, %s143
      %s161 = sphi 0, %s161
      %s163 = sphi 0, %s161
      %s164 = sphi 0, %s163
      %s178 = sphi 0, %s164
      %s182 = sphi 0, %s182
      %s184 = sphi 0, %s182
      %s185 = sphi 0, %s184
      %s199 = sphi 0, %s185
      %s203 = sphi 0, %s203
      %s205 = sphi 0, %s203
      %s206 = sphi 0, %s205
      %s220 = sphi 0, %s206
      %s224 = sphi 0, %s224
      %s226 = sphi 0, %s224
      %s227 = sphi 0, %s226
      %s241 = sphi 0, %s227
      %s245 = sphi 0, %s245
      %s247 = sphi 0, %s245
      %s248 = sphi 0, %s247
      %s262 = sphi 0, %s248
      %s266 = sphi 0, %s266
      %s268 = sphi 0, %s266
      %s269 = sphi 0, %s268
      %s283 = sphi 0, %s269
      %s287 = sphi 0, %s287
      %s289 = sphi 0, %s287
      %s290 = sphi 0, %s289
      %s304 = sphi 0, %s290
      %s310 = sphi 0, %s312
      %s313 = sphi 0, %s310
      %s314 = sphi 0, %s313
      %s330 = sphi 0, %s314
    $region4: #{bottleneck_forward.1} parent=1 // loop_header_branch
      %25 = sbr.rel (%p23) target = $region8
    $region5: #{bottleneck_forward.1} parent=1 // loop_body
      %s27 = ssub.s32 %s22, 1
      %s28 = ssub.s32 %s22, 2
      %s29 = sadd.s32 %s22, 1
      %s30 = ssub.s32 %s22, %s29
      %p31 = scmp.eq.s32.totalorder %s30, 0
      %s33 = sadd.s32 %s32, 1
      %s34 = scalar_select %p31, %s32, %s33
      %p37 = pneg %p31
      %p38 = scmp.eq.s32.totalorder %s22, 1
      %p39 = por %p37, %p38
      %p40 = scmp.ne.s32.totalorder %s32, %s35
      %p41 = scmp.eq.s32.totalorder %s22, 0
      %p42 = por %p40, %p41
      %p43 = scmp.ne.s32.totalorder %s32, %s35
      %p44 = scmp.eq.s32.totalorder %s27, 1
      %p45 = por %p43, %p44
      %p46 = scmp.ne.s32.totalorder %s35, %s36
      %p47 = scmp.eq.s32.totalorder %s27, 0
      %p48 = por %p46, %p47
      %p49 = scmp.ne.s32.totalorder %s35, %s36
      %p50 = scmp.eq.s32.totalorder %s28, 1
      %p51 = por %p49, %p50
      %p53 = scmp.ne.s32.totalorder %s36, %s52
      %p54 = scmp.eq.s32.totalorder %s28, 0
      %p55 = por %p53, %p54
      %s57 = sadd.s32 %s56, 1
      %p60 = scmp.eq.s32.totalorder %s22, 1
      %p61 = scmp.ne.s32.totalorder %s56, %s58
      %p62 = scmp.eq.s32.totalorder %s22, 0
      %p63 = por %p61, %p62
      %p64 = scmp.ne.s32.totalorder %s56, %s58
      %p65 = scmp.eq.s32.totalorder %s27, 1
      %p66 = por %p64, %p65
      %p67 = scmp.ne.s32.totalorder %s58, %s59
      %p68 = scmp.eq.s32.totalorder %s27, 0
      %p69 = por %p67, %p68
      %p70 = scmp.ne.s32.totalorder %s58, %s59
      %p71 = scmp.eq.s32.totalorder %s28, 1
      %p72 = por %p70, %p71
      %p74 = scmp.ne.s32.totalorder %s59, %s73
      %p75 = scmp.eq.s32.totalorder %s28, 0
      %p76 = por %p74, %p75
      %s78 = sadd.s32 %s77, 1
      %p81 = scmp.eq.s32.totalorder %s22, 1
      %p82 = scmp.ne.s32.totalorder %s77, %s79
      %p83 = scmp.eq.s32.totalorder %s22, 0
      %p84 = por %p82, %p83
      %p85 = scmp.ne.s32.totalorder %s77, %s79
      %p86 = scmp.eq.s32.totalorder %s27, 1
      %p87 = por %p85, %p86
      %p88 = scmp.ne.s32.totalorder %s79, %s80
      %p89 = scmp.eq.s32.totalorder %s27, 0
      %p90 = por %p88, %p89
      %p91 = scmp.ne.s32.totalorder %s79, %s80
      %p92 = scmp.eq.s32.totalorder %s28, 1
      %p93 = por %p91, %p92
      %p95 = scmp.ne.s32.totalorder %s80, %s94
      %p96 = scmp.eq.s32.totalorder %s28, 0
      %p97 = por %p95, %p96
      %s99 = sadd.s32 %s98, 1
      %p102 = scmp.eq.s32.totalorder %s22, 1
      %p103 = scmp.ne.s32.totalorder %s98, %s100
      %p104 = scmp.eq.s32.totalorder %s22, 0
      %p105 = por %p103, %p104
      %p106 = scmp.ne.s32.totalorder %s98, %s100
      %p107 = scmp.eq.s32.totalorder %s27, 1
      %p108 = por %p106, %p107
      %p109 = scmp.ne.s32.totalorder %s100, %s101
      %p110 = scmp.eq.s32.totalorder %s27, 0
      %p111 = por %p109, %p110
      %p112 = scmp.ne.s32.totalorder %s100, %s101
      %p113 = scmp.eq.s32.totalorder %s28, 1
      %p114 = por %p112, %p113
      %p116 = scmp.ne.s32.totalorder %s101, %s115
      %p117 = scmp.eq.s32.totalorder %s28, 0
      %p118 = por %p116, %p117
      %s120 = sadd.s32 %s119, 1
      %p123 = scmp.eq.s32.totalorder %s22, 1
      %p124 = scmp.ne.s32.totalorder %s119, %s121
      %p125 = scmp.eq.s32.totalorder %s22, 0
      %p126 = por %p124, %p125
      %p127 = scmp.ne.s32.totalorder %s119, %s121
      %p128 = scmp.eq.s32.totalorder %s27, 1
      %p129 = por %p127, %p128
      %p130 = scmp.ne.s32.totalorder %s121, %s122
      %p131 = scmp.eq.s32.totalorder %s27, 0
      %p132 = por %p130, %p131
      %p133 = scmp.ne.s32.totalorder %s121, %s122
      %p134 = scmp.eq.s32.totalorder %s28, 1
      %p135 = por %p133, %p134
      %p137 = scmp.ne.s32.totalorder %s122, %s136
      %p138 = scmp.eq.s32.totalorder %s28, 0
      %p139 = por %p137, %p138
      %s141 = sadd.s32 %s140, 1
      %p144 = scmp.eq.s32.totalorder %s22, 1
      %p145 = scmp.ne.s32.totalorder %s140, %s142
      %p146 = scmp.eq.s32.totalorder %s22, 0
      %p147 = por %p145, %p146
      %p148 = scmp.ne.s32.totalorder %s140, %s142
      %p149 = scmp.eq.s32.totalorder %s27, 1
      %p150 = por %p148, %p149
      %p151 = scmp.ne.s32.totalorder %s142, %s143
      %p152 = scmp.eq.s32.totalorder %s27, 0
      %p153 = por %p151, %p152
      %p154 = scmp.ne.s32.totalorder %s142, %s143
      %p155 = scmp.eq.s32.totalorder %s28, 1
      %p156 = por %p154, %p155
      %p158 = scmp.ne.s32.totalorder %s143, %s157
      %p159 = scmp.eq.s32.totalorder %s28, 0
      %p160 = por %p158, %p159
      %s162 = sadd.s32 %s161, 1
      %p165 = scmp.eq.s32.totalorder %s22, 1
      %p166 = scmp.ne.s32.totalorder %s161, %s163
      %p167 = scmp.eq.s32.totalorder %s22, 0
      %p168 = por %p166, %p167
      %p169 = scmp.ne.s32.totalorder %s161, %s163
      %p170 = scmp.eq.s32.totalorder %s27, 1
      %p171 = por %p169, %p170
      %p172 = scmp.ne.s32.totalorder %s163, %s164
      %p173 = scmp.eq.s32.totalorder %s27, 0
      %p174 = por %p172, %p173
      %p175 = scmp.ne.s32.totalorder %s163, %s164
      %p176 = scmp.eq.s32.totalorder %s28, 1
      %p177 = por %p175, %p176
      %p179 = scmp.ne.s32.totalorder %s164, %s178
      %p180 = scmp.eq.s32.totalorder %s28, 0
      %p181 = por %p179, %p180
      %s183 = sadd.s32 %s182, 1
      %p186 = scmp.eq.s32.totalorder %s22, 1
      %p187 = scmp.ne.s32.totalorder %s182, %s184
      %p188 = scmp.eq.s32.totalorder %s22, 0
      %p189 = por %p187, %p188
      %p190 = scmp.ne.s32.totalorder %s182, %s184
      %p191 = scmp.eq.s32.totalorder %s27, 1
      %p192 = por %p190, %p191
      %p193 = scmp.ne.s32.totalorder %s184, %s185
      %p194 = scmp.eq.s32.totalorder %s27, 0
      %p195 = por %p193, %p194
      %p196 = scmp.ne.s32.totalorder %s184, %s185
      %p197 = scmp.eq.s32.totalorder %s28, 1
      %p198 = por %p196, %p197
      %p200 = scmp.ne.s32.totalorder %s185, %s199
      %p201 = scmp.eq.s32.totalorder %s28, 0
      %p202 = por %p200, %p201
      %s204 = sadd.s32 %s203, 1
      %p207 = scmp.eq.s32.totalorder %s22, 1
      %p208 = scmp.ne.s32.totalorder %s203, %s205
      %p209 = scmp.eq.s32.totalorder %s22, 0
      %p210 = por %p208, %p209
      %p211 = scmp.ne.s32.totalorder %s203, %s205
      %p212 = scmp.eq.s32.totalorder %s27, 1
      %p213 = por %p211, %p212
      %p214 = scmp.ne.s32.totalorder %s205, %s206
      %p215 = scmp.eq.s32.totalorder %s27, 0
      %p216 = por %p214, %p215
      %p217 = scmp.ne.s32.totalorder %s205, %s206
      %p218 = scmp.eq.s32.totalorder %s28, 1
      %p219 = por %p217, %p218
      %p221 = scmp.ne.s32.totalorder %s206, %s220
      %p222 = scmp.eq.s32.totalorder %s28, 0
      %p223 = por %p221, %p222
      %s225 = sadd.s32 %s224, 1
      %p228 = scmp.eq.s32.totalorder %s22, 1
      %p229 = scmp.ne.s32.totalorder %s224, %s226
      %p230 = scmp.eq.s32.totalorder %s22, 0
      %p231 = por %p229, %p230
      %p232 = scmp.ne.s32.totalorder %s224, %s226
      %p233 = scmp.eq.s32.totalorder %s27, 1
      %p234 = por %p232, %p233
      %p235 = scmp.ne.s32.totalorder %s226, %s227
      %p236 = scmp.eq.s32.totalorder %s27, 0
      %p237 = por %p235, %p236
      %p238 = scmp.ne.s32.totalorder %s226, %s227
      %p239 = scmp.eq.s32.totalorder %s28, 1
      %p240 = por %p238, %p239
      %p242 = scmp.ne.s32.totalorder %s227, %s241
      %p243 = scmp.eq.s32.totalorder %s28, 0
      %p244 = por %p242, %p243
      %s246 = sadd.s32 %s245, 1
      %p249 = scmp.eq.s32.totalorder %s22, 1
      %p250 = scmp.ne.s32.totalorder %s245, %s247
      %p251 = scmp.eq.s32.totalorder %s22, 0
      %p252 = por %p250, %p251
      %p253 = scmp.ne.s32.totalorder %s245, %s247
      %p254 = scmp.eq.s32.totalorder %s27, 1
      %p255 = por %p253, %p254
      %p256 = scmp.ne.s32.totalorder %s247, %s248
      %p257 = scmp.eq.s32.totalorder %s27, 0
      %p258 = por %p256, %p257
      %p259 = scmp.ne.s32.totalorder %s247, %s248
      %p260 = scmp.eq.s32.totalorder %s28, 1
      %p261 = por %p259, %p260
      %p263 = scmp.ne.s32.totalorder %s248, %s262
      %p264 = scmp.eq.s32.totalorder %s28, 0
      %p265 = por %p263, %p264
      %s267 = sadd.s32 %s266, 1
      %p270 = scmp.eq.s32.totalorder %s22, 1
      %p271 = scmp.ne.s32.totalorder %s266, %s268
      %p272 = scmp.eq.s32.totalorder %s22, 0
      %p273 = por %p271, %p272
      %p274 = scmp.ne.s32.totalorder %s266, %s268
      %p275 = scmp.eq.s32.totalorder %s27, 1
      %p276 = por %p274, %p275
      %p277 = scmp.ne.s32.totalorder %s268, %s269
      %p278 = scmp.eq.s32.totalorder %s27, 0
      %p279 = por %p277, %p278
      %p280 = scmp.ne.s32.totalorder %s268, %s269
      %p281 = scmp.eq.s32.totalorder %s28, 1
      %p282 = por %p280, %p281
      %p284 = scmp.ne.s32.totalorder %s269, %s283
      %p285 = scmp.eq.s32.totalorder %s28, 0
      %p286 = por %p284, %p285
      %s288 = sadd.s32 %s287, 1
      %p291 = scmp.eq.s32.totalorder %s22, 1
      %p292 = scmp.ne.s32.totalorder %s287, %s289
      %p293 = scmp.eq.s32.totalorder %s22, 0
      %p294 = por %p292, %p293
      %p295 = scmp.ne.s32.totalorder %s287, %s289
      %p296 = scmp.eq.s32.totalorder %s27, 1
      %p297 = por %p295, %p296
      %p298 = scmp.ne.s32.totalorder %s289, %s290
      %p299 = scmp.eq.s32.totalorder %s27, 0
      %p300 = por %p298, %p299
      %p301 = scmp.ne.s32.totalorder %s289, %s290
      %p302 = scmp.eq.s32.totalorder %s28, 1
      %p303 = por %p301, %p302
      %p305 = scmp.ne.s32.totalorder %s290, %s304
      %p306 = scmp.eq.s32.totalorder %s28, 0
      %p307 = por %p305, %p306
      %s308 = ssub.s32 %s22, %s29
      %p309 = scmp.eq.s32.totalorder %s308, 0
      %s311 = sadd.s32 %s310, 1
      %s312 = scalar_select %p309, %s310, %s311
      %p315 = pneg %p309
      %p316 = scmp.eq.s32.totalorder %s22, 1
      %p317 = por %p315, %p316
      %p318 = scmp.ne.s32.totalorder %s310, %s313
      %p319 = scmp.eq.s32.totalorder %s22, 0
      %p320 = por %p318, %p319
      %p321 = scmp.ne.s32.totalorder %s310, %s313
      %p322 = scmp.eq.s32.totalorder %s27, 1
      %p323 = por %p321, %p322
      %p324 = scmp.ne.s32.totalorder %s313, %s314
      %p325 = scmp.eq.s32.totalorder %s27, 0
      %p326 = por %p324, %p325
      %p327 = scmp.ne.s32.totalorder %s313, %s314
      %p328 = scmp.eq.s32.totalorder %s28, 1
      %p329 = por %p327, %p328
      %p331 = scmp.ne.s32.totalorder %s314, %s330
      %p332 = scmp.eq.s32.totalorder %s28, 0
      %p333 = por %p331, %p332
      %p334 = scmp.le.s32.totalorder 1, %s22
      %p335 = scmp.lt.s32.totalorder %s22, 3
      %p336 = pnand %p334, %p335
      %p337 = pneg %p336
      // Predicated region
      $region9: #{bottleneck_forward.1} parent=5 // pred_check
        _
      $region10: #{bottleneck_forward.1} parent=5 // pred_check_branch
        %339 = sbr.rel (%p336) target = $region12
      $region11: #{bottleneck_forward.1} parent=5 // pred_region
        %s340 = ssub.s32 %s22, 1
        // Predicated region
        $region13: #{bottleneck_forward.1} parent=11 // pred_check
          %p341 = pneg %p69
        $region14: #{bottleneck_forward.1} parent=11 // pred_check_branch
          %343 = sbr.rel (%p341) target = $region16
        $region15: #{bottleneck_forward.1} parent=11 // pred_region
          _
        $region16: #{bottleneck_forward.1} parent=11 // pred_fallthru
          _
        // Predicated region
        $region17: #{bottleneck_forward.1} parent=11 // pred_check
          %p344 = pneg %p90
        $region18: #{bottleneck_forward.1} parent=11 // pred_check_branch
          %346 = sbr.rel (%p344) target = $region20
        $region19: #{bottleneck_forward.1} parent=11 // pred_region
          _
        $region20: #{bottleneck_forward.1} parent=11 // pred_fallthru
          _
        // Predicated region
        $region21: #{bottleneck_forward.1} parent=11 // pred_check
          %p347 = pneg %p111
        $region22: #{bottleneck_forward.1} parent=11 // pred_check_branch
          %349 = sbr.rel (%p347) target = $region24
        $region23: #{bottleneck_forward.1} parent=11 // pred_region
          _
        $region24: #{bottleneck_forward.1} parent=11 // pred_fallthru
          _
        // Predicated region
        $region25: #{bottleneck_forward.1} parent=11 // pred_check
          %p350 = pneg %p132
        $region26: #{bottleneck_forward.1} parent=11 // pred_check_branch
          %352 = sbr.rel (%p350) target = $region28
        $region27: #{bottleneck_forward.1} parent=11 // pred_region
          _
        $region28: #{bottleneck_forward.1} parent=11 // pred_fallthru
          _
        // Predicated region
        $region29: #{bottleneck_forward.1} parent=11 // pred_check
          %p353 = pneg %p153
        $region30: #{bottleneck_forward.1} parent=11 // pred_check_branch
          %355 = sbr.rel (%p353) target = $region32
        $region31: #{bottleneck_forward.1} parent=11 // pred_region
          _
        $region32: #{bottleneck_forward.1} parent=11 // pred_fallthru
          _
        // Predicated region
        $region33: #{bottleneck_forward.1} parent=11 // pred_check
          %p356 = pneg %p174
        $region34: #{bottleneck_forward.1} parent=11 // pred_check_branch
          %358 = sbr.rel (%p356) target = $region36
        $region35: #{bottleneck_forward.1} parent=11 // pred_region
          _
        $region36: #{bottleneck_forward.1} parent=11 // pred_fallthru
          _
        // Predicated region
        $region37: #{bottleneck_forward.1} parent=11 // pred_check
          %p359 = pneg %p195
        $region38: #{bottleneck_forward.1} parent=11 // pred_check_branch
          %361 = sbr.rel (%p359) target = $region40
        $region39: #{bottleneck_forward.1} parent=11 // pred_region
          _
        $region40: #{bottleneck_forward.1} parent=11 // pred_fallthru
          _
        // Predicated region
        $region41: #{bottleneck_forward.1} parent=11 // pred_check
          %p362 = pneg %p216
        $region42: #{bottleneck_forward.1} parent=11 // pred_check_branch
          %364 = sbr.rel (%p362) target = $region44
        $region43: #{bottleneck_forward.1} parent=11 // pred_region
          _
        $region44: #{bottleneck_forward.1} parent=11 // pred_fallthru
          _
        // Predicated region
        $region45: #{bottleneck_forward.1} parent=11 // pred_check
          %p365 = pneg %p237
        $region46: #{bottleneck_forward.1} parent=11 // pred_check_branch
          %367 = sbr.rel (%p365) target = $region48
        $region47: #{bottleneck_forward.1} parent=11 // pred_region
          _
        $region48: #{bottleneck_forward.1} parent=11 // pred_fallthru
          _
        // Predicated region
        $region49: #{bottleneck_forward.1} parent=11 // pred_check
          %p368 = pneg %p258
        $region50: #{bottleneck_forward.1} parent=11 // pred_check_branch
          %370 = sbr.rel (%p368) target = $region52
        $region51: #{bottleneck_forward.1} parent=11 // pred_region
          _
        $region52: #{bottleneck_forward.1} parent=11 // pred_fallthru
          _
        // Predicated region
        $region53: #{bottleneck_forward.1} parent=11 // pred_check
          %p371 = pneg %p279
        $region54: #{bottleneck_forward.1} parent=11 // pred_check_branch
          %373 = sbr.rel (%p371) target = $region56
        $region55: #{bottleneck_forward.1} parent=11 // pred_region
          _
        $region56: #{bottleneck_forward.1} parent=11 // pred_fallthru
          _
        // Predicated region
        $region57: #{bottleneck_forward.1} parent=11 // pred_check
          %p374 = pneg %p300
        $region58: #{bottleneck_forward.1} parent=11 // pred_check_branch
          %376 = sbr.rel (%p374) target = $region60
        $region59: #{bottleneck_forward.1} parent=11 // pred_region
          _
        $region60: #{bottleneck_forward.1} parent=11 // pred_fallthru
          _
      $region12: #{bottleneck_forward.1} parent=5 // pred_fallthru
        _
      %p377 = scmp.lt.s32.totalorder %s22, 2
      // Predicated region
      $region61: #{bottleneck_forward.1} parent=5 // pred_check
        %p378 = pneg %p377
      $region62: #{bottleneck_forward.1} parent=5 // pred_check_branch
        %380 = sbr.rel (%p378) target = $region64
      $region63: #{bottleneck_forward.1} parent=5 // pred_region
        // Predicated region
        $region65: #{bottleneck_forward.1} parent=63 // pred_check
          %p381 = pneg %p42
        $region66: #{bottleneck_forward.1} parent=63 // pred_check_branch
          %383 = sbr.rel (%p381) target = $region68
        $region67: #{bottleneck_forward.1} parent=63 // pred_region
          %p384 = scmp.lt.s32.totalorder %s22, 1
          %s385 = scalar_select %p384, %s22, 1
          %s386 = smul.addr %s385, 32
          %s387 = smul.addr %s386, 8
          %s388 = scalar_lea.vmem %s0, %s387
        $region68: #{bottleneck_forward.1} parent=63 // pred_fallthru
          _
      $region64: #{bottleneck_forward.1} parent=5 // pred_fallthru
        _
      %p389 = scmp.le.s32.totalorder 1, %s22
      %p390 = scmp.lt.s32.totalorder %s22, 3
      %p391 = pnand %p389, %p390
      %p392 = pneg %p391
      // Predicated region
      $region69: #{bottleneck_forward.1} parent=5 // pred_check
        _
      $region70: #{bottleneck_forward.1} parent=5 // pred_check_branch
        %394 = sbr.rel (%p391) target = $region72
      $region71: #{bottleneck_forward.1} parent=5 // pred_region
        %s395 = ssub.s32 %s22, 1
        %p396 = scmp.lt.s32.totalorder %s27, 1
        %s397 = scalar_select %p396, %s27, 1
        %s398 = smul.addr %s397, 32
        %s399 = smul.addr %s398, 8
        %s400 = scalar_lea.vmem %s0, %s399
        %p401 = pneg %p48
        %p402 = pneg %p45
        %p403 = pneg %p69
        %p404 = pneg %p66
        %p405 = pneg %p90
        %p406 = pneg %p87
        %p407 = pneg %p111
        %p408 = pneg %p108
        %p409 = pneg %p132
        %p410 = pneg %p129
        %p411 = pneg %p153
        %p412 = pneg %p150
        %p413 = pneg %p174
        %p414 = pneg %p171
        %p415 = pneg %p195
        %p416 = pneg %p192
        %p417 = pneg %p216
        %p418 = pneg %p213
        %p419 = pneg %p237
        %p420 = pneg %p234
        %p421 = pneg %p258
        %p422 = pneg %p255
        %p423 = pneg %p279
        %p424 = pneg %p276
        %p425 = pneg %p300
        %p426 = pneg %p297
        %p427 = pneg %p326
        %p428 = pneg %p323
        %s429 = sand.u32 %s313, 1
        %s430 = scalar_lea.sflag [#allocation6], %s429
        %s431 = sand.u32 %s313, 1
        %s432 = smul.addr %s431, 64
        %s433 = scalar_lea.vmem [#allocation5], %s432
        %p434 = scmp.lt.s32.totalorder %s27, 1
        %s435 = scalar_select %p434, %s27, 1
        %s436 = smul.addr %s435, 32
        %s437 = smul.addr %s436, 8
        %s438 = scalar_lea.vmem %s0, %s437
        %v440 = vld [vmem:[%s438] sm:$0xff]
        %v441 = vld [vmem:[%s438 + $0x8] sm:$0xff]
        %v442 = vld [vmem:[%s438 + $0x10] sm:$0xff]
        %v443 = vld [vmem:[%s438 + $0x18] sm:$0xff]
        %v444 = vld [vmem:[%s438 + $0x20] sm:$0xff]
        %v445 = vld [vmem:[%s438 + $0x28] sm:$0xff]
        %v446 = vld [vmem:[%s438 + $0x30] sm:$0xff]
        %v447 = vld [vmem:[%s438 + $0x38] sm:$0xff]
        %v448 = vld [vmem:[%s438 + $0x40] sm:$0xff]
        %v449 = vld [vmem:[%s438 + $0x48] sm:$0xff]
        %v450 = vld [vmem:[%s438 + $0x50] sm:$0xff]
        %v451 = vld [vmem:[%s438 + $0x58] sm:$0xff]
        %v452 = vld [vmem:[%s438 + $0x60] sm:$0xff]
        %v453 = vld [vmem:[%s438 + $0x68] sm:$0xff]
        %v454 = vld [vmem:[%s438 + $0x70] sm:$0xff]
        %v455 = vld [vmem:[%s438 + $0x78] sm:$0xff]
        %v456 = vld [vmem:[%s438 + $0x80] sm:$0xff]
        %v457 = vld [vmem:[%s438 + $0x88] sm:$0xff]
        %v458 = vld [vmem:[%s438 + $0x90] sm:$0xff]
        %v459 = vld [vmem:[%s438 + $0x98] sm:$0xff]
        %v460 = vld [vmem:[%s438 + $0xa0] sm:$0xff]
        %v461 = vld [vmem:[%s438 + $0xa8] sm:$0xff]
        %v462 = vld [vmem:[%s438 + $0xb0] sm:$0xff]
        %v463 = vld [vmem:[%s438 + $0xb8] sm:$0xff]
        %v464 = vld [vmem:[%s438 + $0xc0] sm:$0xff]
        %v465 = vld [vmem:[%s438 + $0xc8] sm:$0xff]
        %v466 = vld [vmem:[%s438 + $0xd0] sm:$0xff]
        %v467 = vld [vmem:[%s438 + $0xd8] sm:$0xff]
        %v468 = vld [vmem:[%s438 + $0xe0] sm:$0xff]
        %v469 = vld [vmem:[%s438 + $0xe8] sm:$0xff]
        %v470 = vld [vmem:[%s438 + $0xf0] sm:$0xff]
        %v471 = vld [vmem:[%s438 + $0xf8] sm:$0xff]
        %v472 = vld [vmem:[%s1] sm:$0xf]
        %v473 = vpack.c.bf16 %v441, %v440
        %v474 = vpack.c.bf16 %v443, %v442
        %v475 = vpack.c.bf16 %v445, %v444
        %v476 = vpack.c.bf16 %v447, %v446
        %v477 = vpack.c.bf16 %v449, %v448
        %v478 = vpack.c.bf16 %v451, %v450
        %v479 = vpack.c.bf16 %v453, %v452
        %v480 = vpack.c.bf16 %v455, %v454
        %v481 = vpack.c.bf16 %v457, %v456
        %v482 = vpack.c.bf16 %v459, %v458
        %v483 = vpack.c.bf16 %v461, %v460
        %v484 = vpack.c.bf16 %v463, %v462
        %v485 = vpack.c.bf16 %v465, %v464
        %v486 = vpack.c.bf16 %v467, %v466
        %v487 = vpack.c.bf16 %v469, %v468
        %v488 = vpack.c.bf16 %v471, %v470
        %v489 = vpack.c.bf16 %v472, %v472
        %vm490 = vcmask 31744
        %v492 = vsel %vm490, %v473, 0
        %v495 = vsel %vm490, %v474, 0
        %v498 = vsel %vm490, %v475, 0
        %v501 = vsel %vm490, %v476, 0
        %v504 = vsel %vm490, %v477, 0
        %v507 = vsel %vm490, %v478, 0
        %v510 = vsel %vm490, %v479, 0
        %v513 = vsel %vm490, %v480, 0
        %v516 = vsel %vm490, %v481, 0
        %v519 = vsel %vm490, %v482, 0
        %v522 = vsel %vm490, %v483, 0
        %v525 = vsel %vm490, %v484, 0
        %v528 = vsel %vm490, %v485, 0
        %v531 = vsel %vm490, %v486, 0
        %v534 = vsel %vm490, %v487, 0
        %v537 = vsel %vm490, %v488, 0
        %vm539 = vcmask 1041408
        %v541 = vsel %vm539, %v489, 0
        %543 = vmatpush.bf16.msra.mxu0 0
        %544 = vmatpush.bf16.msra.mxu0 0
        %545 = vmatpush.bf16.msra.mxu0 0
        %546 = vmatpush.bf16.msra.mxu0 0
        %547 = vmatpush.bf16.msra.mxu0 0
        %548 = vmatpush.bf16.msra.mxu0 0
        %549 = vmatpush.bf16.msra.mxu0 0
        %550 = vmatpush.bf16.msra.mxu0 %v541
        %551 = vmatmul.bf16.gmra.mxu0 %v492
        %v552 = vpop.f32.mrf.mxu0
        %v553 = vadd.f32 0.0, %v552
        %v554 = vpop.f32.mrf.mxu0
        %v555 = vadd.f32 0.0, %v554
        %556 = vmatmul.bf16.gmra.mxu0 %v495
        %v557 = vpop.f32.mrf.mxu0
        %v558 = vadd.f32 0.0, %v557
        %v559 = vpop.f32.mrf.mxu0
        %v560 = vadd.f32 0.0, %v559
        %561 = vmatmul.bf16.gmra.mxu0 %v498
        %v562 = vpop.f32.mrf.mxu0
        %v563 = vadd.f32 0.0, %v562
        %v564 = vpop.f32.mrf.mxu0
        %v565 = vadd.f32 0.0, %v564
        %566 = vmatmul.bf16.gmra.mxu0 %v501
        %v567 = vpop.f32.mrf.mxu0
        %v568 = vadd.f32 0.0, %v567
        %v569 = vpop.f32.mrf.mxu0
        %v570 = vadd.f32 0.0, %v569
        %571 = vmatmul.bf16.gmra.mxu0 %v504
        %v572 = vpop.f32.mrf.mxu0
        %v573 = vadd.f32 0.0, %v572
        %v574 = vpop.f32.mrf.mxu0
        %v575 = vadd.f32 0.0, %v574
        %576 = vmatmul.bf16.gmra.mxu0 %v507
        %v577 = vpop.f32.mrf.mxu0
        %v578 = vadd.f32 0.0, %v577
        %v579 = vpop.f32.mrf.mxu0
        %v580 = vadd.f32 0.0, %v579
        %581 = vmatmul.bf16.gmra.mxu0 %v510
        %v582 = vpop.f32.mrf.mxu0
        %v583 = vadd.f32 0.0, %v582
        %v584 = vpop.f32.mrf.mxu0
        %v585 = vadd.f32 0.0, %v584
        %586 = vmatmul.bf16.gmra.mxu0 %v513
        %v587 = vpop.f32.mrf.mxu0
        %v588 = vadd.f32 0.0, %v587
        %v589 = vpop.f32.mrf.mxu0
        %v590 = vadd.f32 0.0, %v589
        %591 = vmatmul.bf16.gmra.mxu0 %v516
        %v592 = vpop.f32.mrf.mxu0
        %v593 = vadd.f32 0.0, %v592
        %v594 = vpop.f32.mrf.mxu0
        %v595 = vadd.f32 0.0, %v594
        %596 = vmatmul.bf16.gmra.mxu0 %v519
        %v597 = vpop.f32.mrf.mxu0
        %v598 = vadd.f32 0.0, %v597
        %v599 = vpop.f32.mrf.mxu0
        %v600 = vadd.f32 0.0, %v599
        %601 = vmatmul.bf16.gmra.mxu0 %v522
        %v602 = vpop.f32.mrf.mxu0
        %v603 = vadd.f32 0.0, %v602
        %v604 = vpop.f32.mrf.mxu0
        %v605 = vadd.f32 0.0, %v604
        %606 = vmatmul.bf16.gmra.mxu0 %v525
        %v607 = vpop.f32.mrf.mxu0
        %v608 = vadd.f32 0.0, %v607
        %v609 = vpop.f32.mrf.mxu0
        %v610 = vadd.f32 0.0, %v609
        %611 = vmatmul.bf16.gmra.mxu0 %v528
        %v612 = vpop.f32.mrf.mxu0
        %v613 = vadd.f32 0.0, %v612
        %v614 = vpop.f32.mrf.mxu0
        %v615 = vadd.f32 0.0, %v614
        %616 = vmatmul.bf16.gmra.mxu0 %v531
        %v617 = vpop.f32.mrf.mxu0
        %v618 = vadd.f32 0.0, %v617
        %v619 = vpop.f32.mrf.mxu0
        %v620 = vadd.f32 0.0, %v619
        %621 = vmatmul.bf16.gmra.mxu0 %v534
        %v622 = vpop.f32.mrf.mxu0
        %v623 = vadd.f32 0.0, %v622
        %v624 = vpop.f32.mrf.mxu0
        %v625 = vadd.f32 0.0, %v624
        %626 = vmatmul.bf16.gmra.mxu0 %v537
        %v627 = vpop.f32.mrf.mxu0
        %v628 = vadd.f32 0.0, %v627
        %v629 = vpop.f32.mrf.mxu0
        %v630 = vadd.f32 0.0, %v629
        %631 = vdwg.mxu0
        %v632 = vld [vmem:[%s2] sm:$0x1]
        %v633 = vld [vmem:[%s3] sm:$0x1]
        %vm634 = vcmask 64512
        %v635 = vsel %vm634, %v553, 0.0
        %v636 = vsel %vm634, %v555, 0.0
        %v637 = vadd.f32 %v635, %v636
        %v638 = vsel %vm634, %v558, 0.0
        %v639 = vadd.f32 %v637, %v638
        %v640 = vsel %vm634, %v560, 0.0
        %v641 = vadd.f32 %v639, %v640
        %v642 = vsel %vm634, %v563, 0.0
        %v643 = vadd.f32 %v641, %v642
        %v644 = vsel %vm634, %v565, 0.0
        %v645 = vadd.f32 %v643, %v644
        %v646 = vsel %vm634, %v568, 0.0
        %v647 = vadd.f32 %v645, %v646
        %v648 = vsel %vm634, %v570, 0.0
        %v649 = vadd.f32 %v647, %v648
        %v650 = vsel %vm634, %v573, 0.0
        %v651 = vadd.f32 %v649, %v650
        %v652 = vsel %vm634, %v575, 0.0
        %v653 = vadd.f32 %v651, %v652
        %v654 = vsel %vm634, %v578, 0.0
        %v655 = vadd.f32 %v653, %v654
        %v656 = vsel %vm634, %v580, 0.0
        %v657 = vadd.f32 %v655, %v656
        %v658 = vsel %vm634, %v583, 0.0
        %v659 = vadd.f32 %v657, %v658
        %v660 = vsel %vm634, %v585, 0.0
        %v661 = vadd.f32 %v659, %v660
        %v662 = vsel %vm634, %v588, 0.0
        %v663 = vadd.f32 %v661, %v662
        %v664 = vsel %vm634, %v590, 0.0
        %v665 = vadd.f32 %v663, %v664
        %v666 = vsel %vm634, %v593, 0.0
        %v667 = vadd.f32 %v665, %v666
        %v668 = vsel %vm634, %v595, 0.0
        %v669 = vadd.f32 %v667, %v668
        %v670 = vsel %vm634, %v598, 0.0
        %v671 = vadd.f32 %v669, %v670
        %v672 = vsel %vm634, %v600, 0.0
        %v673 = vadd.f32 %v671, %v672
        %v674 = vsel %vm634, %v603, 0.0
        %v675 = vadd.f32 %v673, %v674
        %v676 = vsel %vm634, %v605, 0.0
        %v677 = vadd.f32 %v675, %v676
        %v678 = vsel %vm634, %v608, 0.0
        %v679 = vadd.f32 %v677, %v678
        %v680 = vsel %vm634, %v610, 0.0
        %v681 = vadd.f32 %v679, %v680
        %v682 = vsel %vm634, %v613, 0.0
        %v683 = vadd.f32 %v681, %v682
        %v684 = vsel %vm634, %v615, 0.0
        %v685 = vadd.f32 %v683, %v684
        %v686 = vsel %vm634, %v618, 0.0
        %v687 = vadd.f32 %v685, %v686
        %v688 = vsel %vm634, %v620, 0.0
        %v689 = vadd.f32 %v687, %v688
        %v690 = vsel %vm634, %v623, 0.0
        %v691 = vadd.f32 %v689, %v690
        %v692 = vsel %vm634, %v625, 0.0
        %v693 = vadd.f32 %v691, %v692
        %v694 = vsel %vm634, %v628, 0.0
        %v695 = vadd.f32 %v693, %v694
        %v696 = vsel %vm634, %v630, 0.0
        %v697 = vadd.f32 %v695, %v696
        %v698 = vrot.slane %v697, 4
        %v699 = vadd.f32 %v697, %v698
        %v700 = vrot.slane %v699, 2
        %v701 = vadd.f32 %v699, %v700
        %v702 = vrot.slane %v701, 1
        %v703 = vadd.f32 %v701, %v702
        %v704 = vmul.f32 %v703, 0.00390625
        %v705 = vmul.f32 %v553, %v553
        %v706 = vmul.f32 %v555, %v555
        %v707 = vmul.f32 %v558, %v558
        %v708 = vmul.f32 %v560, %v560
        %v709 = vmul.f32 %v563, %v563
        %v710 = vmul.f32 %v565, %v565
        %v711 = vmul.f32 %v568, %v568
        %v712 = vmul.f32 %v570, %v570
        %v713 = vmul.f32 %v573, %v573
        %v714 = vmul.f32 %v575, %v575
        %v715 = vmul.f32 %v578, %v578
        %v716 = vmul.f32 %v580, %v580
        %v717 = vmul.f32 %v583, %v583
        %v718 = vmul.f32 %v585, %v585
        %v719 = vmul.f32 %v588, %v588
        %v720 = vmul.f32 %v590, %v590
        %v721 = vmul.f32 %v593, %v593
        %v722 = vmul.f32 %v595, %v595
        %v723 = vmul.f32 %v598, %v598
        %v724 = vmul.f32 %v600, %v600
        %v725 = vmul.f32 %v603, %v603
        %v726 = vmul.f32 %v605, %v605
        %v727 = vmul.f32 %v608, %v608
        %v728 = vmul.f32 %v610, %v610
        %v729 = vmul.f32 %v613, %v613
        %v730 = vmul.f32 %v615, %v615
        %v731 = vmul.f32 %v618, %v618
        %v732 = vmul.f32 %v620, %v620
        %v733 = vmul.f32 %v623, %v623
        %v734 = vmul.f32 %v625, %v625
        %v735 = vmul.f32 %v628, %v628
        %v736 = vmul.f32 %v630, %v630
        %v737 = vsel %vm634, %v705, 0.0
        %v738 = vsel %vm634, %v706, 0.0
        %v739 = vadd.f32 %v737, %v738
        %v740 = vsel %vm634, %v707, 0.0
        %v741 = vadd.f32 %v739, %v740
        %v742 = vsel %vm634, %v708, 0.0
        %v743 = vadd.f32 %v741, %v742
        %v744 = vsel %vm634, %v709, 0.0
        %v745 = vadd.f32 %v743, %v744
        %v746 = vsel %vm634, %v710, 0.0
        %v747 = vadd.f32 %v745, %v746
        %v748 = vsel %vm634, %v711, 0.0
        %v749 = vadd.f32 %v747, %v748
        %v750 = vsel %vm634, %v712, 0.0
        %v751 = vadd.f32 %v749, %v750
        %v752 = vsel %vm634, %v713, 0.0
        %v753 = vadd.f32 %v751, %v752
        %v754 = vsel %vm634, %v714, 0.0
        %v755 = vadd.f32 %v753, %v754
        %v756 = vsel %vm634, %v715, 0.0
        %v757 = vadd.f32 %v755, %v756
        %v758 = vsel %vm634, %v716, 0.0
        %v759 = vadd.f32 %v757, %v758
        %v760 = vsel %vm634, %v717, 0.0
        %v761 = vadd.f32 %v759, %v760
        %v762 = vsel %vm634, %v718, 0.0
        %v763 = vadd.f32 %v761, %v762
        %v764 = vsel %vm634, %v719, 0.0
        %v765 = vadd.f32 %v763, %v764
        %v766 = vsel %vm634, %v720, 0.0
        %v767 = vadd.f32 %v765, %v766
        %v768 = vsel %vm634, %v721, 0.0
        %v769 = vadd.f32 %v767, %v768
        %v770 = vsel %vm634, %v722, 0.0
        %v771 = vadd.f32 %v769, %v770
        %v772 = vsel %vm634, %v723, 0.0
        %v773 = vadd.f32 %v771, %v772
        %v774 = vsel %vm634, %v724, 0.0
        %v775 = vadd.f32 %v773, %v774
        %v776 = vsel %vm634, %v725, 0.0
        %v777 = vadd.f32 %v775, %v776
        %v778 = vsel %vm634, %v726, 0.0
        %v779 = vadd.f32 %v777, %v778
        %v780 = vsel %vm634, %v727, 0.0
        %v781 = vadd.f32 %v779, %v780
        %v782 = vsel %vm634, %v728, 0.0
        %v783 = vadd.f32 %v781, %v782
        %v784 = vsel %vm634, %v729, 0.0
        %v785 = vadd.f32 %v783, %v784
        %v786 = vsel %vm634, %v730, 0.0
        %v787 = vadd.f32 %v785, %v786
        %v788 = vsel %vm634, %v731, 0.0
        %v789 = vadd.f32 %v787, %v788
        %v790 = vsel %vm634, %v732, 0.0
        %v791 = vadd.f32 %v789, %v790
        %v792 = vsel %vm634, %v733, 0.0
        %v793 = vadd.f32 %v791, %v792
        %v794 = vsel %vm634, %v734, 0.0
        %v795 = vadd.f32 %v793, %v794
        %v796 = vsel %vm634, %v735, 0.0
        %v797 = vadd.f32 %v795, %v796
        %v798 = vsel %vm634, %v736, 0.0
        %v799 = vadd.f32 %v797, %v798
        %v800 = vrot.slane %v799, 4
        %v801 = vadd.f32 %v799, %v800
        %v802 = vrot.slane %v801, 2
        %v803 = vadd.f32 %v801, %v802
        %v804 = vrot.slane %v803, 1
        %v805 = vadd.f32 %v803, %v804
        %v806 = vmul.f32 %v805, 0.00390625
        %v807 = vmul.f32 %v704, %v704
        %v808 = vsub.f32 %v806, %v807
        %v809 = vmax.f32 %v808, 0.0
        %v810 = vadd.f32 %v809, 1e-05
        %v811 = vrsqrt.pop %v810
        %v812 = vmul.f32 %v811, %v810
        %v813 = vmul.f32 %v812, %v811
        %v814 = vmul.f32 0.5, %v813
        %v815 = vsub.f32 1.5, %v814
        %v816 = vmul.f32 %v811, %v815
        %vm817 = vweird.f32 %v810
        %vm818 = vweird.f32 %v811
        %vm819 = vmor %vm817, %vm818
        %v820 = vsel %vm819, %v811, %v816
        %v821 = vmul.f32 %v632, %v820
        %v822 = vmul.f32 %v704, %v821
        %v823 = vsub.f32 %v633, %v822
        %v825 = vperm.slane %v821, 0
        %v827 = vmul.f32 %v553, %v825
        %v828 = vmul.f32 %v555, %v825
        %v829 = vmul.f32 %v558, %v825
        %v830 = vmul.f32 %v560, %v825
        %v831 = vmul.f32 %v563, %v825
        %v832 = vmul.f32 %v565, %v825
        %v833 = vmul.f32 %v568, %v825
        %v834 = vmul.f32 %v570, %v825
        %v835 = vmul.f32 %v573, %v825
        %v836 = vmul.f32 %v575, %v825
        %v837 = vmul.f32 %v578, %v825
        %v838 = vmul.f32 %v580, %v825
        %v839 = vmul.f32 %v583, %v825
        %v840 = vmul.f32 %v585, %v825
        %v841 = vmul.f32 %v588, %v825
        %v842 = vmul.f32 %v590, %v825
        %v843 = vmul.f32 %v593, %v825
        %v844 = vmul.f32 %v595, %v825
        %v845 = vmul.f32 %v598, %v825
        %v846 = vmul.f32 %v600, %v825
        %v847 = vmul.f32 %v603, %v825
        %v848 = vmul.f32 %v605, %v825
        %v849 = vmul.f32 %v608, %v825
        %v850 = vmul.f32 %v610, %v825
        %v851 = vmul.f32 %v613, %v825
        %v852 = vmul.f32 %v615, %v825
        %v853 = vmul.f32 %v618, %v825
        %v854 = vmul.f32 %v620, %v825
        %v855 = vmul.f32 %v623, %v825
        %v856 = vmul.f32 %v625, %v825
        %v857 = vmul.f32 %v628, %v825
        %v858 = vmul.f32 %v630, %v825
        %v860 = vperm.slane %v823, 0
        %v862 = vadd.f32 %v827, %v860
        %v863 = vadd.f32 %v828, %v860
        %v864 = vadd.f32 %v829, %v860
        %v865 = vadd.f32 %v830, %v860
        %v866 = vadd.f32 %v831, %v860
        %v867 = vadd.f32 %v832, %v860
        %v868 = vadd.f32 %v833, %v860
        %v869 = vadd.f32 %v834, %v860
        %v870 = vadd.f32 %v835, %v860
        %v871 = vadd.f32 %v836, %v860
        %v872 = vadd.f32 %v837, %v860
        %v873 = vadd.f32 %v838, %v860
        %v874 = vadd.f32 %v839, %v860
        %v875 = vadd.f32 %v840, %v860
        %v876 = vadd.f32 %v841, %v860
        %v877 = vadd.f32 %v842, %v860
        %v878 = vadd.f32 %v843, %v860
        %v879 = vadd.f32 %v844, %v860
        %v880 = vadd.f32 %v845, %v860
        %v881 = vadd.f32 %v846, %v860
        %v882 = vadd.f32 %v847, %v860
        %v883 = vadd.f32 %v848, %v860
        %v884 = vadd.f32 %v849, %v860
        %v885 = vadd.f32 %v850, %v860
        %v886 = vadd.f32 %v851, %v860
        %v887 = vadd.f32 %v852, %v860
        %v888 = vadd.f32 %v853, %v860
        %v889 = vadd.f32 %v854, %v860
        %v890 = vadd.f32 %v855, %v860
        %v891 = vadd.f32 %v856, %v860
        %v892 = vadd.f32 %v857, %v860
        %v893 = vadd.f32 %v858, %v860
        %v894 = vmax.f32 %v862, 0.0
        %v895 = vmax.f32 %v863, 0.0
        %v896 = vmax.f32 %v864, 0.0
        %v897 = vmax.f32 %v865, 0.0
        %v898 = vmax.f32 %v866, 0.0
        %v899 = vmax.f32 %v867, 0.0
        %v900 = vmax.f32 %v868, 0.0
        %v901 = vmax.f32 %v869, 0.0
        %v902 = vmax.f32 %v870, 0.0
        %v903 = vmax.f32 %v871, 0.0
        %v904 = vmax.f32 %v872, 0.0
        %v905 = vmax.f32 %v873, 0.0
        %v906 = vmax.f32 %v874, 0.0
        %v907 = vmax.f32 %v875, 0.0
        %v908 = vmax.f32 %v876, 0.0
        %v909 = vmax.f32 %v877, 0.0
        %v910 = vmax.f32 %v878, 0.0
        %v911 = vmax.f32 %v879, 0.0
        %v912 = vmax.f32 %v880, 0.0
        %v913 = vmax.f32 %v881, 0.0
        %v914 = vmax.f32 %v882, 0.0
        %v915 = vmax.f32 %v883, 0.0
        %v916 = vmax.f32 %v884, 0.0
        %v917 = vmax.f32 %v885, 0.0
        %v918 = vmax.f32 %v886, 0.0
        %v919 = vmax.f32 %v887, 0.0
        %v920 = vmax.f32 %v888, 0.0
        %v921 = vmax.f32 %v889, 0.0
        %v922 = vmax.f32 %v890, 0.0
        %v923 = vmax.f32 %v891, 0.0
        %v924 = vmax.f32 %v892, 0.0
        %v925 = vmax.f32 %v893, 0.0
        %926 = vst.msk [vmem:[#allocation2] sm:$0xff] %vm634, 0.0
        %927 = vst.msk [vmem:[#allocation2 + $0x8] sm:$0xff] %vm634, 0.0
        %vm928 = vcmask 58368
        %929 = vst.msk [vmem:[#allocation2 + $0x10] sm:$0x3] %vm928, 0.0
        %930 = vst.msk [vmem:[#allocation2 + $0x18] sm:$0xff] %vm634, 0.0
        %931 = vst.msk [vmem:[#allocation2 + $0x20] sm:$0xff] %vm634, 0.0
        %932 = vst.msk [vmem:[#allocation2 + $0x28] sm:$0x3] %vm928, 0.0
        %933 = vst.msk [vmem:[#allocation2 + $0x30] sm:$0xff] %vm634, 0.0
        %934 = vst.msk [vmem:[#allocation2 + $0x38] sm:$0xff] %vm634, 0.0
        %935 = vst.msk [vmem:[#allocation2 + $0x40] sm:$0x3] %vm928, 0.0
        %936 = vst.msk [vmem:[#allocation2 + $0x48] sm:$0xff] %vm634, 0.0
        %937 = vst.msk [vmem:[#allocation2 + $0x50] sm:$0xff] %vm634, 0.0
        %938 = vst.msk [vmem:[#allocation2 + $0x58] sm:$0x3] %vm928, 0.0
        %939 = vst.msk [vmem:[#allocation2 + $0x60] sm:$0xff] %vm634, 0.0
        %940 = vst.msk [vmem:[#allocation2 + $0x68] sm:$0xff] %vm634, 0.0
        %941 = vst.msk [vmem:[#allocation2 + $0x70] sm:$0x3] %vm928, 0.0
        %942 = vst.msk [vmem:[#allocation2 + $0x78] sm:$0xff] %vm634, 0.0
        %943 = vst.msk [vmem:[#allocation2 + $0x80] sm:$0xff] %vm634, 0.0
        %944 = vst.msk [vmem:[#allocation2 + $0x88] sm:$0x3] %vm928, 0.0
        %945 = vst.msk [vmem:[#allocation2 + $0x90] sm:$0xff] %vm634, 0.0
        %946 = vst.msk [vmem:[#allocation2 + $0x98] sm:$0xff] %vm634, 0.0
        %947 = vst.msk [vmem:[#allocation2 + $0xa0] sm:$0x3] %vm928, 0.0
        %948 = vst.msk [vmem:[#allocation2 + $0xa8] sm:$0xff] %vm634, 0.0
        %949 = vst.msk [vmem:[#allocation2 + $0xb0] sm:$0xff] %vm634, 0.0
        %950 = vst.msk [vmem:[#allocation2 + $0xb8] sm:$0x3] %vm928, 0.0
        %951 = vst.msk [vmem:[#allocation2 + $0xc0] sm:$0xff] %vm634, 0.0
        %952 = vst.msk [vmem:[#allocation2 + $0xc8] sm:$0xff] %vm634, 0.0
        %953 = vst.msk [vmem:[#allocation2 + $0xd0] sm:$0x3] %vm928, 0.0
        %954 = vst.msk [vmem:[#allocation2 + $0xd8] sm:$0xff] %vm634, 0.0
        %955 = vst.msk [vmem:[#allocation2 + $0xe0] sm:$0xff] %vm634, 0.0
        %956 = vst.msk [vmem:[#allocation2 + $0xe8] sm:$0x3] %vm928, 0.0
        %957 = vst.msk [vmem:[#allocation2 + $0xf0] sm:$0xff] %vm634, 0.0
        %958 = vst.msk [vmem:[#allocation2 + $0xf8] sm:$0xff] %vm634, 0.0
        %959 = vst.msk [vmem:[#allocation2 + $0x100] sm:$0x3] %vm928, 0.0
        %960 = vst.msk [vmem:[#allocation2 + $0x108] sm:$0xff] %vm634, 0.0
        %961 = vst.msk [vmem:[#allocation2 + $0x110] sm:$0xff] %vm634, 0.0
        %962 = vst.msk [vmem:[#allocation2 + $0x118] sm:$0x3] %vm928, 0.0
        %963 = vst.msk [vmem:[#allocation2 + $0x120] sm:$0xff] %vm634, 0.0
        %964 = vst.msk [vmem:[#allocation2 + $0x128] sm:$0xff] %vm634, 0.0
        %965 = vst.msk [vmem:[#allocation2 + $0x130] sm:$0x3] %vm928, 0.0
        %966 = vst.msk [vmem:[#allocation2 + $0x138] sm:$0xff] %vm634, 0.0
        %967 = vst.msk [vmem:[#allocation2 + $0x140] sm:$0xff] %vm634, 0.0
        %968 = vst.msk [vmem:[#allocation2 + $0x148] sm:$0x3] %vm928, 0.0
        %969 = vst.msk [vmem:[#allocation2 + $0x150] sm:$0xff] %vm634, 0.0
        %970 = vst.msk [vmem:[#allocation2 + $0x158] sm:$0xff] %vm634, 0.0
        %971 = vst.msk [vmem:[#allocation2 + $0x160] sm:$0x3] %vm928, 0.0
        %972 = vst.msk [vmem:[#allocation2 + $0x168] sm:$0xff] %vm634, 0.0
        %973 = vst.msk [vmem:[#allocation2 + $0x170] sm:$0xff] %vm634, 0.0
        %974 = vst.msk [vmem:[#allocation2 + $0x178] sm:$0x3] %vm928, 0.0
        %975 = vst.msk [vmem:[#allocation2 + $0x180] sm:$0xff] %vm634, 0.0
        %976 = vst.msk [vmem:[#allocation2 + $0x188] sm:$0xff] %vm634, 0.0
        %977 = vst.msk [vmem:[#allocation2 + $0x190] sm:$0x3] %vm928, 0.0
        %978 = vst.msk [vmem:[#allocation2 + $0x198] sm:$0xff] %vm634, 0.0
        %979 = vst.msk [vmem:[#allocation2 + $0x1a0] sm:$0xff] %vm634, 0.0
        %980 = vst.msk [vmem:[#allocation2 + $0x1a8] sm:$0x3] %vm928, 0.0
        %s981 = scalar_lea.vmem [#allocation2], 24
        %982 = vst.msk [vmem:[%s981 + $0x1] sm:$0xff] %vm634, %v894
        %983 = vst.msk [vmem:[%s981 + $0x9] sm:$0xff] %vm634, %v895
        %984 = vst.msk [vmem:[%s981 + $0x19] sm:$0xff] %vm634, %v896
        %985 = vst.msk [vmem:[%s981 + $0x21] sm:$0xff] %vm634, %v897
        %986 = vst.msk [vmem:[%s981 + $0x31] sm:$0xff] %vm634, %v898
        %987 = vst.msk [vmem:[%s981 + $0x39] sm:$0xff] %vm634, %v899
        %988 = vst.msk [vmem:[%s981 + $0x49] sm:$0xff] %vm634, %v900
        %989 = vst.msk [vmem:[%s981 + $0x51] sm:$0xff] %vm634, %v901
        %990 = vst.msk [vmem:[%s981 + $0x61] sm:$0xff] %vm634, %v902
        %991 = vst.msk [vmem:[%s981 + $0x69] sm:$0xff] %vm634, %v903
        %992 = vst.msk [vmem:[%s981 + $0x79] sm:$0xff] %vm634, %v904
        %993 = vst.msk [vmem:[%s981 + $0x81] sm:$0xff] %vm634, %v905
        %994 = vst.msk [vmem:[%s981 + $0x91] sm:$0xff] %vm634, %v906
        %995 = vst.msk [vmem:[%s981 + $0x99] sm:$0xff] %vm634, %v907
        %996 = vst.msk [vmem:[%s981 + $0xa9] sm:$0xff] %vm634, %v908
        %997 = vst.msk [vmem:[%s981 + $0xb1] sm:$0xff] %vm634, %v909
        %998 = vst.msk [vmem:[%s981 + $0xc1] sm:$0xff] %vm634, %v910
        %999 = vst.msk [vmem:[%s981 + $0xc9] sm:$0xff] %vm634, %v911
        %1000 = vst.msk [vmem:[%s981 + $0xd9] sm:$0xff] %vm634, %v912
        %1001 = vst.msk [vmem:[%s981 + $0xe1] sm:$0xff] %vm634, %v913
        %1002 = vst.msk [vmem:[%s981 + $0xf1] sm:$0xff] %vm634, %v914
        %1003 = vst.msk [vmem:[%s981 + $0xf9] sm:$0xff] %vm634, %v915
        %1004 = vst.msk [vmem:[%s981 + $0x109] sm:$0xff] %vm634, %v916
        %1005 = vst.msk [vmem:[%s981 + $0x111] sm:$0xff] %vm634, %v917
        %1006 = vst.msk [vmem:[%s981 + $0x121] sm:$0xff] %vm634, %v918
        %1007 = vst.msk [vmem:[%s981 + $0x129] sm:$0xff] %vm634, %v919
        %1008 = vst.msk [vmem:[%s981 + $0x139] sm:$0xff] %vm634, %v920
        %1009 = vst.msk [vmem:[%s981 + $0x141] sm:$0xff] %vm634, %v921
        %1010 = vst.msk [vmem:[%s981 + $0x151] sm:$0xff] %vm634, %v922
        %1011 = vst.msk [vmem:[%s981 + $0x159] sm:$0xff] %vm634, %v923
        %1012 = vst.msk [vmem:[%s981 + $0x169] sm:$0xff] %vm634, %v924
        %1013 = vst.msk [vmem:[%s981 + $0x171] sm:$0xff] %vm634, %v925
        %v1014 = vld [vmem:[%s4] sm:$0xff]
        %v1015 = vld [vmem:[%s4 + $0x8] sm:$0xff]
        %v1016 = vld [vmem:[%s4 + $0x10] sm:$0xff]
        %v1017 = vld [vmem:[%s4 + $0x18] sm:$0xff]
        %v1018 = vld [vmem:[%s4 + $0x20] sm:$0xff]
        %v1019 = vld [vmem:[%s4 + $0x28] sm:$0xff]
        %v1020 = vld [vmem:[%s4 + $0x30] sm:$0xff]
        %v1021 = vld [vmem:[%s4 + $0x38] sm:$0xff]
        %v1022 = vld [vmem:[%s4 + $0x40] sm:$0xff]
        %v1023 = vld [vmem:[#allocation2] sm:$0xff]
        %v1024 = vld [vmem:[#allocation2 + $0x8] sm:$0xff]
        %v1025 = vld [vmem:[#allocation2 + $0x10] sm:$0x3]
        %1026 = vst.msk [vmem:[#allocation3] sm:$0xff] %vm634, %v1023
        %1027 = vst.msk [vmem:[#allocation3 + $0x8] sm:$0xff] %vm634, %v1024
        %1028 = vst.msk [vmem:[#allocation3 + $0x10] sm:$0x3] %vm928, %v1025
        %s1029 = scalar_lea.vmem [#allocation2], 48
        %v1030 = vld [vmem:[%s1029] sm:$0xff]
        %v1031 = vld [vmem:[%s1029 + $0x8] sm:$0xff]
        %v1032 = vld [vmem:[%s1029 + $0x10] sm:$0x3]
        %s1033 = scalar_lea.vmem [#allocation3], 24
        %1034 = vst.msk [vmem:[%s1033] sm:$0xff] %vm634, %v1030
        %1035 = vst.msk [vmem:[%s1033 + $0x8] sm:$0xff] %vm634, %v1031
        %1036 = vst.msk [vmem:[%s1033 + $0x10] sm:$0x3] %vm928, %v1032
        %s1037 = scalar_lea.vmem [#allocation2], 96
        %v1038 = vld [vmem:[%s1037] sm:$0xff]
        %v1039 = vld [vmem:[%s1037 + $0x8] sm:$0xff]
        %v1040 = vld [vmem:[%s1037 + $0x10] sm:$0x3]
        %s1041 = scalar_lea.vmem [#allocation3], 48
        %1042 = vst.msk [vmem:[%s1041] sm:$0xff] %vm634, %v1038
        %1043 = vst.msk [vmem:[%s1041 + $0x8] sm:$0xff] %vm634, %v1039
        %1044 = vst.msk [vmem:[%s1041 + $0x10] sm:$0x3] %vm928, %v1040
        %s1045 = scalar_lea.vmem [#allocation2], 144
        %v1046 = vld [vmem:[%s1045] sm:$0xff]
        %v1047 = vld [vmem:[%s1045 + $0x8] sm:$0xff]
        %v1048 = vld [vmem:[%s1045 + $0x10] sm:$0x3]
        %s1049 = scalar_lea.vmem [#allocation3], 72
        %1050 = vst.msk [vmem:[%s1049] sm:$0xff] %vm634, %v1046
        %1051 = vst.msk [vmem:[%s1049 + $0x8] sm:$0xff] %vm634, %v1047
        %1052 = vst.msk [vmem:[%s1049 + $0x10] sm:$0x3] %vm928, %v1048
        %s1053 = scalar_lea.vmem [#allocation2], 192
        %v1054 = vld [vmem:[%s1053] sm:$0xff]
        %v1055 = vld [vmem:[%s1053 + $0x8] sm:$0xff]
        %v1056 = vld [vmem:[%s1053 + $0x10] sm:$0x3]
        %s1057 = scalar_lea.vmem [#allocation3], 96
        %1058 = vst.msk [vmem:[%s1057] sm:$0xff] %vm634, %v1054
        %1059 = vst.msk [vmem:[%s1057 + $0x8] sm:$0xff] %vm634, %v1055
        %1060 = vst.msk [vmem:[%s1057 + $0x10] sm:$0x3] %vm928, %v1056
        %s1061 = scalar_lea.vmem [#allocation2], 240
        %v1062 = vld [vmem:[%s1061] sm:$0xff]
        %v1063 = vld [vmem:[%s1061 + $0x8] sm:$0xff]
        %v1064 = vld [vmem:[%s1061 + $0x10] sm:$0x3]
        %s1065 = scalar_lea.vmem [#allocation3], 120
        %1066 = vst.msk [vmem:[%s1065] sm:$0xff] %vm634, %v1062
        %1067 = vst.msk [vmem:[%s1065 + $0x8] sm:$0xff] %vm634, %v1063
        %1068 = vst.msk [vmem:[%s1065 + $0x10] sm:$0x3] %vm928, %v1064
        %s1069 = scalar_lea.vmem [#allocation2], 288
        %v1070 = vld [vmem:[%s1069] sm:$0xff]
        %v1071 = vld [vmem:[%s1069 + $0x8] sm:$0xff]
        %v1072 = vld [vmem:[%s1069 + $0x10] sm:$0x3]
        %s1073 = scalar_lea.vmem [#allocation3], 144
        %1074 = vst.msk [vmem:[%s1073] sm:$0xff] %vm634, %v1070
        %1075 = vst.msk [vmem:[%s1073 + $0x8] sm:$0xff] %vm634, %v1071
        %1076 = vst.msk [vmem:[%s1073 + $0x10] sm:$0x3] %vm928, %v1072
        %s1077 = scalar_lea.vmem [#allocation2], 336
        %v1078 = vld [vmem:[%s1077] sm:$0xff]
        %v1079 = vld [vmem:[%s1077 + $0x8] sm:$0xff]
        %v1080 = vld [vmem:[%s1077 + $0x10] sm:$0x3]
        %s1081 = scalar_lea.vmem [#allocation3], 168
        %1082 = vst.msk [vmem:[%s1081] sm:$0xff] %vm634, %v1078
        %1083 = vst.msk [vmem:[%s1081 + $0x8] sm:$0xff] %vm634, %v1079
        %1084 = vst.msk [vmem:[%s1081 + $0x10] sm:$0x3] %vm928, %v1080
        %v1085 = vld [vmem:[#allocation3] ss:$2 sm:$0xff]
        %s1086 = scalar_lea.vmem [#allocation3], 24
        %v1087 = vld [vmem:[%s1086] ss:$2 sm:$0xff]
        %s1088 = scalar_lea.vmem [#allocation3], 48
        %v1089 = vld [vmem:[%s1088] ss:$2 sm:$0xff]
        %s1090 = scalar_lea.vmem [#allocation3], 72
        %v1091 = vld [vmem:[%s1090] ss:$2 sm:$0xff]
        %s1092 = scalar_lea.vmem [#allocation3], 96
        %v1093 = vld [vmem:[%s1092] ss:$2 sm:$0xff]
        %s1094 = scalar_lea.vmem [#allocation3], 120
        %v1095 = vld [vmem:[%s1094] ss:$2 sm:$0xff]
        %s1096 = scalar_lea.vmem [#allocation3], 144
        %v1097 = vld [vmem:[%s1096] ss:$2 sm:$0xff]
        %s1098 = scalar_lea.vmem [#allocation3], 168
        %v1099 = vld [vmem:[%s1098] ss:$2 sm:$0xff]
        %v1100 = vpack.c.bf16 %v1087, %v1085
        %v1101 = vpack.c.bf16 %v1091, %v1089
        %v1102 = vpack.c.bf16 %v1095, %v1093
        %v1103 = vpack.c.bf16 %v1099, %v1097
        %v1104 = vpack.c.bf16 %v1014, %v1014
        %s1105 = scalar_lea.vmem [#allocation3], 1
        %v1106 = vld [vmem:[%s1105] ss:$2 sm:$0xff]
        %s1107 = scalar_lea.vmem [#allocation3], 25
        %v1108 = vld [vmem:[%s1107] ss:$2 sm:$0xff]
        %s1109 = scalar_lea.vmem [#allocation3], 49
        %v1110 = vld [vmem:[%s1109] ss:$2 sm:$0xff]
        %s1111 = scalar_lea.vmem [#allocation3], 73
        %v1112 = vld [vmem:[%s1111] ss:$2 sm:$0xff]
        %s1113 = scalar_lea.vmem [#allocation3], 97
        %v1114 = vld [vmem:[%s1113] ss:$2 sm:$0xff]
        %s1115 = scalar_lea.vmem [#allocation3], 121
        %v1116 = vld [vmem:[%s1115] ss:$2 sm:$0xff]
        %s1117 = scalar_lea.vmem [#allocation3], 145
        %v1118 = vld [vmem:[%s1117] ss:$2 sm:$0xff]
        %s1119 = scalar_lea.vmem [#allocation3], 169
        %v1120 = vld [vmem:[%s1119] ss:$2 sm:$0xff]
        %v1121 = vpack.c.bf16 %v1108, %v1106
        %v1122 = vpack.c.bf16 %v1112, %v1110
        %v1123 = vpack.c.bf16 %v1116, %v1114
        %v1124 = vpack.c.bf16 %v1120, %v1118
        %v1125 = vpack.c.bf16 %v1015, %v1015
        %v1127 = vsel %vm634, %v1121, 0
        %v1130 = vsel %vm634, %v1122, 0
        %v1133 = vsel %vm634, %v1123, 0
        %v1136 = vsel %vm634, %v1124, 0
        %vm1138 = vcmask 1043456
        %v1140 = vsel %vm1138, %v1125, 0
        %1142 = vmatpush.bf16.msra.mxu0 0
        %1143 = vmatpush.bf16.msra.mxu0 0
        %1144 = vmatpush.bf16.msra.mxu0 0
        %1145 = vmatpush.bf16.msra.mxu0 0
        %1146 = vmatpush.bf16.msra.mxu0 0
        %1147 = vmatpush.bf16.msra.mxu0 0
        %1148 = vmatpush.bf16.msra.mxu0 0
        %1149 = vmatpush.bf16.msra.mxu0 %v1140
        %1150 = vmatmul.bf16.gmra.mxu0 %v1127
        %v1151 = vpop.f32.mrf.mxu0
        %v1152 = vadd.f32 0.0, %v1151
        %v1153 = vpop.f32.mrf.mxu0
        %v1154 = vadd.f32 0.0, %v1153
        %1155 = vmatmul.bf16.gmra.mxu0 %v1130
        %v1156 = vpop.f32.mrf.mxu0
        %v1157 = vadd.f32 0.0, %v1156
        %v1158 = vpop.f32.mrf.mxu0
        %v1159 = vadd.f32 0.0, %v1158
        %1160 = vmatmul.bf16.gmra.mxu0 %v1133
        %v1161 = vpop.f32.mrf.mxu0
        %v1162 = vadd.f32 0.0, %v1161
        %v1163 = vpop.f32.mrf.mxu0
        %v1164 = vadd.f32 0.0, %v1163
        %1165 = vmatmul.bf16.gmra.mxu0 %v1136
        %v1166 = vpop.f32.mrf.mxu0
        %v1167 = vadd.f32 0.0, %v1166
        %v1168 = vpop.f32.mrf.mxu0
        %v1169 = vadd.f32 0.0, %v1168
        %1170 = vdwg.mxu0
        %v1172 = vsel %vm634, %v1100, 0
        %v1175 = vsel %vm634, %v1101, 0
        %v1178 = vsel %vm634, %v1102, 0
        %v1181 = vsel %vm634, %v1103, 0
        %v1184 = vsel %vm1138, %v1104, 0
        %1186 = vmatpush.bf16.msra.mxu0 0
        %1187 = vmatpush.bf16.msra.mxu0 0
        %1188 = vmatpush.bf16.msra.mxu0 0
        %1189 = vmatpush.bf16.msra.mxu0 0
        %1190 = vmatpush.bf16.msra.mxu0 0
        %1191 = vmatpush.bf16.msra.mxu0 0
        %1192 = vmatpush.bf16.msra.mxu0 0
        %1193 = vmatpush.bf16.msra.mxu0 %v1184
        %1194 = vmatmul.bf16.gmra.mxu0 %v1172
        %v1195 = vpop.f32.mrf.mxu0
        %v1196 = vadd.f32 %v1152, %v1195
        %v1197 = vpop.f32.mrf.mxu0
        %v1198 = vadd.f32 %v1154, %v1197
        %1199 = vmatmul.bf16.gmra.mxu0 %v1175
        %v1200 = vpop.f32.mrf.mxu0
        %v1201 = vadd.f32 %v1157, %v1200
        %v1202 = vpop.f32.mrf.mxu0
        %v1203 = vadd.f32 %v1159, %v1202
        %1204 = vmatmul.bf16.gmra.mxu0 %v1178
        %v1205 = vpop.f32.mrf.mxu0
        %v1206 = vadd.f32 %v1162, %v1205
        %v1207 = vpop.f32.mrf.mxu0
        %v1208 = vadd.f32 %v1164, %v1207
        %1209 = vmatmul.bf16.gmra.mxu0 %v1181
        %v1210 = vpop.f32.mrf.mxu0
        %v1211 = vadd.f32 %v1167, %v1210
        %v1212 = vpop.f32.mrf.mxu0
        %v1213 = vadd.f32 %v1169, %v1212
        %1214 = vdwg.mxu0
        %s1215 = scalar_lea.vmem [#allocation3], 2
        %v1216 = vld [vmem:[%s1215] ss:$2 sm:$0xff]
        %s1217 = scalar_lea.vmem [#allocation3], 26
        %v1218 = vld [vmem:[%s1217] ss:$2 sm:$0xff]
        %s1219 = scalar_lea.vmem [#allocation3], 50
        %v1220 = vld [vmem:[%s1219] ss:$2 sm:$0xff]
        %s1221 = scalar_lea.vmem [#allocation3], 74
        %v1222 = vld [vmem:[%s1221] ss:$2 sm:$0xff]
        %s1223 = scalar_lea.vmem [#allocation3], 98
        %v1224 = vld [vmem:[%s1223] ss:$2 sm:$0xff]
        %s1225 = scalar_lea.vmem [#allocation3], 122
        %v1226 = vld [vmem:[%s1225] ss:$2 sm:$0xff]
        %s1227 = scalar_lea.vmem [#allocation3], 146
        %v1228 = vld [vmem:[%s1227] ss:$2 sm:$0xff]
        %s1229 = scalar_lea.vmem [#allocation3], 170
        %v1230 = vld [vmem:[%s1229] ss:$2 sm:$0xff]
        %v1231 = vpack.c.bf16 %v1218, %v1216
        %v1232 = vpack.c.bf16 %v1222, %v1220
        %v1233 = vpack.c.bf16 %v1226, %v1224
        %v1234 = vpack.c.bf16 %v1230, %v1228
        %v1235 = vpack.c.bf16 %v1016, %v1016
        %v1237 = vsel %vm634, %v1231, 0
        %v1240 = vsel %vm634, %v1232, 0
        %v1243 = vsel %vm634, %v1233, 0
        %v1246 = vsel %vm634, %v1234, 0
        %v1249 = vsel %vm1138, %v1235, 0
        %1251 = vmatpush.bf16.msra.mxu0 0
        %1252 = vmatpush.bf16.msra.mxu0 0
        %1253 = vmatpush.bf16.msra.mxu0 0
        %1254 = vmatpush.bf16.msra.mxu0 0
        %1255 = vmatpush.bf16.msra.mxu0 0
        %1256 = vmatpush.bf16.msra.mxu0 0
        %1257 = vmatpush.bf16.msra.mxu0 0
        %1258 = vmatpush.bf16.msra.mxu0 %v1249
        %1259 = vmatmul.bf16.gmra.mxu0 %v1237
        %v1260 = vpop.f32.mrf.mxu0
        %v1261 = vadd.f32 0.0, %v1260
        %v1262 = vpop.f32.mrf.mxu0
        %v1263 = vadd.f32 0.0, %v1262
        %1264 = vmatmul.bf16.gmra.mxu0 %v1240
        %v1265 = vpop.f32.mrf.mxu0
        %v1266 = vadd.f32 0.0, %v1265
        %v1267 = vpop.f32.mrf.mxu0
        %v1268 = vadd.f32 0.0, %v1267
        %1269 = vmatmul.bf16.gmra.mxu0 %v1243
        %v1270 = vpop.f32.mrf.mxu0
        %v1271 = vadd.f32 0.0, %v1270
        %v1272 = vpop.f32.mrf.mxu0
        %v1273 = vadd.f32 0.0, %v1272
        %1274 = vmatmul.bf16.gmra.mxu0 %v1246
        %v1275 = vpop.f32.mrf.mxu0
        %v1276 = vadd.f32 0.0, %v1275
        %v1277 = vpop.f32.mrf.mxu0
        %v1278 = vadd.f32 0.0, %v1277
        %1279 = vdwg.mxu0
        %v1280 = vadd.f32 %v1196, %v1261
        %v1281 = vadd.f32 %v1198, %v1263
        %v1282 = vadd.f32 %v1201, %v1266
        %v1283 = vadd.f32 %v1203, %v1268
        %v1284 = vadd.f32 %v1206, %v1271
        %v1285 = vadd.f32 %v1208, %v1273
        %v1286 = vadd.f32 %v1211, %v1276
        %v1287 = vadd.f32 %v1213, %v1278
        %v1288 = vld [vmem:[%s981] sm:$0xff]
        %v1289 = vld [vmem:[%s981 + $0x8] sm:$0xff]
        %v1290 = vld [vmem:[%s981 + $0x10] sm:$0x3]
        %1291 = vst.msk [vmem:[#allocation3] sm:$0xff] %vm634, %v1288
        %1292 = vst.msk [vmem:[#allocation3 + $0x8] sm:$0xff] %vm634, %v1289
        %1293 = vst.msk [vmem:[#allocation3 + $0x10] sm:$0x3] %vm928, %v1290
        %s1294 = scalar_lea.vmem [#allocation2], 72
        %v1295 = vld [vmem:[%s1294] sm:$0xff]
        %v1296 = vld [vmem:[%s1294 + $0x8] sm:$0xff]
        %v1297 = vld [vmem:[%s1294 + $0x10] sm:$0x3]
        %1298 = vst.msk [vmem:[%s1033] sm:$0xff] %vm634, %v1295
        %1299 = vst.msk [vmem:[%s1033 + $0x8] sm:$0xff] %vm634, %v1296
        %1300 = vst.msk [vmem:[%s1033 + $0x10] sm:$0x3] %vm928, %v1297
        %s1301 = scalar_lea.vmem [#allocation2], 120
        %v1302 = vld [vmem:[%s1301] sm:$0xff]
        %v1303 = vld [vmem:[%s1301 + $0x8] sm:$0xff]
        %v1304 = vld [vmem:[%s1301 + $0x10] sm:$0x3]
        %1305 = vst.msk [vmem:[%s1041] sm:$0xff] %vm634, %v1302
        %1306 = vst.msk [vmem:[%s1041 + $0x8] sm:$0xff] %vm634, %v1303
        %1307 = vst.msk [vmem:[%s1041 + $0x10] sm:$0x3] %vm928, %v1304
        %s1308 = scalar_lea.vmem [#allocation2], 168
        %v1309 = vld [vmem:[%s1308] sm:$0xff]
        %v1310 = vld [vmem:[%s1308 + $0x8] sm:$0xff]
        %v1311 = vld [vmem:[%s1308 + $0x10] sm:$0x3]
        %1312 = vst.msk [vmem:[%s1049] sm:$0xff] %vm634, %v1309
        %1313 = vst.msk [vmem:[%s1049 + $0x8] sm:$0xff] %vm634, %v1310
        %1314 = vst.msk [vmem:[%s1049 + $0x10] sm:$0x3] %vm928, %v1311
        %s1315 = scalar_lea.vmem [#allocation2], 216
        %v1316 = vld [vmem:[%s1315] sm:$0xff]
        %v1317 = vld [vmem:[%s1315 + $0x8] sm:$0xff]
        %v1318 = vld [vmem:[%s1315 + $0x10] sm:$0x3]
        %1319 = vst.msk [vmem:[%s1057] sm:$0xff] %vm634, %v1316
        %1320 = vst.msk [vmem:[%s1057 + $0x8] sm:$0xff] %vm634, %v1317
        %1321 = vst.msk [vmem:[%s1057 + $0x10] sm:$0x3] %vm928, %v1318
        %s1322 = scalar_lea.vmem [#allocation2], 264
        %v1323 = vld [vmem:[%s1322] sm:$0xff]
        %v1324 = vld [vmem:[%s1322 + $0x8] sm:$0xff]
        %v1325 = vld [vmem:[%s1322 + $0x10] sm:$0x3]
        %1326 = vst.msk [vmem:[%s1065] sm:$0xff] %vm634, %v1323
        %1327 = vst.msk [vmem:[%s1065 + $0x8] sm:$0xff] %vm634, %v1324
        %1328 = vst.msk [vmem:[%s1065 + $0x10] sm:$0x3] %vm928, %v1325
        %s1329 = scalar_lea.vmem [#allocation2], 312
        %v1330 = vld [vmem:[%s1329] sm:$0xff]
        %v1331 = vld [vmem:[%s1329 + $0x8] sm:$0xff]
        %v1332 = vld [vmem:[%s1329 + $0x10] sm:$0x3]
        %1333 = vst.msk [vmem:[%s1073] sm:$0xff] %vm634, %v1330
        %1334 = vst.msk [vmem:[%s1073 + $0x8] sm:$0xff] %vm634, %v1331
        %1335 = vst.msk [vmem:[%s1073 + $0x10] sm:$0x3] %vm928, %v1332
        %s1336 = scalar_lea.vmem [#allocation2], 360
        %v1337 = vld [vmem:[%s1336] sm:$0xff]
        %v1338 = vld [vmem:[%s1336 + $0x8] sm:$0xff]
        %v1339 = vld [vmem:[%s1336 + $0x10] sm:$0x3]
        %1340 = vst.msk [vmem:[%s1081] sm:$0xff] %vm634, %v1337
        %1341 = vst.msk [vmem:[%s1081 + $0x8] sm:$0xff] %vm634, %v1338
        %1342 = vst.msk [vmem:[%s1081 + $0x10] sm:$0x3] %vm928, %v1339
        %v1343 = vld [vmem:[#allocation3] ss:$2 sm:$0xff]
        %v1344 = vld [vmem:[%s1086] ss:$2 sm:$0xff]
        %v1345 = vld [vmem:[%s1088] ss:$2 sm:$0xff]
        %v1346 = vld [vmem:[%s1090] ss:$2 sm:$0xff]
        %v1347 = vld [vmem:[%s1092] ss:$2 sm:$0xff]
        %v1348 = vld [vmem:[%s1094] ss:$2 sm:$0xff]
        %v1349 = vld [vmem:[%s1096] ss:$2 sm:$0xff]
        %v1350 = vld [vmem:[%s1098] ss:$2 sm:$0xff]
        %v1351 = vpack.c.bf16 %v1344, %v1343
        %v1352 = vpack.c.bf16 %v1346, %v1345
        %v1353 = vpack.c.bf16 %v1348, %v1347
        %v1354 = vpack.c.bf16 %v1350, %v1349
        %v1355 = vpack.c.bf16 %v1017, %v1017
        %v1357 = vsel %vm634, %v1351, 0
        %v1360 = vsel %vm634, %v1352, 0
        %v1363 = vsel %vm634, %v1353, 0
        %v1366 = vsel %vm634, %v1354, 0
        %v1369 = vsel %vm1138, %v1355, 0
        %1371 = vmatpush.bf16.msra.mxu0 0
        %1372 = vmatpush.bf16.msra.mxu0 0
        %1373 = vmatpush.bf16.msra.mxu0 0
        %1374 = vmatpush.bf16.msra.mxu0 0
        %1375 = vmatpush.bf16.msra.mxu0 0
        %1376 = vmatpush.bf16.msra.mxu0 0
        %1377 = vmatpush.bf16.msra.mxu0 0
        %1378 = vmatpush.bf16.msra.mxu0 %v1369
        %1379 = vmatmul.bf16.gmra.mxu0 %v1357
        %v1380 = vpop.f32.mrf.mxu0
        %v1381 = vadd.f32 0.0, %v1380
        %v1382 = vpop.f32.mrf.mxu0
        %v1383 = vadd.f32 0.0, %v1382
        %1384 = vmatmul.bf16.gmra.mxu0 %v1360
        %v1385 = vpop.f32.mrf.mxu0
        %v1386 = vadd.f32 0.0, %v1385
        %v1387 = vpop.f32.mrf.mxu0
        %v1388 = vadd.f32 0.0, %v1387
        %1389 = vmatmul.bf16.gmra.mxu0 %v1363
        %v1390 = vpop.f32.mrf.mxu0
        %v1391 = vadd.f32 0.0, %v1390
        %v1392 = vpop.f32.mrf.mxu0
        %v1393 = vadd.f32 0.0, %v1392
        %1394 = vmatmul.bf16.gmra.mxu0 %v1366
        %v1395 = vpop.f32.mrf.mxu0
        %v1396 = vadd.f32 0.0, %v1395
        %v1397 = vpop.f32.mrf.mxu0
        %v1398 = vadd.f32 0.0, %v1397
        %1399 = vdwg.mxu0
        %v1400 = vadd.f32 %v1280, %v1381
        %v1401 = vadd.f32 %v1281, %v1383
        %v1402 = vadd.f32 %v1282, %v1386
        %v1403 = vadd.f32 %v1283, %v1388
        %v1404 = vadd.f32 %v1284, %v1391
        %v1405 = vadd.f32 %v1285, %v1393
        %v1406 = vadd.f32 %v1286, %v1396
        %v1407 = vadd.f32 %v1287, %v1398
        %v1408 = vld [vmem:[%s1105] ss:$2 sm:$0xff]
        %v1409 = vld [vmem:[%s1107] ss:$2 sm:$0xff]
        %v1410 = vld [vmem:[%s1109] ss:$2 sm:$0xff]
        %v1411 = vld [vmem:[%s1111] ss:$2 sm:$0xff]
        %v1412 = vld [vmem:[%s1113] ss:$2 sm:$0xff]
        %v1413 = vld [vmem:[%s1115] ss:$2 sm:$0xff]
        %v1414 = vld [vmem:[%s1117] ss:$2 sm:$0xff]
        %v1415 = vld [vmem:[%s1119] ss:$2 sm:$0xff]
        %v1416 = vpack.c.bf16 %v1409, %v1408
        %v1417 = vpack.c.bf16 %v1411, %v1410
        %v1418 = vpack.c.bf16 %v1413, %v1412
        %v1419 = vpack.c.bf16 %v1415, %v1414
        %v1420 = vpack.c.bf16 %v1018, %v1018
        %v1422 = vsel %vm634, %v1416, 0
        %v1425 = vsel %vm634, %v1417, 0
        %v1428 = vsel %vm634, %v1418, 0
        %v1431 = vsel %vm634, %v1419, 0
        %v1434 = vsel %vm1138, %v1420, 0
        %1436 = vmatpush.bf16.msra.mxu0 0
        %1437 = vmatpush.bf16.msra.mxu0 0
        %1438 = vmatpush.bf16.msra.mxu0 0
        %1439 = vmatpush.bf16.msra.mxu0 0
        %1440 = vmatpush.bf16.msra.mxu0 0
        %1441 = vmatpush.bf16.msra.mxu0 0
        %1442 = vmatpush.bf16.msra.mxu0 0
        %1443 = vmatpush.bf16.msra.mxu0 %v1434
        %1444 = vmatmul.bf16.gmra.mxu0 %v1422
        %v1445 = vpop.f32.mrf.mxu0
        %v1446 = vadd.f32 0.0, %v1445
        %v1447 = vpop.f32.mrf.mxu0
        %v1448 = vadd.f32 0.0, %v1447
        %1449 = vmatmul.bf16.gmra.mxu0 %v1425
        %v1450 = vpop.f32.mrf.mxu0
        %v1451 = vadd.f32 0.0, %v1450
        %v1452 = vpop.f32.mrf.mxu0
        %v1453 = vadd.f32 0.0, %v1452
        %1454 = vmatmul.bf16.gmra.mxu0 %v1428
        %v1455 = vpop.f32.mrf.mxu0
        %v1456 = vadd.f32 0.0, %v1455
        %v1457 = vpop.f32.mrf.mxu0
        %v1458 = vadd.f32 0.0, %v1457
        %1459 = vmatmul.bf16.gmra.mxu0 %v1431
        %v1460 = vpop.f32.mrf.mxu0
        %v1461 = vadd.f32 0.0, %v1460
        %v1462 = vpop.f32.mrf.mxu0
        %v1463 = vadd.f32 0.0, %v1462
        %1464 = vdwg.mxu0
        %v1465 = vadd.f32 %v1400, %v1446
        %v1466 = vadd.f32 %v1401, %v1448
        %v1467 = vadd.f32 %v1402, %v1451
        %v1468 = vadd.f32 %v1403, %v1453
        %v1469 = vadd.f32 %v1404, %v1456
        %v1470 = vadd.f32 %v1405, %v1458
        %v1471 = vadd.f32 %v1406, %v1461
        %v1472 = vadd.f32 %v1407, %v1463
        %v1473 = vld [vmem:[%s1215] ss:$2 sm:$0xff]
        %v1474 = vld [vmem:[%s1217] ss:$2 sm:$0xff]
        %v1475 = vld [vmem:[%s1219] ss:$2 sm:$0xff]
        %v1476 = vld [vmem:[%s1221] ss:$2 sm:$0xff]
        %v1477 = vld [vmem:[%s1223] ss:$2 sm:$0xff]
        %v1478 = vld [vmem:[%s1225] ss:$2 sm:$0xff]
        %v1479 = vld [vmem:[%s1227] ss:$2 sm:$0xff]
        %v1480 = vld [vmem:[%s1229] ss:$2 sm:$0xff]
        %v1481 = vpack.c.bf16 %v1474, %v1473
        %v1482 = vpack.c.bf16 %v1476, %v1475
        %v1483 = vpack.c.bf16 %v1478, %v1477
        %v1484 = vpack.c.bf16 %v1480, %v1479
        %v1485 = vpack.c.bf16 %v1019, %v1019
        %v1487 = vsel %vm634, %v1481, 0
        %v1490 = vsel %vm634, %v1482, 0
        %v1493 = vsel %vm634, %v1483, 0
        %v1496 = vsel %vm634, %v1484, 0
        %v1499 = vsel %vm1138, %v1485, 0
        %1501 = vmatpush.bf16.msra.mxu0 0
        %1502 = vmatpush.bf16.msra.mxu0 0
        %1503 = vmatpush.bf16.msra.mxu0 0
        %1504 = vmatpush.bf16.msra.mxu0 0
        %1505 = vmatpush.bf16.msra.mxu0 0
        %1506 = vmatpush.bf16.msra.mxu0 0
        %1507 = vmatpush.bf16.msra.mxu0 0
        %1508 = vmatpush.bf16.msra.mxu0 %v1499
        %1509 = vmatmul.bf16.gmra.mxu0 %v1487
        %v1510 = vpop.f32.mrf.mxu0
        %v1511 = vadd.f32 0.0, %v1510
        %v1512 = vpop.f32.mrf.mxu0
        %v1513 = vadd.f32 0.0, %v1512
        %1514 = vmatmul.bf16.gmra.mxu0 %v1490
        %v1515 = vpop.f32.mrf.mxu0
        %v1516 = vadd.f32 0.0, %v1515
        %v1517 = vpop.f32.mrf.mxu0
        %v1518 = vadd.f32 0.0, %v1517
        %1519 = vmatmul.bf16.gmra.mxu0 %v1493
        %v1520 = vpop.f32.mrf.mxu0
        %v1521 = vadd.f32 0.0, %v1520
        %v1522 = vpop.f32.mrf.mxu0
        %v1523 = vadd.f32 0.0, %v1522
        %1524 = vmatmul.bf16.gmra.mxu0 %v1496
        %v1525 = vpop.f32.mrf.mxu0
        %v1526 = vadd.f32 0.0, %v1525
        %v1527 = vpop.f32.mrf.mxu0
        %v1528 = vadd.f32 0.0, %v1527
        %1529 = vdwg.mxu0
        %v1530 = vadd.f32 %v1465, %v1511
        %v1531 = vadd.f32 %v1466, %v1513
        %v1532 = vadd.f32 %v1467, %v1516
        %v1533 = vadd.f32 %v1468, %v1518
        %v1534 = vadd.f32 %v1469, %v1521
        %v1535 = vadd.f32 %v1470, %v1523
        %v1536 = vadd.f32 %v1471, %v1526
        %v1537 = vadd.f32 %v1472, %v1528
        %v1538 = vld [vmem:[%s1029] sm:$0xff]
        %v1539 = vld [vmem:[%s1029 + $0x8] sm:$0xff]
        %v1540 = vld [vmem:[%s1029 + $0x10] sm:$0x3]
        %1541 = vst.msk [vmem:[#allocation3] sm:$0xff] %vm634, %v1538
        %1542 = vst.msk [vmem:[#allocation3 + $0x8] sm:$0xff] %vm634, %v1539
        %1543 = vst.msk [vmem:[#allocation3 + $0x10] sm:$0x3] %vm928, %v1540
        %v1544 = vld [vmem:[%s1037] sm:$0xff]
        %v1545 = vld [vmem:[%s1037 + $0x8] sm:$0xff]
        %v1546 = vld [vmem:[%s1037 + $0x10] sm:$0x3]
        %1547 = vst.msk [vmem:[%s1033] sm:$0xff] %vm634, %v1544
        %1548 = vst.msk [vmem:[%s1033 + $0x8] sm:$0xff] %vm634, %v1545
        %1549 = vst.msk [vmem:[%s1033 + $0x10] sm:$0x3] %vm928, %v1546
        %v1550 = vld [vmem:[%s1045] sm:$0xff]
        %v1551 = vld [vmem:[%s1045 + $0x8] sm:$0xff]
        %v1552 = vld [vmem:[%s1045 + $0x10] sm:$0x3]
        %1553 = vst.msk [vmem:[%s1041] sm:$0xff] %vm634, %v1550
        %1554 = vst.msk [vmem:[%s1041 + $0x8] sm:$0xff] %vm634, %v1551
        %1555 = vst.msk [vmem:[%s1041 + $0x10] sm:$0x3] %vm928, %v1552
        %v1556 = vld [vmem:[%s1053] sm:$0xff]
        %v1557 = vld [vmem:[%s1053 + $0x8] sm:$0xff]
        %v1558 = vld [vmem:[%s1053 + $0x10] sm:$0x3]
        %1559 = vst.msk [vmem:[%s1049] sm:$0xff] %vm634, %v1556
        %1560 = vst.msk [vmem:[%s1049 + $0x8] sm:$0xff] %vm634, %v1557
        %1561 = vst.msk [vmem:[%s1049 + $0x10] sm:$0x3] %vm928, %v1558
        %v1562 = vld [vmem:[%s1061] sm:$0xff]
        %v1563 = vld [vmem:[%s1061 + $0x8] sm:$0xff]
        %v1564 = vld [vmem:[%s1061 + $0x10] sm:$0x3]
        %1565 = vst.msk [vmem:[%s1057] sm:$0xff] %vm634, %v1562
        %1566 = vst.msk [vmem:[%s1057 + $0x8] sm:$0xff] %vm634, %v1563
        %1567 = vst.msk [vmem:[%s1057 + $0x10] sm:$0x3] %vm928, %v1564
        %v1568 = vld [vmem:[%s1069] sm:$0xff]
        %v1569 = vld [vmem:[%s1069 + $0x8] sm:$0xff]
        %v1570 = vld [vmem:[%s1069 + $0x10] sm:$0x3]
        %1571 = vst.msk [vmem:[%s1065] sm:$0xff] %vm634, %v1568
        %1572 = vst.msk [vmem:[%s1065 + $0x8] sm:$0xff] %vm634, %v1569
        %1573 = vst.msk [vmem:[%s1065 + $0x10] sm:$0x3] %vm928, %v1570
        %v1574 = vld [vmem:[%s1077] sm:$0xff]
        %v1575 = vld [vmem:[%s1077 + $0x8] sm:$0xff]
        %v1576 = vld [vmem:[%s1077 + $0x10] sm:$0x3]
        %1577 = vst.msk [vmem:[%s1073] sm:$0xff] %vm634, %v1574
        %1578 = vst.msk [vmem:[%s1073 + $0x8] sm:$0xff] %vm634, %v1575
        %1579 = vst.msk [vmem:[%s1073 + $0x10] sm:$0x3] %vm928, %v1576
        %s1580 = scalar_lea.vmem [#allocation2], 384
        %v1581 = vld [vmem:[%s1580] sm:$0xff]
        %v1582 = vld [vmem:[%s1580 + $0x8] sm:$0xff]
        %v1583 = vld [vmem:[%s1580 + $0x10] sm:$0x3]
        %1584 = vst.msk [vmem:[%s1081] sm:$0xff] %vm634, %v1581
        %1585 = vst.msk [vmem:[%s1081 + $0x8] sm:$0xff] %vm634, %v1582
        %1586 = vst.msk [vmem:[%s1081 + $0x10] sm:$0x3] %vm928, %v1583
        %v1587 = vld [vmem:[#allocation3] ss:$2 sm:$0xff]
        %v1588 = vld [vmem:[%s1086] ss:$2 sm:$0xff]
        %v1589 = vld [vmem:[%s1088] ss:$2 sm:$0xff]
        %v1590 = vld [vmem:[%s1090] ss:$2 sm:$0xff]
        %v1591 = vld [vmem:[%s1092] ss:$2 sm:$0xff]
        %v1592 = vld [vmem:[%s1094] ss:$2 sm:$0xff]
        %v1593 = vld [vmem:[%s1096] ss:$2 sm:$0xff]
        %v1594 = vld [vmem:[%s1098] ss:$2 sm:$0xff]
        %v1595 = vpack.c.bf16 %v1588, %v1587
        %v1596 = vpack.c.bf16 %v1590, %v1589
        %v1597 = vpack.c.bf16 %v1592, %v1591
        %v1598 = vpack.c.bf16 %v1594, %v1593
        %v1599 = vpack.c.bf16 %v1020, %v1020
        %v1601 = vsel %vm634, %v1595, 0
        %v1604 = vsel %vm634, %v1596, 0
        %v1607 = vsel %vm634, %v1597, 0
        %v1610 = vsel %vm634, %v1598, 0
        %v1613 = vsel %vm1138, %v1599, 0
        %1615 = vmatpush.bf16.msra.mxu0 0
        %1616 = vmatpush.bf16.msra.mxu0 0
        %1617 = vmatpush.bf16.msra.mxu0 0
        %1618 = vmatpush.bf16.msra.mxu0 0
        %1619 = vmatpush.bf16.msra.mxu0 0
        %1620 = vmatpush.bf16.msra.mxu0 0
        %1621 = vmatpush.bf16.msra.mxu0 0
        %1622 = vmatpush.bf16.msra.mxu0 %v1613
        %1623 = vmatmul.bf16.gmra.mxu0 %v1601
        %v1624 = vpop.f32.mrf.mxu0
        %v1625 = vadd.f32 0.0, %v1624
        %v1626 = vpop.f32.mrf.mxu0
        %v1627 = vadd.f32 0.0, %v1626
        %1628 = vmatmul.bf16.gmra.mxu0 %v1604
        %v1629 = vpop.f32.mrf.mxu0
        %v1630 = vadd.f32 0.0, %v1629
        %v1631 = vpop.f32.mrf.mxu0
        %v1632 = vadd.f32 0.0, %v1631
        %1633 = vmatmul.bf16.gmra.mxu0 %v1607
        %v1634 = vpop.f32.mrf.mxu0
        %v1635 = vadd.f32 0.0, %v1634
        %v1636 = vpop.f32.mrf.mxu0
        %v1637 = vadd.f32 0.0, %v1636
        %1638 = vmatmul.bf16.gmra.mxu0 %v1610
        %v1639 = vpop.f32.mrf.mxu0
        %v1640 = vadd.f32 0.0, %v1639
        %v1641 = vpop.f32.mrf.mxu0
        %v1642 = vadd.f32 0.0, %v1641
        %1643 = vdwg.mxu0
        %v1644 = vadd.f32 %v1530, %v1625
        %v1645 = vadd.f32 %v1531, %v1627
        %v1646 = vadd.f32 %v1532, %v1630
        %v1647 = vadd.f32 %v1533, %v1632
        %v1648 = vadd.f32 %v1534, %v1635
        %v1649 = vadd.f32 %v1535, %v1637
        %v1650 = vadd.f32 %v1536, %v1640
        %v1651 = vadd.f32 %v1537, %v1642
        %v1652 = vld [vmem:[%s1105] ss:$2 sm:$0xff]
        %v1653 = vld [vmem:[%s1107] ss:$2 sm:$0xff]
        %v1654 = vld [vmem:[%s1109] ss:$2 sm:$0xff]
        %v1655 = vld [vmem:[%s1111] ss:$2 sm:$0xff]
        %v1656 = vld [vmem:[%s1113] ss:$2 sm:$0xff]
        %v1657 = vld [vmem:[%s1115] ss:$2 sm:$0xff]
        %v1658 = vld [vmem:[%s1117] ss:$2 sm:$0xff]
        %v1659 = vld [vmem:[%s1119] ss:$2 sm:$0xff]
        %v1660 = vpack.c.bf16 %v1653, %v1652
        %v1661 = vpack.c.bf16 %v1655, %v1654
        %v1662 = vpack.c.bf16 %v1657, %v1656
        %v1663 = vpack.c.bf16 %v1659, %v1658
        %v1664 = vpack.c.bf16 %v1021, %v1021
        %v1666 = vsel %vm634, %v1660, 0
        %v1669 = vsel %vm634, %v1661, 0
        %v1672 = vsel %vm634, %v1662, 0
        %v1675 = vsel %vm634, %v1663, 0
        %v1678 = vsel %vm1138, %v1664, 0
        %1680 = vmatpush.bf16.msra.mxu0 0
        %1681 = vmatpush.bf16.msra.mxu0 0
        %1682 = vmatpush.bf16.msra.mxu0 0
        %1683 = vmatpush.bf16.msra.mxu0 0
        %1684 = vmatpush.bf16.msra.mxu0 0
        %1685 = vmatpush.bf16.msra.mxu0 0
        %1686 = vmatpush.bf16.msra.mxu0 0
        %1687 = vmatpush.bf16.msra.mxu0 %v1678
        %1688 = vmatmul.bf16.gmra.mxu0 %v1666
        %v1689 = vpop.f32.mrf.mxu0
        %v1690 = vadd.f32 0.0, %v1689
        %v1691 = vpop.f32.mrf.mxu0
        %v1692 = vadd.f32 0.0, %v1691
        %1693 = vmatmul.bf16.gmra.mxu0 %v1669
        %v1694 = vpop.f32.mrf.mxu0
        %v1695 = vadd.f32 0.0, %v1694
        %v1696 = vpop.f32.mrf.mxu0
        %v1697 = vadd.f32 0.0, %v1696
        %1698 = vmatmul.bf16.gmra.mxu0 %v1672
        %v1699 = vpop.f32.mrf.mxu0
        %v1700 = vadd.f32 0.0, %v1699
        %v1701 = vpop.f32.mrf.mxu0
        %v1702 = vadd.f32 0.0, %v1701
        %1703 = vmatmul.bf16.gmra.mxu0 %v1675
        %v1704 = vpop.f32.mrf.mxu0
        %v1705 = vadd.f32 0.0, %v1704
        %v1706 = vpop.f32.mrf.mxu0
        %v1707 = vadd.f32 0.0, %v1706
        %1708 = vdwg.mxu0
        %v1709 = vadd.f32 %v1644, %v1690
        %v1710 = vadd.f32 %v1645, %v1692
        %v1711 = vadd.f32 %v1646, %v1695
        %v1712 = vadd.f32 %v1647, %v1697
        %v1713 = vadd.f32 %v1648, %v1700
        %v1714 = vadd.f32 %v1649, %v1702
        %v1715 = vadd.f32 %v1650, %v1705
        %v1716 = vadd.f32 %v1651, %v1707
        %v1717 = vld [vmem:[%s1215] ss:$2 sm:$0xff]
        %v1718 = vld [vmem:[%s1217] ss:$2 sm:$0xff]
        %v1719 = vld [vmem:[%s1219] ss:$2 sm:$0xff]
        %v1720 = vld [vmem:[%s1221] ss:$2 sm:$0xff]
        %v1721 = vld [vmem:[%s1223] ss:$2 sm:$0xff]
        %v1722 = vld [vmem:[%s1225] ss:$2 sm:$0xff]
        %v1723 = vld [vmem:[%s1227] ss:$2 sm:$0xff]
        %v1724 = vld [vmem:[%s1229] ss:$2 sm:$0xff]
        %v1725 = vpack.c.bf16 %v1718, %v1717
        %v1726 = vpack.c.bf16 %v1720, %v1719
        %v1727 = vpack.c.bf16 %v1722, %v1721
        %v1728 = vpack.c.bf16 %v1724, %v1723
        %v1729 = vpack.c.bf16 %v1022, %v1022
        %v1731 = vsel %vm634, %v1725, 0
        %v1734 = vsel %vm634, %v1726, 0
        %v1737 = vsel %vm634, %v1727, 0
        %v1740 = vsel %vm634, %v1728, 0
        %v1743 = vsel %vm1138, %v1729, 0
        %1745 = vmatpush.bf16.msra.mxu0 0
        %1746 = vmatpush.bf16.msra.mxu0 0
        %1747 = vmatpush.bf16.msra.mxu0 0
        %1748 = vmatpush.bf16.msra.mxu0 0
        %1749 = vmatpush.bf16.msra.mxu0 0
        %1750 = vmatpush.bf16.msra.mxu0 0
        %1751 = vmatpush.bf16.msra.mxu0 0
        %1752 = vmatpush.bf16.msra.mxu0 %v1743
        %1753 = vmatmul.bf16.gmra.mxu0 %v1731
        %v1754 = vpop.f32.mrf.mxu0
        %v1755 = vadd.f32 0.0, %v1754
        %v1756 = vpop.f32.mrf.mxu0
        %v1757 = vadd.f32 0.0, %v1756
        %1758 = vmatmul.bf16.gmra.mxu0 %v1734
        %v1759 = vpop.f32.mrf.mxu0
        %v1760 = vadd.f32 0.0, %v1759
        %v1761 = vpop.f32.mrf.mxu0
        %v1762 = vadd.f32 0.0, %v1761
        %1763 = vmatmul.bf16.gmra.mxu0 %v1737
        %v1764 = vpop.f32.mrf.mxu0
        %v1765 = vadd.f32 0.0, %v1764
        %v1766 = vpop.f32.mrf.mxu0
        %v1767 = vadd.f32 0.0, %v1766
        %1768 = vmatmul.bf16.gmra.mxu0 %v1740
        %v1769 = vpop.f32.mrf.mxu0
        %v1770 = vadd.f32 0.0, %v1769
        %v1771 = vpop.f32.mrf.mxu0
        %v1772 = vadd.f32 0.0, %v1771
        %1773 = vdwg.mxu0
        %v1774 = vadd.f32 %v1709, %v1755
        %v1775 = vadd.f32 %v1710, %v1757
        %v1776 = vadd.f32 %v1711, %v1760
        %v1777 = vadd.f32 %v1712, %v1762
        %v1778 = vadd.f32 %v1713, %v1765
        %v1779 = vadd.f32 %v1714, %v1767
        %v1780 = vadd.f32 %v1715, %v1770
        %v1781 = vadd.f32 %v1716, %v1772
        %v1782 = vld [vmem:[%s5] sm:$0x1]
        %v1783 = vld [vmem:[%s6] sm:$0x1]
        %v1784 = vsel %vm634, %v1774, 0.0
        %v1785 = vsel %vm634, %v1775, 0.0
        %v1786 = vadd.f32 %v1784, %v1785
        %v1787 = vsel %vm634, %v1776, 0.0
        %v1788 = vadd.f32 %v1786, %v1787
        %v1789 = vsel %vm634, %v1777, 0.0
        %v1790 = vadd.f32 %v1788, %v1789
        %v1791 = vsel %vm634, %v1778, 0.0
        %v1792 = vadd.f32 %v1790, %v1791
        %v1793 = vsel %vm634, %v1779, 0.0
        %v1794 = vadd.f32 %v1792, %v1793
        %v1795 = vsel %vm634, %v1780, 0.0
        %v1796 = vadd.f32 %v1794, %v1795
        %v1797 = vsel %vm634, %v1781, 0.0
        %v1798 = vadd.f32 %v1796, %v1797
        %v1799 = vrot.slane %v1798, 4
        %v1800 = vadd.f32 %v1798, %v1799
        %v1801 = vrot.slane %v1800, 2
        %v1802 = vadd.f32 %v1800, %v1801
        %v1803 = vrot.slane %v1802, 1
        %v1804 = vadd.f32 %v1802, %v1803
        %v1805 = vmul.f32 %v1804, 0.015625
        %v1806 = vmul.f32 %v1774, %v1774
        %v1807 = vmul.f32 %v1775, %v1775
        %v1808 = vmul.f32 %v1776, %v1776
        %v1809 = vmul.f32 %v1777, %v1777
        %v1810 = vmul.f32 %v1778, %v1778
        %v1811 = vmul.f32 %v1779, %v1779
        %v1812 = vmul.f32 %v1780, %v1780
        %v1813 = vmul.f32 %v1781, %v1781
        %v1814 = vsel %vm634, %v1806, 0.0
        %v1815 = vsel %vm634, %v1807, 0.0
        %v1816 = vadd.f32 %v1814, %v1815
        %v1817 = vsel %vm634, %v1808, 0.0
        %v1818 = vadd.f32 %v1816, %v1817
        %v1819 = vsel %vm634, %v1809, 0.0
        %v1820 = vadd.f32 %v1818, %v1819
        %v1821 = vsel %vm634, %v1810, 0.0
        %v1822 = vadd.f32 %v1820, %v1821
        %v1823 = vsel %vm634, %v1811, 0.0
        %v1824 = vadd.f32 %v1822, %v1823
        %v1825 = vsel %vm634, %v1812, 0.0
        %v1826 = vadd.f32 %v1824, %v1825
        %v1827 = vsel %vm634, %v1813, 0.0
        %v1828 = vadd.f32 %v1826, %v1827
        %v1829 = vrot.slane %v1828, 4
        %v1830 = vadd.f32 %v1828, %v1829
        %v1831 = vrot.slane %v1830, 2
        %v1832 = vadd.f32 %v1830, %v1831
        %v1833 = vrot.slane %v1832, 1
        %v1834 = vadd.f32 %v1832, %v1833
        %v1835 = vmul.f32 %v1834, 0.015625
        %v1836 = vmul.f32 %v1805, %v1805
        %v1837 = vsub.f32 %v1835, %v1836
        %v1838 = vmax.f32 %v1837, 0.0
        %v1839 = vadd.f32 %v1838, 1e-05
        %v1840 = vrsqrt.pop %v1839
        %v1841 = vmul.f32 %v1840, %v1839
        %v1842 = vmul.f32 %v1841, %v1840
        %v1843 = vmul.f32 0.5, %v1842
        %v1844 = vsub.f32 1.5, %v1843
        %v1845 = vmul.f32 %v1840, %v1844
        %vm1846 = vweird.f32 %v1839
        %vm1847 = vweird.f32 %v1840
        %vm1848 = vmor %vm1846, %vm1847
        %v1849 = vsel %vm1848, %v1840, %v1845
        %v1850 = vmul.f32 %v1782, %v1849
        %v1851 = vmul.f32 %v1805, %v1850
        %v1852 = vsub.f32 %v1783, %v1851
        %v1854 = vperm.slane %v1850, 0
        %v1856 = vmul.f32 %v1774, %v1854
        %v1857 = vmul.f32 %v1775, %v1854
        %v1858 = vmul.f32 %v1776, %v1854
        %v1859 = vmul.f32 %v1777, %v1854
        %v1860 = vmul.f32 %v1778, %v1854
        %v1861 = vmul.f32 %v1779, %v1854
        %v1862 = vmul.f32 %v1780, %v1854
        %v1863 = vmul.f32 %v1781, %v1854
        %v1865 = vperm.slane %v1852, 0
        %v1867 = vadd.f32 %v1856, %v1865
        %v1868 = vadd.f32 %v1857, %v1865
        %v1869 = vadd.f32 %v1858, %v1865
        %v1870 = vadd.f32 %v1859, %v1865
        %v1871 = vadd.f32 %v1860, %v1865
        %v1872 = vadd.f32 %v1861, %v1865
        %v1873 = vadd.f32 %v1862, %v1865
        %v1874 = vadd.f32 %v1863, %v1865
        %v1875 = vmax.f32 %v1867, 0.0
        %v1876 = vmax.f32 %v1868, 0.0
        %v1877 = vmax.f32 %v1869, 0.0
        %v1878 = vmax.f32 %v1870, 0.0
        %v1879 = vmax.f32 %v1871, 0.0
        %v1880 = vmax.f32 %v1872, 0.0
        %v1881 = vmax.f32 %v1873, 0.0
        %v1882 = vmax.f32 %v1874, 0.0
        %v1883 = vld [vmem:[%s438] sm:$0xff]
        %v1884 = vld [vmem:[%s438 + $0x8] sm:$0xff]
        %1885 = vst.msk [vmem:[#allocation4] sm:$0xff] %vm490, %v1883
        %1886 = vst.msk [vmem:[#allocation4 + $0x8] sm:$0xff] %vm490, %v1884
        %s1887 = scalar_lea.vmem %s438, 32
        %v1888 = vld [vmem:[%s1887] sm:$0xff]
        %v1889 = vld [vmem:[%s1887 + $0x8] sm:$0xff]
        %s1890 = scalar_lea.vmem [#allocation4], 16
        %1891 = vst.msk [vmem:[%s1890] sm:$0xff] %vm490, %v1888
        %1892 = vst.msk [vmem:[%s1890 + $0x8] sm:$0xff] %vm490, %v1889
        %s1893 = scalar_lea.vmem %s438, 64
        %v1894 = vld [vmem:[%s1893] sm:$0xff]
        %v1895 = vld [vmem:[%s1893 + $0x8] sm:$0xff]
        %s1896 = scalar_lea.vmem [#allocation4], 32
        %1897 = vst.msk [vmem:[%s1896] sm:$0xff] %vm490, %v1894
        %1898 = vst.msk [vmem:[%s1896 + $0x8] sm:$0xff] %vm490, %v1895
        %s1899 = scalar_lea.vmem %s438, 96
        %v1900 = vld [vmem:[%s1899] sm:$0xff]
        %v1901 = vld [vmem:[%s1899 + $0x8] sm:$0xff]
        %s1902 = scalar_lea.vmem [#allocation4], 48
        %1903 = vst.msk [vmem:[%s1902] sm:$0xff] %vm490, %v1900
        %1904 = vst.msk [vmem:[%s1902 + $0x8] sm:$0xff] %vm490, %v1901
        %s1905 = scalar_lea.vmem %s438, 128
        %v1906 = vld [vmem:[%s1905] sm:$0xff]
        %v1907 = vld [vmem:[%s1905 + $0x8] sm:$0xff]
        %s1908 = scalar_lea.vmem [#allocation4], 64
        %1909 = vst.msk [vmem:[%s1908] sm:$0xff] %vm490, %v1906
        %1910 = vst.msk [vmem:[%s1908 + $0x8] sm:$0xff] %vm490, %v1907
        %s1911 = scalar_lea.vmem %s438, 160
        %v1912 = vld [vmem:[%s1911] sm:$0xff]
        %v1913 = vld [vmem:[%s1911 + $0x8] sm:$0xff]
        %s1914 = scalar_lea.vmem [#allocation4], 80
        %1915 = vst.msk [vmem:[%s1914] sm:$0xff] %vm490, %v1912
        %1916 = vst.msk [vmem:[%s1914 + $0x8] sm:$0xff] %vm490, %v1913
        %s1917 = scalar_lea.vmem %s438, 192
        %v1918 = vld [vmem:[%s1917] sm:$0xff]
        %v1919 = vld [vmem:[%s1917 + $0x8] sm:$0xff]
        %s1920 = scalar_lea.vmem [#allocation4], 96
        %1921 = vst.msk [vmem:[%s1920] sm:$0xff] %vm490, %v1918
        %1922 = vst.msk [vmem:[%s1920 + $0x8] sm:$0xff] %vm490, %v1919
        %s1923 = scalar_lea.vmem %s438, 224
        %v1924 = vld [vmem:[%s1923] sm:$0xff]
        %v1925 = vld [vmem:[%s1923 + $0x8] sm:$0xff]
        %s1926 = scalar_lea.vmem [#allocation4], 112
        %1927 = vst.msk [vmem:[%s1926] sm:$0xff] %vm490, %v1924
        %1928 = vst.msk [vmem:[%s1926 + $0x8] sm:$0xff] %vm490, %v1925
        %v1929 = vld [vmem:[#allocation4] ss:$2 sm:$0xff]
        %s1930 = scalar_lea.vmem [#allocation4], 16
        %v1931 = vld [vmem:[%s1930] ss:$2 sm:$0xff]
        %s1932 = scalar_lea.vmem [#allocation4], 32
        %v1933 = vld [vmem:[%s1932] ss:$2 sm:$0xff]
        %s1934 = scalar_lea.vmem [#allocation4], 48
        %v1935 = vld [vmem:[%s1934] ss:$2 sm:$0xff]
        %s1936 = scalar_lea.vmem [#allocation4], 64
        %v1937 = vld [vmem:[%s1936] ss:$2 sm:$0xff]
        %s1938 = scalar_lea.vmem [#allocation4], 80
        %v1939 = vld [vmem:[%s1938] ss:$2 sm:$0xff]
        %s1940 = scalar_lea.vmem [#allocation4], 96
        %v1941 = vld [vmem:[%s1940] ss:$2 sm:$0xff]
        %s1942 = scalar_lea.vmem [#allocation4], 112
        %v1943 = vld [vmem:[%s1942] ss:$2 sm:$0xff]
        %v1944 = vld [vmem:[%s10] sm:$0xf]
        %v1945 = vpack.c.bf16 %v1931, %v1929
        %v1946 = vpack.c.bf16 %v1935, %v1933
        %v1947 = vpack.c.bf16 %v1939, %v1937
        %v1948 = vpack.c.bf16 %v1943, %v1941
        %v1949 = vpack.c.bf16 %v1944, %v1944
        %v1951 = vsel %vm490, %v1945, 0
        %v1954 = vsel %vm490, %v1946, 0
        %v1957 = vsel %vm490, %v1947, 0
        %v1960 = vsel %vm490, %v1948, 0
        %v1963 = vsel %vm539, %v1949, 0
        %1965 = vmatpush.bf16.msra.mxu0 0
        %1966 = vmatpush.bf16.msra.mxu0 0
        %1967 = vmatpush.bf16.msra.mxu0 0
        %1968 = vmatpush.bf16.msra.mxu0 0
        %1969 = vmatpush.bf16.msra.mxu0 0
        %1970 = vmatpush.bf16.msra.mxu0 0
        %1971 = vmatpush.bf16.msra.mxu0 0
        %1972 = vmatpush.bf16.msra.mxu0 %v1963
        %1973 = vmatmul.bf16.gmra.mxu0 %v1951
        %v1974 = vpop.f32.mrf.mxu0
        %v1975 = vadd.f32 0.0, %v1974
        %v1976 = vpop.f32.mrf.mxu0
        %v1977 = vadd.f32 0.0, %v1976
        %1978 = vmatmul.bf16.gmra.mxu0 %v1954
        %v1979 = vpop.f32.mrf.mxu0
        %v1980 = vadd.f32 0.0, %v1979
        %v1981 = vpop.f32.mrf.mxu0
        %v1982 = vadd.f32 0.0, %v1981
        %1983 = vmatmul.bf16.gmra.mxu0 %v1957
        %v1984 = vpop.f32.mrf.mxu0
        %v1985 = vadd.f32 0.0, %v1984
        %v1986 = vpop.f32.mrf.mxu0
        %v1987 = vadd.f32 0.0, %v1986
        %1988 = vmatmul.bf16.gmra.mxu0 %v1960
        %v1989 = vpop.f32.mrf.mxu0
        %v1990 = vadd.f32 0.0, %v1989
        %v1991 = vpop.f32.mrf.mxu0
        %v1992 = vadd.f32 0.0, %v1991
        %1993 = vdwg.mxu0
        %v1994 = vld [vmem:[%s11] sm:$0x1]
        %v1995 = vld [vmem:[%s12] sm:$0x1]
        %vm1996 = vcmask 261120
        %v1997 = vsel %vm1996, %v1975, 0.0
        %v1998 = vsel %vm1996, %v1977, 0.0
        %v1999 = vadd.f32 %v1997, %v1998
        %v2000 = vsel %vm1996, %v1980, 0.0
        %v2001 = vadd.f32 %v1999, %v2000
        %v2002 = vsel %vm1996, %v1982, 0.0
        %v2003 = vadd.f32 %v2001, %v2002
        %v2004 = vsel %vm1996, %v1985, 0.0
        %v2005 = vadd.f32 %v2003, %v2004
        %v2006 = vsel %vm1996, %v1987, 0.0
        %v2007 = vadd.f32 %v2005, %v2006
        %v2008 = vsel %vm1996, %v1990, 0.0
        %v2009 = vadd.f32 %v2007, %v2008
        %v2010 = vsel %vm1996, %v1992, 0.0
        %v2011 = vadd.f32 %v2009, %v2010
        %v2012 = vrot.slane %v2011, 4
        %v2013 = vadd.f32 %v2011, %v2012
        %v2014 = vrot.slane %v2013, 2
        %v2015 = vadd.f32 %v2013, %v2014
        %v2016 = vrot.slane %v2015, 1
        %v2017 = vadd.f32 %v2015, %v2016
        %v2018 = vmul.f32 %v2017, 0.015625
        %v2019 = vmul.f32 %v1975, %v1975
        %v2020 = vmul.f32 %v1977, %v1977
        %v2021 = vmul.f32 %v1980, %v1980
        %v2022 = vmul.f32 %v1982, %v1982
        %v2023 = vmul.f32 %v1985, %v1985
        %v2024 = vmul.f32 %v1987, %v1987
        %v2025 = vmul.f32 %v1990, %v1990
        %v2026 = vmul.f32 %v1992, %v1992
        %v2027 = vsel %vm1996, %v2019, 0.0
        %v2028 = vsel %vm1996, %v2020, 0.0
        %v2029 = vadd.f32 %v2027, %v2028
        %v2030 = vsel %vm1996, %v2021, 0.0
        %v2031 = vadd.f32 %v2029, %v2030
        %v2032 = vsel %vm1996, %v2022, 0.0
        %v2033 = vadd.f32 %v2031, %v2032
        %v2034 = vsel %vm1996, %v2023, 0.0
        %v2035 = vadd.f32 %v2033, %v2034
        %v2036 = vsel %vm1996, %v2024, 0.0
        %v2037 = vadd.f32 %v2035, %v2036
        %v2038 = vsel %vm1996, %v2025, 0.0
        %v2039 = vadd.f32 %v2037, %v2038
        %v2040 = vsel %vm1996, %v2026, 0.0
        %v2041 = vadd.f32 %v2039, %v2040
        %v2042 = vrot.slane %v2041, 4
        %v2043 = vadd.f32 %v2041, %v2042
        %v2044 = vrot.slane %v2043, 2
        %v2045 = vadd.f32 %v2043, %v2044
        %v2046 = vrot.slane %v2045, 1
        %v2047 = vadd.f32 %v2045, %v2046
        %v2048 = vmul.f32 %v2047, 0.015625
        %v2049 = vmul.f32 %v2018, %v2018
        %v2050 = vsub.f32 %v2048, %v2049
        %v2051 = vmax.f32 %v2050, 0.0
        %v2052 = vadd.f32 %v2051, 1e-05
        %v2053 = vrsqrt.pop %v2052
        %v2054 = vmul.f32 %v2053, %v2052
        %v2055 = vmul.f32 %v2054, %v2053
        %v2056 = vmul.f32 0.5, %v2055
        %v2057 = vsub.f32 1.5, %v2056
        %v2058 = vmul.f32 %v2053, %v2057
        %vm2059 = vweird.f32 %v2052
        %vm2060 = vweird.f32 %v2053
        %vm2061 = vmor %vm2059, %vm2060
        %v2062 = vsel %vm2061, %v2053, %v2058
        %v2063 = vmul.f32 %v1994, %v2062
        %v2064 = vmul.f32 %v2018, %v2063
        %v2065 = vsub.f32 %v1995, %v2064
        %v2067 = vperm.slane %v2063, 0
        %v2069 = vmul.f32 %v1975, %v2067
        %v2070 = vmul.f32 %v1977, %v2067
        %v2071 = vmul.f32 %v1980, %v2067
        %v2072 = vmul.f32 %v1982, %v2067
        %v2073 = vmul.f32 %v1985, %v2067
        %v2074 = vmul.f32 %v1987, %v2067
        %v2075 = vmul.f32 %v1990, %v2067
        %v2076 = vmul.f32 %v1992, %v2067
        %v2078 = vperm.slane %v2065, 0
        %v2080 = vadd.f32 %v2069, %v2078
        %v2081 = vadd.f32 %v2070, %v2078
        %v2082 = vadd.f32 %v2071, %v2078
        %v2083 = vadd.f32 %v2072, %v2078
        %v2084 = vadd.f32 %v2073, %v2078
        %v2085 = vadd.f32 %v2074, %v2078
        %v2086 = vadd.f32 %v2075, %v2078
        %v2087 = vadd.f32 %v2076, %v2078
        %v2088 = vld [vmem:[%s7] sm:$0xff]
        %v2089 = vpack.c.bf16 %v1876, %v1875
        %v2090 = vpack.c.bf16 %v1878, %v1877
        %v2091 = vpack.c.bf16 %v1880, %v1879
        %v2092 = vpack.c.bf16 %v1882, %v1881
        %v2093 = vpack.c.bf16 %v2088, %v2088
        %v2095 = vsel %vm634, %v2089, 0
        %v2098 = vsel %vm634, %v2090, 0
        %v2101 = vsel %vm634, %v2091, 0
        %v2104 = vsel %vm634, %v2092, 0
        %v2107 = vsel %vm1138, %v2093, 0
        %2109 = vmatpush.bf16.msra.mxu0 0
        %2110 = vmatpush.bf16.msra.mxu0 0
        %2111 = vmatpush.bf16.msra.mxu0 0
        %2112 = vmatpush.bf16.msra.mxu0 0
        %2113 = vmatpush.bf16.msra.mxu0 0
        %2114 = vmatpush.bf16.msra.mxu0 0
        %2115 = vmatpush.bf16.msra.mxu0 0
        %2116 = vmatpush.bf16.msra.mxu0 %v2107
        %2117 = vmatmul.bf16.gmra.mxu0 %v2095
        %v2118 = vpop.f32.mrf.mxu0
        %v2119 = vadd.f32 0.0, %v2118
        %v2120 = vpop.f32.mrf.mxu0
        %v2121 = vadd.f32 0.0, %v2120
        %2122 = vmatmul.bf16.gmra.mxu0 %v2098
        %v2123 = vpop.f32.mrf.mxu0
        %v2124 = vadd.f32 0.0, %v2123
        %v2125 = vpop.f32.mrf.mxu0
        %v2126 = vadd.f32 0.0, %v2125
        %2127 = vmatmul.bf16.gmra.mxu0 %v2101
        %v2128 = vpop.f32.mrf.mxu0
        %v2129 = vadd.f32 0.0, %v2128
        %v2130 = vpop.f32.mrf.mxu0
        %v2131 = vadd.f32 0.0, %v2130
        %2132 = vmatmul.bf16.gmra.mxu0 %v2104
        %v2133 = vpop.f32.mrf.mxu0
        %v2134 = vadd.f32 0.0, %v2133
        %v2135 = vpop.f32.mrf.mxu0
        %v2136 = vadd.f32 0.0, %v2135
        %2137 = vdwg.mxu0
        %v2138 = vld [vmem:[%s8] sm:$0x1]
        %v2139 = vld [vmem:[%s9] sm:$0x1]
        %v2140 = vsel %vm1996, %v2119, 0.0
        %v2141 = vsel %vm1996, %v2121, 0.0
        %v2142 = vadd.f32 %v2140, %v2141
        %v2143 = vsel %vm1996, %v2124, 0.0
        %v2144 = vadd.f32 %v2142, %v2143
        %v2145 = vsel %vm1996, %v2126, 0.0
        %v2146 = vadd.f32 %v2144, %v2145
        %v2147 = vsel %vm1996, %v2129, 0.0
        %v2148 = vadd.f32 %v2146, %v2147
        %v2149 = vsel %vm1996, %v2131, 0.0
        %v2150 = vadd.f32 %v2148, %v2149
        %v2151 = vsel %vm1996, %v2134, 0.0
        %v2152 = vadd.f32 %v2150, %v2151
        %v2153 = vsel %vm1996, %v2136, 0.0
        %v2154 = vadd.f32 %v2152, %v2153
        %v2155 = vrot.slane %v2154, 4
        %v2156 = vadd.f32 %v2154, %v2155
        %v2157 = vrot.slane %v2156, 2
        %v2158 = vadd.f32 %v2156, %v2157
        %v2159 = vrot.slane %v2158, 1
        %v2160 = vadd.f32 %v2158, %v2159
        %v2161 = vmul.f32 %v2160, 0.015625
        %v2162 = vmul.f32 %v2119, %v2119
        %v2163 = vmul.f32 %v2121, %v2121
        %v2164 = vmul.f32 %v2124, %v2124
        %v2165 = vmul.f32 %v2126, %v2126
        %v2166 = vmul.f32 %v2129, %v2129
        %v2167 = vmul.f32 %v2131, %v2131
        %v2168 = vmul.f32 %v2134, %v2134
        %v2169 = vmul.f32 %v2136, %v2136
        %v2170 = vsel %vm1996, %v2162, 0.0
        %v2171 = vsel %vm1996, %v2163, 0.0
        %v2172 = vadd.f32 %v2170, %v2171
        %v2173 = vsel %vm1996, %v2164, 0.0
        %v2174 = vadd.f32 %v2172, %v2173
        %v2175 = vsel %vm1996, %v2165, 0.0
        %v2176 = vadd.f32 %v2174, %v2175
        %v2177 = vsel %vm1996, %v2166, 0.0
        %v2178 = vadd.f32 %v2176, %v2177
        %v2179 = vsel %vm1996, %v2167, 0.0
        %v2180 = vadd.f32 %v2178, %v2179
        %v2181 = vsel %vm1996, %v2168, 0.0
        %v2182 = vadd.f32 %v2180, %v2181
        %v2183 = vsel %vm1996, %v2169, 0.0
        %v2184 = vadd.f32 %v2182, %v2183
        %v2185 = vrot.slane %v2184, 4
        %v2186 = vadd.f32 %v2184, %v2185
        %v2187 = vrot.slane %v2186, 2
        %v2188 = vadd.f32 %v2186, %v2187
        %v2189 = vrot.slane %v2188, 1
        %v2190 = vadd.f32 %v2188, %v2189
        %v2191 = vmul.f32 %v2190, 0.015625
        %v2192 = vmul.f32 %v2161, %v2161
        %v2193 = vsub.f32 %v2191, %v2192
        %v2194 = vmax.f32 %v2193, 0.0
        %v2195 = vadd.f32 %v2194, 1e-05
        %v2196 = vrsqrt.pop %v2195
        %v2197 = vmul.f32 %v2196, %v2195
        %v2198 = vmul.f32 %v2197, %v2196
        %v2199 = vmul.f32 0.5, %v2198
        %v2200 = vsub.f32 1.5, %v2199
        %v2201 = vmul.f32 %v2196, %v2200
        %vm2202 = vweird.f32 %v2195
        %vm2203 = vweird.f32 %v2196
        %vm2204 = vmor %vm2202, %vm2203
        %v2205 = vsel %vm2204, %v2196, %v2201
        %v2206 = vmul.f32 %v2138, %v2205
        %v2207 = vmul.f32 %v2161, %v2206
        %v2208 = vsub.f32 %v2139, %v2207
        %v2210 = vperm.slane %v2206, 0
        %v2212 = vmul.f32 %v2119, %v2210
        %v2213 = vmul.f32 %v2121, %v2210
        %v2214 = vmul.f32 %v2124, %v2210
        %v2215 = vmul.f32 %v2126, %v2210
        %v2216 = vmul.f32 %v2129, %v2210
        %v2217 = vmul.f32 %v2131, %v2210
        %v2218 = vmul.f32 %v2134, %v2210
        %v2219 = vmul.f32 %v2136, %v2210
        %v2221 = vperm.slane %v2208, 0
        %v2223 = vadd.f32 %v2212, %v2221
        %v2224 = vadd.f32 %v2213, %v2221
        %v2225 = vadd.f32 %v2214, %v2221
        %v2226 = vadd.f32 %v2215, %v2221
        %v2227 = vadd.f32 %v2216, %v2221
        %v2228 = vadd.f32 %v2217, %v2221
        %v2229 = vadd.f32 %v2218, %v2221
        %v2230 = vadd.f32 %v2219, %v2221
        %v2231 = vadd.f32 %v2223, %v2080
        %v2232 = vadd.f32 %v2224, %v2081
        %v2233 = vadd.f32 %v2225, %v2082
        %v2234 = vadd.f32 %v2226, %v2083
        %v2235 = vadd.f32 %v2227, %v2084
        %v2236 = vadd.f32 %v2228, %v2085
        %v2237 = vadd.f32 %v2229, %v2086
        %v2238 = vadd.f32 %v2230, %v2087
        %v2239 = vmax.f32 %v2231, 0.0
        %v2240 = vmax.f32 %v2232, 0.0
        %v2241 = vmax.f32 %v2233, 0.0
        %v2242 = vmax.f32 %v2234, 0.0
        %v2243 = vmax.f32 %v2235, 0.0
        %v2244 = vmax.f32 %v2236, 0.0
        %v2245 = vmax.f32 %v2237, 0.0
        %v2246 = vmax.f32 %v2238, 0.0
        %2247 = vst.msk [vmem:[%s433] sm:$0xff] %vm1996, %v2239
        %2248 = vst.msk [vmem:[%s433 + $0x8] sm:$0xff] %vm1996, %v2240
        %2249 = vst.msk [vmem:[%s433 + $0x10] sm:$0xff] %vm1996, %v2241
        %2250 = vst.msk [vmem:[%s433 + $0x18] sm:$0xff] %vm1996, %v2242
        %2251 = vst.msk [vmem:[%s433 + $0x20] sm:$0xff] %vm1996, %v2243
        %2252 = vst.msk [vmem:[%s433 + $0x28] sm:$0xff] %vm1996, %v2244
        %2253 = vst.msk [vmem:[%s433 + $0x30] sm:$0xff] %vm1996, %v2245
        %2254 = vst.msk [vmem:[%s433 + $0x38] sm:$0xff] %vm1996, %v2246
        %s2255 = sand.u32 %s313, 1
        %s2256 = scalar_lea.sflag [#allocation6], %s2255
        %s2257 = sand.u32 %s313, 1
        %s2258 = smul.addr %s2257, 64
        %s2259 = scalar_lea.vmem [#allocation5], %s2258
        // Predicated region
        $region73: #{bottleneck_forward.1} parent=71 // pred_check
          %p2260 = pneg %p323
        $region74: #{bottleneck_forward.1} parent=71 // pred_check_branch
          %2262 = sbr.rel (%p2260) target = $region76
        $region75: #{bottleneck_forward.1} parent=71 // pred_region
          %2264 = vsyncadd %s2256, 0
          %s2265 = smul.addr %s27, 8
          %s2266 = smul.addr %s2265, 8
          %s2267 = scalar_lea.hbm %s13, %s2266
          %s2268 = sshll.u32 %s2259, 4
          %s2269 = int_to_ptr.vmem [resolvable:$true] %s2268
          %s2270 = sshll.u32 %s2267, 4
          %s2271 = int_to_ptr.hbm [resolvable:$true] %s2270
          %2276 = dma.vmem_to_hbm [thread:$0]  %s2269, 1024, %s2271, %s2256, 128, 128, 8
        $region76: #{bottleneck_forward.1} parent=71 // pred_fallthru
          _
      $region72: #{bottleneck_forward.1} parent=5 // pred_fallthru
        _
      %p2277 = scmp.le.s32.totalorder 2, %s22
      // Predicated region
      $region77: #{bottleneck_forward.1} parent=5 // pred_check
        %p2278 = pneg %p2277
      $region78: #{bottleneck_forward.1} parent=5 // pred_check_branch
        %2280 = sbr.rel (%p2278) target = $region80
      $region79: #{bottleneck_forward.1} parent=5 // pred_region
        %s2281 = ssub.s32 %s22, 2
        // Predicated region
        $region81: #{bottleneck_forward.1} parent=79 // pred_check
          %p2282 = pneg %p329
        $region82: #{bottleneck_forward.1} parent=79 // pred_check_branch
          %2284 = sbr.rel (%p2282) target = $region84
        $region83: #{bottleneck_forward.1} parent=79 // pred_region
          %s2285 = sand.u32 %s314, 1
          %s2286 = scalar_lea.sflag [#allocation6], %s2285
          %s2287 = sand.u32 %s314, 1
          %s2288 = smul.addr %s2287, 64
          %s2289 = scalar_lea.vmem [#allocation5], %s2288
          %2291 = dma.done %s2286, 1024
        $region84: #{bottleneck_forward.1} parent=79 // pred_fallthru
          _
      $region80: #{bottleneck_forward.1} parent=5 // pred_fallthru
        _
    $region6: #{bottleneck_forward.1} parent=1 // loop_footer
      %s26 = sadd.s32 1, %s22
    $region7: #{bottleneck_forward.1} parent=1 // loop_footer_branch
      %21 = sbr.rel target = $region3
    $region8: #{bottleneck_forward.1} parent=1 // loop_exit
      _
    %2292 = vsyncpa [#allocation6], 1
    %s2293 = scalar_lea.sflag [#allocation6], 1
    %2294 = vsyncpa %s2293, 1

</llo_original>
